<compile_context>
chip_gen: v6e
topology: v6e:2x2x1
jax: 0.10.0
libtpu: 0.0.40
codegen_flags: <defaults>
</compile_context>

<pallas_src>
import functools

import jax
import jax.numpy as jnp
from jax.experimental import pallas as pl
from jax.experimental.pallas import tpu as pltpu


def _pixel_shuffle3d_kernel(x_ref, o_ref, *, s, H, W):
    """Per grid cell (bc, d):
         x_ref: (s^3, H, W)      channels ordered (sd, sh, sw)
         o_ref: (s*H, s*W*s)     rows (sd, h), cols (sh, w, sw)
    """
    SWS = s * W * s

    # Constant 0/1 permutation matrices: q[sh*s+sw][w, j] = 1 iff
    # j == sh*(W*s) + w*s + sw.  Built once per grid step from 2-D iota (cheap).
    row = jax.lax.broadcasted_iota(jnp.int32, (W, SWS), 0)
    col = jax.lax.broadcasted_iota(jnp.int32, (W, SWS), 1)
    qs = []
    for sh in range(s):
        for sw in range(s):
            qs.append((col == sh * (W * s) + row * s + sw).astype(jnp.float32))

    # For each output depth-offset sd, build the full-width (H, s*W*s) row slab
    # as a sum of permutation matmuls (each output column gets exactly one
    # contribution), then store it lane-dense in one shot.
    for sd in range(s):
        acc = jnp.zeros((H, SWS), jnp.float32)
        for sh in range(s):
            for sw in range(s):
                plane = x_ref[(sd * s + sh) * s + sw].astype(jnp.float32)  # (H, W)
                acc = acc + jnp.dot(
                    plane,
                    qs[sh * s + sw],
                    preferred_element_type=jnp.float32,
                    precision=jax.lax.Precision.HIGHEST,
                )
        o_ref[sd * H:(sd + 1) * H, :] = acc.astype(o_ref.dtype)


def pixel_shuffle_3d(x, scale):
    s = int(scale)
    B, C, D, H, W = x.shape
    assert C % (s ** 3) == 0, "channels must be divisible by scale**3"
    nOut = C // (s ** 3)
    BC = B * nOut
    S3 = s ** 3
    SH = s * H
    SWS = s * W * s

    # Free reshape: (B, (nOut, sd, sh, sw), D, H, W) -> (B*nOut, s^3, D, H, W)
    xr = x.reshape(BC, S3, D, H, W)

    kernel = functools.partial(_pixel_shuffle3d_kernel, s=s, H=H, W=W)

    out = pl.pallas_call(
        kernel,
        out_shape=jax.ShapeDtypeStruct((BC, D, SH, SWS), x.dtype),
        grid=(BC, D),
        in_specs=[
            pl.BlockSpec((None, S3, None, H, W),
                         lambda bc, d: (bc, 0, d, 0, 0)),
        ],
        out_specs=pl.BlockSpec((None, None, SH, SWS),
                               lambda bc, d: (bc, d, 0, 0)),
        compiler_params=pltpu.CompilerParams(
            dimension_semantics=("parallel", "parallel")),
    )(xr)

    # Free reshape: (B*nOut, D, sd*H, sh*W*sw) row-major order is exactly
    # (B, nOut, D*s, H*s, W*s) row-major order.
    return out.reshape(B, nOut, D * s, H * s, W * s)


def _reference(x, s):
    """Plain-JAX mirror of the PyTorch view/permute/view sequence."""
    B, C, D, H, W = x.shape
    nOut = C // s ** 3
    v = x.reshape(B, nOut, s, s, s, D, H, W)
    v = jnp.transpose(v, (0, 1, 5, 2, 6, 3, 7, 4))
    return v.reshape(B, nOut, D * s, H * s, W * s)


if __name__ == "__main__":
    # Small shapes consistent with the module: scale=2 => channels % 8 == 0.
    B, C, D, H, W = 2, 16, 4, 8, 8
    scale = 2

    x = jax.random.normal(jax.random.PRNGKey(0), (B, C, D, H, W), jnp.float32)

    out = jax.block_until_ready(pixel_shuffle_3d(x, scale))
    ref = jax.block_until_ready(_reference(x, scale))

    assert out.shape == (B, C // scale ** 3, D * scale, H * scale, W * scale)
    max_err = float(jnp.max(jnp.abs(out - ref)))
    assert jnp.allclose(out, ref, rtol=1e-6, atol=1e-6), max_err

    print("KERNEL_OK")
</pallas_src>

<mosaic_0001>
module attributes {stable_mosaic.version = 11 : i64} {
  func.func @_pixel_shuffle3d_kernel(%arg0: i32, %arg1: i32, %arg2: memref<1x8x1x8x8xf32, #tpu.memory_space<vmem>>, %arg3: memref<1x1x16x32xf32, #tpu.memory_space<vmem>>) attributes {dimension_semantics = [#tpu.dimension_semantics<parallel>, #tpu.dimension_semantics<parallel>], iteration_bounds = array<i64: 4, 4>, scalar_prefetch = 0 : i64, scratch_operands = 0 : i64, tpu.core_type = #tpu.core_type<tc>, window_params = [{transform_indices = @transform_0, window_bounds = array<i64: 1, 8, 1, 8, 8>}, {transform_indices = @transform_1, window_bounds = array<i64: 1, 1, 16, 32>}]} {
    %0 = tpu.iota {dimensions = array<i32: 0>} : vector<8x32xi32>
    %1 = tpu.iota {dimensions = array<i32: 1>} : vector<8x32xi32>
    %c2_i32 = arith.constant 2 : i32
    %2 = vector.broadcast %c2_i32 : i32 to vector<8x32xi32>
    %3 = arith.muli %0, %2 : vector<8x32xi32>
    %c0_i32 = arith.constant 0 : i32
    %4 = vector.broadcast %c0_i32 : i32 to vector<8x32xi32>
    %5 = arith.addi %4, %3 : vector<8x32xi32>
    %c0_i32_0 = arith.constant 0 : i32
    %6 = vector.broadcast %c0_i32_0 : i32 to vector<8x32xi32>
    %7 = arith.addi %5, %6 : vector<8x32xi32>
    %8 = arith.cmpi eq, %1, %7 : vector<8x32xi32>
    %9 = arith.extui %8 : vector<8x32xi1> to vector<8x32xi32>
    %10 = arith.sitofp %9 : vector<8x32xi32> to vector<8x32xf32>
    %c2_i32_1 = arith.constant 2 : i32
    %11 = vector.broadcast %c2_i32_1 : i32 to vector<8x32xi32>
    %12 = arith.muli %0, %11 : vector<8x32xi32>
    %c0_i32_2 = arith.constant 0 : i32
    %13 = vector.broadcast %c0_i32_2 : i32 to vector<8x32xi32>
    %14 = arith.addi %13, %12 : vector<8x32xi32>
    %c1_i32 = arith.constant 1 : i32
    %15 = vector.broadcast %c1_i32 : i32 to vector<8x32xi32>
    %16 = arith.addi %14, %15 : vector<8x32xi32>
    %17 = arith.cmpi eq, %1, %16 : vector<8x32xi32>
    %18 = arith.extui %17 : vector<8x32xi1> to vector<8x32xi32>
    %19 = arith.sitofp %18 : vector<8x32xi32> to vector<8x32xf32>
    %c2_i32_3 = arith.constant 2 : i32
    %20 = vector.broadcast %c2_i32_3 : i32 to vector<8x32xi32>
    %21 = arith.muli %0, %20 : vector<8x32xi32>
    %c16_i32 = arith.constant 16 : i32
    %22 = vector.broadcast %c16_i32 : i32 to vector<8x32xi32>
    %23 = arith.addi %22, %21 : vector<8x32xi32>
    %c0_i32_4 = arith.constant 0 : i32
    %24 = vector.broadcast %c0_i32_4 : i32 to vector<8x32xi32>
    %25 = arith.addi %23, %24 : vector<8x32xi32>
    %26 = arith.cmpi eq, %1, %25 : vector<8x32xi32>
    %27 = arith.extui %26 : vector<8x32xi1> to vector<8x32xi32>
    %28 = arith.sitofp %27 : vector<8x32xi32> to vector<8x32xf32>
    %c2_i32_5 = arith.constant 2 : i32
    %29 = vector.broadcast %c2_i32_5 : i32 to vector<8x32xi32>
    %30 = arith.muli %0, %29 : vector<8x32xi32>
    %c16_i32_6 = arith.constant 16 : i32
    %31 = vector.broadcast %c16_i32_6 : i32 to vector<8x32xi32>
    %32 = arith.addi %31, %30 : vector<8x32xi32>
    %c1_i32_7 = arith.constant 1 : i32
    %33 = vector.broadcast %c1_i32_7 : i32 to vector<8x32xi32>
    %34 = arith.addi %32, %33 : vector<8x32xi32>
    %35 = arith.cmpi eq, %1, %34 : vector<8x32xi32>
    %36 = arith.extui %35 : vector<8x32xi1> to vector<8x32xi32>
    %37 = arith.sitofp %36 : vector<8x32xi32> to vector<8x32xf32>
    %cst = arith.constant 0.000000e+00 : f32
    %38 = vector.broadcast %cst : f32 to vector<8x32xf32>
    %c0 = arith.constant 0 : index
    %c0_8 = arith.constant 0 : index
    %c0_9 = arith.constant 0 : index
    %c0_10 = arith.constant 0 : index
    %c0_11 = arith.constant 0 : index
    %39 = vector.load %arg2[%c0, %c0_8, %c0_9, %c0_10, %c0_11] : memref<1x8x1x8x8xf32, #tpu.memory_space<vmem>>, vector<1x1x1x8x8xf32>
    %40 = vector.shape_cast %39 : vector<1x1x1x8x8xf32> to vector<8x8xf32>
    %cst_12 = arith.constant dense<0.000000e+00> : vector<8x32xf32>
    %41 = tpu.matmul %40, %10, %cst_12 {dimension_numbers = #tpu.dot_dimension_numbers<[1], [0], [0], [1], [0, 0, 1, 1], [], []>, precision = #tpu.contract_precision<fp32>} : vector<8x8xf32>, vector<8x32xf32>, vector<8x32xf32> -> vector<8x32xf32>
    %42 = arith.addf %38, %41 : vector<8x32xf32>
    %c0_13 = arith.constant 0 : index
    %c1 = arith.constant 1 : index
    %c0_14 = arith.constant 0 : index
    %c0_15 = arith.constant 0 : index
    %c0_16 = arith.constant 0 : index
    %43 = vector.load %arg2[%c0_13, %c1, %c0_14, %c0_15, %c0_16] : memref<1x8x1x8x8xf32, #tpu.memory_space<vmem>>, vector<1x1x1x8x8xf32>
    %44 = vector.shape_cast %43 : vector<1x1x1x8x8xf32> to vector<8x8xf32>
    %cst_17 = arith.constant dense<0.000000e+00> : vector<8x32xf32>
    %45 = tpu.matmul %44, %19, %cst_17 {dimension_numbers = #tpu.dot_dimension_numbers<[1], [0], [0], [1], [0, 0, 1, 1], [], []>, precision = #tpu.contract_precision<fp32>} : vector<8x8xf32>, vector<8x32xf32>, vector<8x32xf32> -> vector<8x32xf32>
    %46 = arith.addf %42, %45 : vector<8x32xf32>
    %c0_18 = arith.constant 0 : index
    %c2 = arith.constant 2 : index
    %c0_19 = arith.constant 0 : index
    %c0_20 = arith.constant 0 : index
    %c0_21 = arith.constant 0 : index
    %47 = vector.load %arg2[%c0_18, %c2, %c0_19, %c0_20, %c0_21] : memref<1x8x1x8x8xf32, #tpu.memory_space<vmem>>, vector<1x1x1x8x8xf32>
    %48 = vector.shape_cast %47 : vector<1x1x1x8x8xf32> to vector<8x8xf32>
    %cst_22 = arith.constant dense<0.000000e+00> : vector<8x32xf32>
    %49 = tpu.matmul %48, %28, %cst_22 {dimension_numbers = #tpu.dot_dimension_numbers<[1], [0], [0], [1], [0, 0, 1, 1], [], []>, precision = #tpu.contract_precision<fp32>} : vector<8x8xf32>, vector<8x32xf32>, vector<8x32xf32> -> vector<8x32xf32>
    %50 = arith.addf %46, %49 : vector<8x32xf32>
    %c0_23 = arith.constant 0 : index
    %c3 = arith.constant 3 : index
    %c0_24 = arith.constant 0 : index
    %c0_25 = arith.constant 0 : index
    %c0_26 = arith.constant 0 : index
    %51 = vector.load %arg2[%c0_23, %c3, %c0_24, %c0_25, %c0_26] : memref<1x8x1x8x8xf32, #tpu.memory_space<vmem>>, vector<1x1x1x8x8xf32>
    %52 = vector.shape_cast %51 : vector<1x1x1x8x8xf32> to vector<8x8xf32>
    %cst_27 = arith.constant dense<0.000000e+00> : vector<8x32xf32>
    %53 = tpu.matmul %52, %37, %cst_27 {dimension_numbers = #tpu.dot_dimension_numbers<[1], [0], [0], [1], [0, 0, 1, 1], [], []>, precision = #tpu.contract_precision<fp32>} : vector<8x8xf32>, vector<8x32xf32>, vector<8x32xf32> -> vector<8x32xf32>
    %54 = arith.addf %50, %53 : vector<8x32xf32>
    %c0_28 = arith.constant 0 : index
    %c0_29 = arith.constant 0 : index
    %c0_30 = arith.constant 0 : index
    %c0_31 = arith.constant 0 : index
    %55 = vector.load %arg3[%c0_28, %c0_29, %c0_30, %c0_31] : memref<1x1x16x32xf32, #tpu.memory_space<vmem>>, vector<1x1x8x32xf32>
    %56 = vector.shape_cast %55 : vector<1x1x8x32xf32> to vector<8x32xf32>
    %57 = vector.shape_cast %54 : vector<8x32xf32> to vector<1x1x8x32xf32>
    tpu.vector_store %arg3[%c0_28, %c0_29, %c0_30, %c0_31], %57 {strides = array<i32>} : memref<1x1x16x32xf32, #tpu.memory_space<vmem>>, vector<1x1x8x32xf32>,
    %cst_32 = arith.constant 0.000000e+00 : f32
    %58 = vector.broadcast %cst_32 : f32 to vector<8x32xf32>
    %c0_33 = arith.constant 0 : index
    %c4 = arith.constant 4 : index
    %c0_34 = arith.constant 0 : index
    %c0_35 = arith.constant 0 : index
    %c0_36 = arith.constant 0 : index
    %59 = vector.load %arg2[%c0_33, %c4, %c0_34, %c0_35, %c0_36] : memref<1x8x1x8x8xf32, #tpu.memory_space<vmem>>, vector<1x1x1x8x8xf32>
    %60 = vector.shape_cast %59 : vector<1x1x1x8x8xf32> to vector<8x8xf32>
    %cst_37 = arith.constant dense<0.000000e+00> : vector<8x32xf32>
    %61 = tpu.matmul %60, %10, %cst_37 {dimension_numbers = #tpu.dot_dimension_numbers<[1], [0], [0], [1], [0, 0, 1, 1], [], []>, precision = #tpu.contract_precision<fp32>} : vector<8x8xf32>, vector<8x32xf32>, vector<8x32xf32> -> vector<8x32xf32>
    %62 = arith.addf %58, %61 : vector<8x32xf32>
    %c0_38 = arith.constant 0 : index
    %c5 = arith.constant 5 : index
    %c0_39 = arith.constant 0 : index
    %c0_40 = arith.constant 0 : index
    %c0_41 = arith.constant 0 : index
    %63 = vector.load %arg2[%c0_38, %c5, %c0_39, %c0_40, %c0_41] : memref<1x8x1x8x8xf32, #tpu.memory_space<vmem>>, vector<1x1x1x8x8xf32>
    %64 = vector.shape_cast %63 : vector<1x1x1x8x8xf32> to vector<8x8xf32>
    %cst_42 = arith.constant dense<0.000000e+00> : vector<8x32xf32>
    %65 = tpu.matmul %64, %19, %cst_42 {dimension_numbers = #tpu.dot_dimension_numbers<[1], [0], [0], [1], [0, 0, 1, 1], [], []>, precision = #tpu.contract_precision<fp32>} : vector<8x8xf32>, vector<8x32xf32>, vector<8x32xf32> -> vector<8x32xf32>
    %66 = arith.addf %62, %65 : vector<8x32xf32>
    %c0_43 = arith.constant 0 : index
    %c6 = arith.constant 6 : index
    %c0_44 = arith.constant 0 : index
    %c0_45 = arith.constant 0 : index
    %c0_46 = arith.constant 0 : index
    %67 = vector.load %arg2[%c0_43, %c6, %c0_44, %c0_45, %c0_46] : memref<1x8x1x8x8xf32, #tpu.memory_space<vmem>>, vector<1x1x1x8x8xf32>
    %68 = vector.shape_cast %67 : vector<1x1x1x8x8xf32> to vector<8x8xf32>
    %cst_47 = arith.constant dense<0.000000e+00> : vector<8x32xf32>
    %69 = tpu.matmul %68, %28, %cst_47 {dimension_numbers = #tpu.dot_dimension_numbers<[1], [0], [0], [1], [0, 0, 1, 1], [], []>, precision = #tpu.contract_precision<fp32>} : vector<8x8xf32>, vector<8x32xf32>, vector<8x32xf32> -> vector<8x32xf32>
    %70 = arith.addf %66, %69 : vector<8x32xf32>
    %c0_48 = arith.constant 0 : index
    %c7 = arith.constant 7 : index
    %c0_49 = arith.constant 0 : index
    %c0_50 = arith.constant 0 : index
    %c0_51 = arith.constant 0 : index
    %71 = vector.load %arg2[%c0_48, %c7, %c0_49, %c0_50, %c0_51] : memref<1x8x1x8x8xf32, #tpu.memory_space<vmem>>, vector<1x1x1x8x8xf32>
    %72 = vector.shape_cast %71 : vector<1x1x1x8x8xf32> to vector<8x8xf32>
    %cst_52 = arith.constant dense<0.000000e+00> : vector<8x32xf32>
    %73 = tpu.matmul %72, %37, %cst_52 {dimension_numbers = #tpu.dot_dimension_numbers<[1], [0], [0], [1], [0, 0, 1, 1], [], []>, precision = #tpu.contract_precision<fp32>} : vector<8x8xf32>, vector<8x32xf32>, vector<8x32xf32> -> vector<8x32xf32>
    %74 = arith.addf %70, %73 : vector<8x32xf32>
    %c0_53 = arith.constant 0 : index
    %c0_54 = arith.constant 0 : index
    %c8 = arith.constant 8 : index
    %c0_55 = arith.constant 0 : index
    %75 = vector.load %arg3[%c0_53, %c0_54, %c8, %c0_55] : memref<1x1x16x32xf32, #tpu.memory_space<vmem>>, vector<1x1x8x32xf32>
    %76 = vector.shape_cast %75 : vector<1x1x8x32xf32> to vector<8x32xf32>
    %77 = vector.shape_cast %74 : vector<8x32xf32> to vector<1x1x8x32xf32>
    tpu.vector_store %arg3[%c0_53, %c0_54, %c8, %c0_55], %77 {strides = array<i32>} : memref<1x1x16x32xf32, #tpu.memory_space<vmem>>, vector<1x1x8x32xf32>,
    return
  }
  func.func @transform_0(%arg0: i32, %arg1: i32) -> (i32, i32, i32, i32, i32) {
    %c0_i32 = arith.constant 0 : i32
    %c0_i32_0 = arith.constant 0 : i32
    %c0_i32_1 = arith.constant 0 : i32
    %c0_i32_2 = arith.constant 0 : i32
    return %arg0, %c0_i32, %arg1, %c0_i32_0, %c0_i32_1 : i32, i32, i32, i32, i32
  }
  func.func @transform_1(%arg0: i32, %arg1: i32) -> (i32, i32, i32, i32) {
    %c0_i32 = arith.constant 0 : i32
    %c0_i32_0 = arith.constant 0 : i32
    %c0_i32_1 = arith.constant 0 : i32
    return %arg0, %arg1, %c0_i32, %c0_i32_0 : i32, i32, i32, i32
  }
}

</mosaic_0001>

<llo_original>
// kernel: tpu_custom_call.1
$region0: #{tpu_custom_call.1}
  #allocation0 [shape = 'u32[]', space=smem, size = 0x4, offset = 0x4, fixed_abs, tag = 'smem constant byte address 0x4 - core index']
  #allocation1 [shape = 'u32[144,128]{1,0:T(1,128)}', space=vmem, size = 0x12000, scoped, tag = 'internal scratch']
  %s0 = inlined_call_operand.hbm [shape: f32[4,8,4,8,8], index: 0, kind: input, shape index: {}]
  %s1 = inlined_call_operand.hbm [shape: f32[4,4,16,32], index: 1, kind: output, shape index: {}]
  %s2 = sld [smem:[#allocation0]]
  $region41: #{tpu_custom_call.1} parent=0
    _
  %s4 = ssub.s32 1, %s2
  %s5 = scalar_select 0, %s4, %s2
  $region1: #{tpu_custom_call.1} parent=0
    #allocation2 [shape = 'u8[65536]{0}', space=vmem, size = 0x10000, scoped, tag = 'input window, operand 0']
    #allocation3 [shape = 's32[2]{0}', space=sflag, size = 0x8, scoped, tag = 'scoped memory for tpu_custom_call.1']
    #allocation4 [shape = 's32[2]{0}', space=sflag, size = 0x8, scoped, tag = 'scoped memory for tpu_custom_call.1']
    #allocation5 [shape = 'u8[16384]{0}', space=vmem, size = 0x4000, scoped, tag = 'output window, operand 0']
    %6 = vsyncpa [#allocation3], 0
    %s7 = scalar_lea.sflag [#allocation3], 1
    %8 = vsyncpa %s7, 0
    %9 = vsyncpa [#allocation4], 0
    %s10 = scalar_lea.sflag [#allocation4], 1
    %11 = vsyncpa %s10, 0
    loop: start=0, step=1, limit=18
    $region2: #{tpu_custom_call.1} parent=1 // loop_pre_header
      _
    $region3: #{tpu_custom_call.1} parent=1 // loop_header
      %s13 = sphi 0, %s17
      %p14 = scmp.ge.s32.totalorder %s13, 18
      %s20 = sphi 0, %s32
      %s21 = sphi 0, %s28
      %s22 = sphi 0, %s20
      %s23 = sphi 0, %s21
      %s24 = sphi 0, %s22
      %s25 = sphi 0, %s23
      %s37 = sphi 0, %s39
      %s40 = sphi 0, %s37
      %s41 = sphi 0, %s40
      %s57 = sphi 0, %s41
      %s65 = sphi 0, %s67
      %s68 = sphi 0, %s65
      %s69 = sphi 0, %s68
      %s85 = sphi 0, %s69
    $region4: #{tpu_custom_call.1} parent=1 // loop_header_branch
      %16 = sbr.rel (%p14) target = $region8
    $region5: #{tpu_custom_call.1} parent=1 // loop_body
      %s18 = ssub.s32 %s13, 1
      %s19 = ssub.s32 %s13, 2
      %s26 = sadd.s32 1, %s21
      %p27 = scmp.ge.s32.totalorder %s26, 4
      %s28 = scalar_select %p27, 0, %s26
      %s29 = sadd.s32 1, %s20
      %s30 = scalar_select %p27, %s29, %s20
      %p31 = scmp.ge.s32.totalorder %s30, 4
      %s32 = scalar_select %p31, 0, %s30
      %s33 = ssub.s32 %s20, %s32
      %s34 = ssub.s32 %s21, %s28
      %s35 = sor.u32 %s33, %s34
      %p36 = scmp.eq.s32.totalorder %s35, 0
      %s38 = sadd.s32 %s37, 1
      %s39 = scalar_select %p36, %s37, %s38
      %p42 = pneg %p36
      %p43 = scmp.eq.s32.totalorder %s13, 15
      %p44 = por %p42, %p43
      %p45 = scmp.ne.s32.totalorder %s37, %s40
      %p46 = scmp.eq.s32.totalorder %s13, 0
      %p47 = por %p45, %p46
      %p48 = scmp.ne.s32.totalorder %s37, %s40
      %p49 = scmp.eq.s32.totalorder %s18, 15
      %p50 = por %p48, %p49
      %p51 = scmp.ne.s32.totalorder %s40, %s41
      %p52 = scmp.eq.s32.totalorder %s18, 0
      %p53 = por %p51, %p52
      %p54 = scmp.ne.s32.totalorder %s40, %s41
      %p55 = scmp.eq.s32.totalorder %s19, 15
      %p56 = por %p54, %p55
      %p58 = scmp.ne.s32.totalorder %s41, %s57
      %p59 = scmp.eq.s32.totalorder %s19, 0
      %p60 = por %p58, %p59
      %s61 = ssub.s32 %s20, %s32
      %s62 = ssub.s32 %s21, %s28
      %s63 = sor.u32 %s61, %s62
      %p64 = scmp.eq.s32.totalorder %s63, 0
      %s66 = sadd.s32 %s65, 1
      %s67 = scalar_select %p64, %s65, %s66
      %p70 = pneg %p64
      %p71 = scmp.eq.s32.totalorder %s13, 15
      %p72 = por %p70, %p71
      %p73 = scmp.ne.s32.totalorder %s65, %s68
      %p74 = scmp.eq.s32.totalorder %s13, 0
      %p75 = por %p73, %p74
      %p76 = scmp.ne.s32.totalorder %s65, %s68
      %p77 = scmp.eq.s32.totalorder %s18, 15
      %p78 = por %p76, %p77
      %p79 = scmp.ne.s32.totalorder %s68, %s69
      %p80 = scmp.eq.s32.totalorder %s18, 0
      %p81 = por %p79, %p80
      %p82 = scmp.ne.s32.totalorder %s68, %s69
      %p83 = scmp.eq.s32.totalorder %s19, 15
      %p84 = por %p82, %p83
      %p86 = scmp.ne.s32.totalorder %s69, %s85
      %p87 = scmp.eq.s32.totalorder %s19, 0
      %p88 = por %p86, %p87
      %p89 = scmp.le.s32.totalorder 1, %s13
      %p90 = scmp.lt.s32.totalorder %s13, 17
      %p91 = pnand %p89, %p90
      %p92 = pneg %p91
      // Predicated region
      $region9: #{tpu_custom_call.1} parent=5 // pred_check
        _
      $region10: #{tpu_custom_call.1} parent=5 // pred_check_branch
        %94 = sbr.rel (%p91) target = $region12
      $region11: #{tpu_custom_call.1} parent=5 // pred_region
        %s95 = ssub.s32 %s13, 1
      $region12: #{tpu_custom_call.1} parent=5 // pred_fallthru
        _
      %p96 = scmp.lt.s32.totalorder %s13, 16
      // Predicated region
      $region13: #{tpu_custom_call.1} parent=5 // pred_check
        %p97 = pneg %p96
      $region14: #{tpu_custom_call.1} parent=5 // pred_check_branch
        %99 = sbr.rel (%p97) target = $region16
      $region15: #{tpu_custom_call.1} parent=5 // pred_region
        // Predicated region
        $region17: #{tpu_custom_call.1} parent=15 // pred_check
          %p100 = pneg %p47
        $region18: #{tpu_custom_call.1} parent=15 // pred_check_branch
          %102 = sbr.rel (%p100) target = $region20
        $region19: #{tpu_custom_call.1} parent=15 // pred_region
          %s103 = sand.u32 %s37, 1
          %s104 = scalar_lea.sflag [#allocation3], %s103
          %s105 = sand.u32 %s37, 1
          %s106 = smul.addr %s105, 64
          %s107 = scalar_lea.vmem [#allocation2], %s106
          %s109 = ssub.s32 1024, 1024
          %110 = vsyncadd %s104, %s109
          %s111 = smul.addr %s20, 32
          %s112 = sadd.s32 %s21, %s111
          %s113 = smul.addr %s112, 128
          %s114 = scalar_lea.hbm %s0, %s113
          %s115 = sshll.u32 %s107, 4
          %s116 = int_to_ptr.vmem [resolvable:$true] %s115
          %121 = dma.hbm_to_vmem [thread:$0]  %s114, 1024, %s116, %s104, 512, 128, 8
        $region20: #{tpu_custom_call.1} parent=15 // pred_fallthru
          _
      $region16: #{tpu_custom_call.1} parent=5 // pred_fallthru
        _
      %p122 = scmp.le.s32.totalorder 1, %s13
      %p123 = scmp.lt.s32.totalorder %s13, 17
      %p124 = pnand %p122, %p123
      %p125 = pneg %p124
      // Predicated region
      $region21: #{tpu_custom_call.1} parent=5 // pred_check
        _
      $region22: #{tpu_custom_call.1} parent=5 // pred_check_branch
        %127 = sbr.rel (%p124) target = $region24
      $region23: #{tpu_custom_call.1} parent=5 // pred_region
        %s128 = ssub.s32 %s13, 1
        %s129 = sand.u32 %s40, 1
        %s130 = scalar_lea.sflag [#allocation3], %s129
        %s131 = sand.u32 %s40, 1
        %s132 = smul.addr %s131, 64
        %s133 = scalar_lea.vmem [#allocation2], %s132
        // Predicated region
        $region25: #{tpu_custom_call.1} parent=23 // pred_check
          %p134 = pneg %p53
        $region26: #{tpu_custom_call.1} parent=23 // pred_check_branch
          %136 = sbr.rel (%p134) target = $region28
        $region27: #{tpu_custom_call.1} parent=23 // pred_region
          %137 = dma.done %s130, 1024
        $region28: #{tpu_custom_call.1} parent=23 // pred_fallthru
          _
        %s138 = sand.u32 %s40, 1
        %s139 = scalar_lea.sflag [#allocation3], %s138
        %s140 = sand.u32 %s40, 1
        %s141 = smul.addr %s140, 64
        %s142 = scalar_lea.vmem [#allocation2], %s141
        %p143 = pneg %p53
        %p144 = pneg %p50
        %p145 = pneg %p81
        %p146 = pneg %p78
        %s147 = sand.u32 %s68, 1
        %s148 = scalar_lea.sflag [#allocation4], %s147
        %s149 = sand.u32 %s68, 1
        %s150 = smul.addr %s149, 16
        %s151 = scalar_lea.vmem [#allocation5], %s150
        %v152 = vlaneseq
        %v153 = vshrl.u32 %v152, 7
        %v154 = vlaneseq
        %v155 = vand.u32 %v154, 127
        %v156 = vmul.u32 %v153, 2
        %vm157 = vcmp.eq.s32.totalorder %v155, %v156
        %v158 = vsel %vm157, 1, 0
        %v159 = vcvt.s32.f32 %v158
        %v160 = vadd.s32 %v156, 1
        %vm161 = vcmp.eq.s32.totalorder %v155, %v160
        %v162 = vsel %vm161, 1, 0
        %v163 = vcvt.s32.f32 %v162
        %v164 = vadd.s32 %v156, 16
        %vm165 = vcmp.eq.s32.totalorder %v155, %v164
        %v166 = vsel %vm165, 1, 0
        %v167 = vcvt.s32.f32 %v166
        %v168 = vadd.s32 %v164, 1
        %vm169 = vcmp.eq.s32.totalorder %v155, %v168
        %v170 = vsel %vm169, 1, 0
        %v171 = vcvt.s32.f32 %v170
        %v172 = vld [vmem:[%s133] sm:$0xff]
        %s173 = scalar_lea.vmem %s133, 8 [#allocation2]
        %v174 = vld [vmem:[%s173] sm:$0xff]
        %vm175 = vcmask 64512
        %v177 = vsel %vm175, %v174, 0
        %179 = vmatprep.subr.mxu0 0.0
        %180 = vmatpush1.msra.mxu0 0.0
        %181 = vmatprep.subr.mxu0 0.0
        %182 = vmatpush1.msra.mxu0 0.0
        %183 = vmatprep.subr.mxu0 0.0
        %184 = vmatpush1.msra.mxu0 0.0
        %185 = vmatprep.subr.mxu0 0.0
        %186 = vmatpush1.msra.mxu0 0.0
        %187 = vmatprep.subr.mxu0 0.0
        %188 = vmatpush1.msra.mxu0 0.0
        %189 = vmatprep.subr.mxu0 0.0
        %190 = vmatpush1.msra.mxu0 0.0
        %191 = vmatprep.subr.mxu0 0.0
        %192 = vmatpush1.msra.mxu0 0.0
        %193 = vmatprep.subr.mxu0 0.0
        %194 = vmatpush1.msra.mxu0 0.0
        %195 = vmatprep.subr.mxu0 0.0
        %196 = vmatpush1.msra.mxu0 0.0
        %197 = vmatprep.subr.mxu0 0.0
        %198 = vmatpush1.msra.mxu0 0.0
        %199 = vmatprep.subr.mxu0 0.0
        %200 = vmatpush1.msra.mxu0 0.0
        %201 = vmatprep.subr.mxu0 0.0
        %202 = vmatpush1.msra.mxu0 0.0
        %203 = vmatprep.subr.mxu0 0.0
        %204 = vmatpush1.msra.mxu0 0.0
        %205 = vmatprep.subr.mxu0 0.0
        %206 = vmatpush1.msra.mxu0 0.0
        %207 = vmatprep.subr.mxu0 0.0
        %208 = vmatpush1.msra.mxu0 0.0
        %209 = vmatprep.subr.mxu0 0.0
        %v210 = vand.u32 %v163, 4294901760
        %211 = vmatpush1.msra.mxu0 %v210
        %212 = vmatprep.subr.mxu0 0.0
        %213 = vmatpush2.msra.mxu0 0.0
        %214 = vmatprep.subr.mxu0 0.0
        %215 = vmatpush2.msra.mxu0 0.0
        %216 = vmatprep.subr.mxu0 0.0
        %217 = vmatpush2.msra.mxu0 0.0
        %218 = vmatprep.subr.mxu0 0.0
        %219 = vmatpush2.msra.mxu0 0.0
        %220 = vmatprep.subr.mxu0 0.0
        %221 = vmatpush2.msra.mxu0 0.0
        %222 = vmatprep.subr.mxu0 0.0
        %223 = vmatpush2.msra.mxu0 0.0
        %224 = vmatprep.subr.mxu0 0.0
        %225 = vmatpush2.msra.mxu0 0.0
        %226 = vmatprep.subr.mxu0 0.0
        %227 = vmatpush2.msra.mxu0 0.0
        %228 = vmatprep.subr.mxu0 0.0
        %229 = vmatpush2.msra.mxu0 0.0
        %230 = vmatprep.subr.mxu0 0.0
        %231 = vmatpush2.msra.mxu0 0.0
        %232 = vmatprep.subr.mxu0 0.0
        %233 = vmatpush2.msra.mxu0 0.0
        %234 = vmatprep.subr.mxu0 0.0
        %235 = vmatpush2.msra.mxu0 0.0
        %236 = vmatprep.subr.mxu0 0.0
        %237 = vmatpush2.msra.mxu0 0.0
        %238 = vmatprep.subr.mxu0 0.0
        %239 = vmatpush2.msra.mxu0 0.0
        %240 = vmatprep.subr.mxu0 0.0
        %241 = vmatpush2.msra.mxu0 0.0
        %242 = vmatprep.subr.mxu0 0.0
        %243 = vmatpush2.msra.mxu0 0.0
        %244 = vmatprep.mubr.f32.mxu0 0.0
        %v245 = vand.u32 %v177, 4294901760
        %v246 = vsub.f32 %v177, %v245
        %v247 = vand.u32 %v246, 4294901760
        %v248 = vsub.f32 %v246, %v247
        %v249 = vand.u32 %v248, 4294901760
        %250 = vmatmul.mubr.f32.gmra.mxu0 %v249
        %v251 = vpop.f32.mrf.mxu0
        %v252 = vadd.f32 0.0, %v251
        %v253 = vpop.f32.mrf.mxu0
        %254 = vdwg.mxu0
        %255 = vmatprep.subr.mxu0 0.0
        %256 = vmatpush1.msra.mxu0 0.0
        %257 = vmatprep.subr.mxu0 0.0
        %258 = vmatpush1.msra.mxu0 0.0
        %259 = vmatprep.subr.mxu0 0.0
        %260 = vmatpush1.msra.mxu0 0.0
        %261 = vmatprep.subr.mxu0 0.0
        %262 = vmatpush1.msra.mxu0 0.0
        %263 = vmatprep.subr.mxu0 0.0
        %264 = vmatpush1.msra.mxu0 0.0
        %265 = vmatprep.subr.mxu0 0.0
        %266 = vmatpush1.msra.mxu0 0.0
        %267 = vmatprep.subr.mxu0 0.0
        %268 = vmatpush1.msra.mxu0 0.0
        %269 = vmatprep.subr.mxu0 0.0
        %270 = vmatpush1.msra.mxu0 0.0
        %271 = vmatprep.subr.mxu0 0.0
        %272 = vmatpush1.msra.mxu0 0.0
        %273 = vmatprep.subr.mxu0 0.0
        %274 = vmatpush1.msra.mxu0 0.0
        %275 = vmatprep.subr.mxu0 0.0
        %276 = vmatpush1.msra.mxu0 0.0
        %277 = vmatprep.subr.mxu0 0.0
        %278 = vmatpush1.msra.mxu0 0.0
        %279 = vmatprep.subr.mxu0 0.0
        %280 = vmatpush1.msra.mxu0 0.0
        %281 = vmatprep.subr.mxu0 0.0
        %282 = vmatpush1.msra.mxu0 0.0
        %283 = vmatprep.subr.mxu0 0.0
        %284 = vmatpush1.msra.mxu0 0.0
        %285 = vmatprep.subr.mxu0 0.0
        %v286 = vand.u32 %v163, 4294901760
        %v287 = vsub.f32 %v163, %v286
        %v288 = vand.u32 %v287, 4294901760
        %v289 = vsub.f32 %v287, %v288
        %v290 = vand.u32 %v289, 4294901760
        %291 = vmatpush1.msra.mxu0 %v290
        %292 = vmatprep.subr.mxu0 0.0
        %293 = vmatpush2.msra.mxu0 0.0
        %294 = vmatprep.subr.mxu0 0.0
        %295 = vmatpush2.msra.mxu0 0.0
        %296 = vmatprep.subr.mxu0 0.0
        %297 = vmatpush2.msra.mxu0 0.0
        %298 = vmatprep.subr.mxu0 0.0
        %299 = vmatpush2.msra.mxu0 0.0
        %300 = vmatprep.subr.mxu0 0.0
        %301 = vmatpush2.msra.mxu0 0.0
        %302 = vmatprep.subr.mxu0 0.0
        %303 = vmatpush2.msra.mxu0 0.0
        %304 = vmatprep.subr.mxu0 0.0
        %305 = vmatpush2.msra.mxu0 0.0
        %306 = vmatprep.subr.mxu0 0.0
        %307 = vmatpush2.msra.mxu0 0.0
        %308 = vmatprep.subr.mxu0 0.0
        %309 = vmatpush2.msra.mxu0 0.0
        %310 = vmatprep.subr.mxu0 0.0
        %311 = vmatpush2.msra.mxu0 0.0
        %312 = vmatprep.subr.mxu0 0.0
        %313 = vmatpush2.msra.mxu0 0.0
        %314 = vmatprep.subr.mxu0 0.0
        %315 = vmatpush2.msra.mxu0 0.0
        %316 = vmatprep.subr.mxu0 0.0
        %317 = vmatpush2.msra.mxu0 0.0
        %318 = vmatprep.subr.mxu0 0.0
        %319 = vmatpush2.msra.mxu0 0.0
        %320 = vmatprep.subr.mxu0 0.0
        %321 = vmatpush2.msra.mxu0 0.0
        %322 = vmatprep.subr.mxu0 0.0
        %323 = vmatpush2.msra.mxu0 0.0
        %324 = vmatprep.mubr.f32.mxu0 0.0
        %v325 = vand.u32 %v177, 4294901760
        %326 = vmatmul.mubr.f32.gmra.mxu0 %v325
        %v327 = vpop.f32.mrf.mxu0
        %v328 = vadd.f32 %v252, %v327
        %v329 = vpop.f32.mrf.mxu0
        %330 = vdwg.mxu0
        %331 = vmatprep.subr.mxu0 0.0
        %332 = vmatpush1.msra.mxu0 0.0
        %333 = vmatprep.subr.mxu0 0.0
        %334 = vmatpush1.msra.mxu0 0.0
        %335 = vmatprep.subr.mxu0 0.0
        %336 = vmatpush1.msra.mxu0 0.0
        %337 = vmatprep.subr.mxu0 0.0
        %338 = vmatpush1.msra.mxu0 0.0
        %339 = vmatprep.subr.mxu0 0.0
        %340 = vmatpush1.msra.mxu0 0.0
        %341 = vmatprep.subr.mxu0 0.0
        %342 = vmatpush1.msra.mxu0 0.0
        %343 = vmatprep.subr.mxu0 0.0
        %344 = vmatpush1.msra.mxu0 0.0
        %345 = vmatprep.subr.mxu0 0.0
        %346 = vmatpush1.msra.mxu0 0.0
        %347 = vmatprep.subr.mxu0 0.0
        %348 = vmatpush1.msra.mxu0 0.0
        %349 = vmatprep.subr.mxu0 0.0
        %350 = vmatpush1.msra.mxu0 0.0
        %351 = vmatprep.subr.mxu0 0.0
        %352 = vmatpush1.msra.mxu0 0.0
        %353 = vmatprep.subr.mxu0 0.0
        %354 = vmatpush1.msra.mxu0 0.0
        %355 = vmatprep.subr.mxu0 0.0
        %356 = vmatpush1.msra.mxu0 0.0
        %357 = vmatprep.subr.mxu0 0.0
        %358 = vmatpush1.msra.mxu0 0.0
        %359 = vmatprep.subr.mxu0 0.0
        %360 = vmatpush1.msra.mxu0 0.0
        %361 = vmatprep.subr.mxu0 0.0
        %v362 = vand.u32 %v163, 4294901760
        %v363 = vsub.f32 %v163, %v362
        %364 = vmatpush1.msra.mxu0 %v363
        %365 = vmatprep.subr.mxu0 0.0
        %366 = vmatpush2.msra.mxu0 0.0
        %367 = vmatprep.subr.mxu0 0.0
        %368 = vmatpush2.msra.mxu0 0.0
        %369 = vmatprep.subr.mxu0 0.0
        %370 = vmatpush2.msra.mxu0 0.0
        %371 = vmatprep.subr.mxu0 0.0
        %372 = vmatpush2.msra.mxu0 0.0
        %373 = vmatprep.subr.mxu0 0.0
        %374 = vmatpush2.msra.mxu0 0.0
        %375 = vmatprep.subr.mxu0 0.0
        %376 = vmatpush2.msra.mxu0 0.0
        %377 = vmatprep.subr.mxu0 0.0
        %378 = vmatpush2.msra.mxu0 0.0
        %379 = vmatprep.subr.mxu0 0.0
        %380 = vmatpush2.msra.mxu0 0.0
        %381 = vmatprep.subr.mxu0 0.0
        %382 = vmatpush2.msra.mxu0 0.0
        %383 = vmatprep.subr.mxu0 0.0
        %384 = vmatpush2.msra.mxu0 0.0
        %385 = vmatprep.subr.mxu0 0.0
        %386 = vmatpush2.msra.mxu0 0.0
        %387 = vmatprep.subr.mxu0 0.0
        %388 = vmatpush2.msra.mxu0 0.0
        %389 = vmatprep.subr.mxu0 0.0
        %390 = vmatpush2.msra.mxu0 0.0
        %391 = vmatprep.subr.mxu0 0.0
        %392 = vmatpush2.msra.mxu0 0.0
        %393 = vmatprep.subr.mxu0 0.0
        %394 = vmatpush2.msra.mxu0 0.0
        %395 = vmatprep.subr.mxu0 0.0
        %396 = vmatpush2.msra.mxu0 0.0
        %397 = vmatprep.mubr.f32.mxu0 0.0
        %v398 = vand.u32 %v177, 4294901760
        %v399 = vsub.f32 %v177, %v398
        %400 = vmatmul.mubr.f32.gmra.mxu0 %v399
        %v401 = vpop.f32.mrf.mxu0
        %v402 = vadd.f32 %v328, %v401
        %v403 = vpop.f32.mrf.mxu0
        %404 = vdwg.mxu0
        %405 = vmatprep.subr.mxu0 0.0
        %406 = vmatpush1.msra.mxu0 0.0
        %407 = vmatprep.subr.mxu0 0.0
        %408 = vmatpush1.msra.mxu0 0.0
        %409 = vmatprep.subr.mxu0 0.0
        %410 = vmatpush1.msra.mxu0 0.0
        %411 = vmatprep.subr.mxu0 0.0
        %412 = vmatpush1.msra.mxu0 0.0
        %413 = vmatprep.subr.mxu0 0.0
        %414 = vmatpush1.msra.mxu0 0.0
        %415 = vmatprep.subr.mxu0 0.0
        %416 = vmatpush1.msra.mxu0 0.0
        %417 = vmatprep.subr.mxu0 0.0
        %418 = vmatpush1.msra.mxu0 0.0
        %419 = vmatprep.subr.mxu0 0.0
        %420 = vmatpush1.msra.mxu0 0.0
        %421 = vmatprep.subr.mxu0 0.0
        %422 = vmatpush1.msra.mxu0 0.0
        %423 = vmatprep.subr.mxu0 0.0
        %424 = vmatpush1.msra.mxu0 0.0
        %425 = vmatprep.subr.mxu0 0.0
        %426 = vmatpush1.msra.mxu0 0.0
        %427 = vmatprep.subr.mxu0 0.0
        %428 = vmatpush1.msra.mxu0 0.0
        %429 = vmatprep.subr.mxu0 0.0
        %430 = vmatpush1.msra.mxu0 0.0
        %431 = vmatprep.subr.mxu0 0.0
        %432 = vmatpush1.msra.mxu0 0.0
        %433 = vmatprep.subr.mxu0 0.0
        %434 = vmatpush1.msra.mxu0 0.0
        %435 = vmatprep.subr.mxu0 0.0
        %v436 = vand.u32 %v163, 4294901760
        %437 = vmatpush1.msra.mxu0 %v436
        %438 = vmatprep.subr.mxu0 0.0
        %439 = vmatpush2.msra.mxu0 0.0
        %440 = vmatprep.subr.mxu0 0.0
        %441 = vmatpush2.msra.mxu0 0.0
        %442 = vmatprep.subr.mxu0 0.0
        %443 = vmatpush2.msra.mxu0 0.0
        %444 = vmatprep.subr.mxu0 0.0
        %445 = vmatpush2.msra.mxu0 0.0
        %446 = vmatprep.subr.mxu0 0.0
        %447 = vmatpush2.msra.mxu0 0.0
        %448 = vmatprep.subr.mxu0 0.0
        %449 = vmatpush2.msra.mxu0 0.0
        %450 = vmatprep.subr.mxu0 0.0
        %451 = vmatpush2.msra.mxu0 0.0
        %452 = vmatprep.subr.mxu0 0.0
        %453 = vmatpush2.msra.mxu0 0.0
        %454 = vmatprep.subr.mxu0 0.0
        %455 = vmatpush2.msra.mxu0 0.0
        %456 = vmatprep.subr.mxu0 0.0
        %457 = vmatpush2.msra.mxu0 0.0
        %458 = vmatprep.subr.mxu0 0.0
        %459 = vmatpush2.msra.mxu0 0.0
        %460 = vmatprep.subr.mxu0 0.0
        %461 = vmatpush2.msra.mxu0 0.0
        %462 = vmatprep.subr.mxu0 0.0
        %463 = vmatpush2.msra.mxu0 0.0
        %464 = vmatprep.subr.mxu0 0.0
        %465 = vmatpush2.msra.mxu0 0.0
        %466 = vmatprep.subr.mxu0 0.0
        %467 = vmatpush2.msra.mxu0 0.0
        %468 = vmatprep.subr.mxu0 0.0
        %469 = vmatpush2.msra.mxu0 0.0
        %470 = vmatprep.mubr.f32.mxu0 0.0
        %v471 = vand.u32 %v177, 4294901760
        %v472 = vsub.f32 %v177, %v471
        %v473 = vand.u32 %v472, 4294901760
        %474 = vmatmul.mubr.f32.gmra.mxu0 %v473
        %v475 = vpop.f32.mrf.mxu0
        %v476 = vadd.f32 %v402, %v475
        %v477 = vpop.f32.mrf.mxu0
        %478 = vdwg.mxu0
        %479 = vmatprep.subr.mxu0 0.0
        %480 = vmatpush1.msra.mxu0 0.0
        %481 = vmatprep.subr.mxu0 0.0
        %482 = vmatpush1.msra.mxu0 0.0
        %483 = vmatprep.subr.mxu0 0.0
        %484 = vmatpush1.msra.mxu0 0.0
        %485 = vmatprep.subr.mxu0 0.0
        %486 = vmatpush1.msra.mxu0 0.0
        %487 = vmatprep.subr.mxu0 0.0
        %488 = vmatpush1.msra.mxu0 0.0
        %489 = vmatprep.subr.mxu0 0.0
        %490 = vmatpush1.msra.mxu0 0.0
        %491 = vmatprep.subr.mxu0 0.0
        %492 = vmatpush1.msra.mxu0 0.0
        %493 = vmatprep.subr.mxu0 0.0
        %494 = vmatpush1.msra.mxu0 0.0
        %495 = vmatprep.subr.mxu0 0.0
        %496 = vmatpush1.msra.mxu0 0.0
        %497 = vmatprep.subr.mxu0 0.0
        %498 = vmatpush1.msra.mxu0 0.0
        %499 = vmatprep.subr.mxu0 0.0
        %500 = vmatpush1.msra.mxu0 0.0
        %501 = vmatprep.subr.mxu0 0.0
        %502 = vmatpush1.msra.mxu0 0.0
        %503 = vmatprep.subr.mxu0 0.0
        %504 = vmatpush1.msra.mxu0 0.0
        %505 = vmatprep.subr.mxu0 0.0
        %506 = vmatpush1.msra.mxu0 0.0
        %507 = vmatprep.subr.mxu0 0.0
        %508 = vmatpush1.msra.mxu0 0.0
        %509 = vmatprep.subr.mxu0 0.0
        %v510 = vand.u32 %v163, 4294901760
        %v511 = vsub.f32 %v163, %v510
        %v512 = vand.u32 %v511, 4294901760
        %513 = vmatpush1.msra.mxu0 %v512
        %514 = vmatprep.subr.mxu0 0.0
        %515 = vmatpush2.msra.mxu0 0.0
        %516 = vmatprep.subr.mxu0 0.0
        %517 = vmatpush2.msra.mxu0 0.0
        %518 = vmatprep.subr.mxu0 0.0
        %519 = vmatpush2.msra.mxu0 0.0
        %520 = vmatprep.subr.mxu0 0.0
        %521 = vmatpush2.msra.mxu0 0.0
        %522 = vmatprep.subr.mxu0 0.0
        %523 = vmatpush2.msra.mxu0 0.0
        %524 = vmatprep.subr.mxu0 0.0
        %525 = vmatpush2.msra.mxu0 0.0
        %526 = vmatprep.subr.mxu0 0.0
        %527 = vmatpush2.msra.mxu0 0.0
        %528 = vmatprep.subr.mxu0 0.0
        %529 = vmatpush2.msra.mxu0 0.0
        %530 = vmatprep.subr.mxu0 0.0
        %531 = vmatpush2.msra.mxu0 0.0
        %532 = vmatprep.subr.mxu0 0.0
        %533 = vmatpush2.msra.mxu0 0.0
        %534 = vmatprep.subr.mxu0 0.0
        %535 = vmatpush2.msra.mxu0 0.0
        %536 = vmatprep.subr.mxu0 0.0
        %537 = vmatpush2.msra.mxu0 0.0
        %538 = vmatprep.subr.mxu0 0.0
        %539 = vmatpush2.msra.mxu0 0.0
        %540 = vmatprep.subr.mxu0 0.0
        %541 = vmatpush2.msra.mxu0 0.0
        %542 = vmatprep.subr.mxu0 0.0
        %543 = vmatpush2.msra.mxu0 0.0
        %544 = vmatprep.subr.mxu0 0.0
        %545 = vmatpush2.msra.mxu0 0.0
        %546 = vmatprep.mubr.f32.mxu0 0.0
        %v547 = vand.u32 %v177, 4294901760
        %548 = vmatmul.mubr.f32.gmra.mxu0 %v547
        %v549 = vpop.f32.mrf.mxu0
        %v550 = vadd.f32 %v476, %v549
        %v551 = vpop.f32.mrf.mxu0
        %552 = vdwg.mxu0
        %553 = vmatprep.subr.mxu0 0.0
        %554 = vmatpush1.msra.mxu0 0.0
        %555 = vmatprep.subr.mxu0 0.0
        %556 = vmatpush1.msra.mxu0 0.0
        %557 = vmatprep.subr.mxu0 0.0
        %558 = vmatpush1.msra.mxu0 0.0
        %559 = vmatprep.subr.mxu0 0.0
        %560 = vmatpush1.msra.mxu0 0.0
        %561 = vmatprep.subr.mxu0 0.0
        %562 = vmatpush1.msra.mxu0 0.0
        %563 = vmatprep.subr.mxu0 0.0
        %564 = vmatpush1.msra.mxu0 0.0
        %565 = vmatprep.subr.mxu0 0.0
        %566 = vmatpush1.msra.mxu0 0.0
        %567 = vmatprep.subr.mxu0 0.0
        %568 = vmatpush1.msra.mxu0 0.0
        %569 = vmatprep.subr.mxu0 0.0
        %570 = vmatpush1.msra.mxu0 0.0
        %571 = vmatprep.subr.mxu0 0.0
        %572 = vmatpush1.msra.mxu0 0.0
        %573 = vmatprep.subr.mxu0 0.0
        %574 = vmatpush1.msra.mxu0 0.0
        %575 = vmatprep.subr.mxu0 0.0
        %576 = vmatpush1.msra.mxu0 0.0
        %577 = vmatprep.subr.mxu0 0.0
        %578 = vmatpush1.msra.mxu0 0.0
        %579 = vmatprep.subr.mxu0 0.0
        %580 = vmatpush1.msra.mxu0 0.0
        %581 = vmatprep.subr.mxu0 0.0
        %582 = vmatpush1.msra.mxu0 0.0
        %583 = vmatprep.subr.mxu0 0.0
        %v584 = vand.u32 %v163, 4294901760
        %585 = vmatpush1.msra.mxu0 %v584
        %586 = vmatprep.subr.mxu0 0.0
        %587 = vmatpush2.msra.mxu0 0.0
        %588 = vmatprep.subr.mxu0 0.0
        %589 = vmatpush2.msra.mxu0 0.0
        %590 = vmatprep.subr.mxu0 0.0
        %591 = vmatpush2.msra.mxu0 0.0
        %592 = vmatprep.subr.mxu0 0.0
        %593 = vmatpush2.msra.mxu0 0.0
        %594 = vmatprep.subr.mxu0 0.0
        %595 = vmatpush2.msra.mxu0 0.0
        %596 = vmatprep.subr.mxu0 0.0
        %597 = vmatpush2.msra.mxu0 0.0
        %598 = vmatprep.subr.mxu0 0.0
        %599 = vmatpush2.msra.mxu0 0.0
        %600 = vmatprep.subr.mxu0 0.0
        %601 = vmatpush2.msra.mxu0 0.0
        %602 = vmatprep.subr.mxu0 0.0
        %603 = vmatpush2.msra.mxu0 0.0
        %604 = vmatprep.subr.mxu0 0.0
        %605 = vmatpush2.msra.mxu0 0.0
        %606 = vmatprep.subr.mxu0 0.0
        %607 = vmatpush2.msra.mxu0 0.0
        %608 = vmatprep.subr.mxu0 0.0
        %609 = vmatpush2.msra.mxu0 0.0
        %610 = vmatprep.subr.mxu0 0.0
        %611 = vmatpush2.msra.mxu0 0.0
        %612 = vmatprep.subr.mxu0 0.0
        %613 = vmatpush2.msra.mxu0 0.0
        %614 = vmatprep.subr.mxu0 0.0
        %615 = vmatpush2.msra.mxu0 0.0
        %616 = vmatprep.subr.mxu0 0.0
        %617 = vmatpush2.msra.mxu0 0.0
        %618 = vmatprep.mubr.f32.mxu0 0.0
        %v619 = vand.u32 %v177, 4294901760
        %620 = vmatmul.mubr.f32.gmra.mxu0 %v619
        %v621 = vpop.f32.mrf.mxu0
        %v622 = vadd.f32 %v550, %v621
        %v623 = vpop.f32.mrf.mxu0
        %624 = vdwg.mxu0
        %v626 = vsel %vm175, %v172, 0
        %628 = vmatprep.subr.mxu0 0.0
        %629 = vmatpush1.msra.mxu0 0.0
        %630 = vmatprep.subr.mxu0 0.0
        %631 = vmatpush1.msra.mxu0 0.0
        %632 = vmatprep.subr.mxu0 0.0
        %633 = vmatpush1.msra.mxu0 0.0
        %634 = vmatprep.subr.mxu0 0.0
        %635 = vmatpush1.msra.mxu0 0.0
        %636 = vmatprep.subr.mxu0 0.0
        %637 = vmatpush1.msra.mxu0 0.0
        %638 = vmatprep.subr.mxu0 0.0
        %639 = vmatpush1.msra.mxu0 0.0
        %640 = vmatprep.subr.mxu0 0.0
        %641 = vmatpush1.msra.mxu0 0.0
        %642 = vmatprep.subr.mxu0 0.0
        %643 = vmatpush1.msra.mxu0 0.0
        %644 = vmatprep.subr.mxu0 0.0
        %645 = vmatpush1.msra.mxu0 0.0
        %646 = vmatprep.subr.mxu0 0.0
        %647 = vmatpush1.msra.mxu0 0.0
        %648 = vmatprep.subr.mxu0 0.0
        %649 = vmatpush1.msra.mxu0 0.0
        %650 = vmatprep.subr.mxu0 0.0
        %651 = vmatpush1.msra.mxu0 0.0
        %652 = vmatprep.subr.mxu0 0.0
        %653 = vmatpush1.msra.mxu0 0.0
        %654 = vmatprep.subr.mxu0 0.0
        %655 = vmatpush1.msra.mxu0 0.0
        %656 = vmatprep.subr.mxu0 0.0
        %657 = vmatpush1.msra.mxu0 0.0
        %658 = vmatprep.subr.mxu0 0.0
        %v659 = vand.u32 %v159, 4294901760
        %660 = vmatpush1.msra.mxu0 %v659
        %661 = vmatprep.subr.mxu0 0.0
        %662 = vmatpush2.msra.mxu0 0.0
        %663 = vmatprep.subr.mxu0 0.0
        %664 = vmatpush2.msra.mxu0 0.0
        %665 = vmatprep.subr.mxu0 0.0
        %666 = vmatpush2.msra.mxu0 0.0
        %667 = vmatprep.subr.mxu0 0.0
        %668 = vmatpush2.msra.mxu0 0.0
        %669 = vmatprep.subr.mxu0 0.0
        %670 = vmatpush2.msra.mxu0 0.0
        %671 = vmatprep.subr.mxu0 0.0
        %672 = vmatpush2.msra.mxu0 0.0
        %673 = vmatprep.subr.mxu0 0.0
        %674 = vmatpush2.msra.mxu0 0.0
        %675 = vmatprep.subr.mxu0 0.0
        %676 = vmatpush2.msra.mxu0 0.0
        %677 = vmatprep.subr.mxu0 0.0
        %678 = vmatpush2.msra.mxu0 0.0
        %679 = vmatprep.subr.mxu0 0.0
        %680 = vmatpush2.msra.mxu0 0.0
        %681 = vmatprep.subr.mxu0 0.0
        %682 = vmatpush2.msra.mxu0 0.0
        %683 = vmatprep.subr.mxu0 0.0
        %684 = vmatpush2.msra.mxu0 0.0
        %685 = vmatprep.subr.mxu0 0.0
        %686 = vmatpush2.msra.mxu0 0.0
        %687 = vmatprep.subr.mxu0 0.0
        %688 = vmatpush2.msra.mxu0 0.0
        %689 = vmatprep.subr.mxu0 0.0
        %690 = vmatpush2.msra.mxu0 0.0
        %691 = vmatprep.subr.mxu0 0.0
        %692 = vmatpush2.msra.mxu0 0.0
        %693 = vmatprep.mubr.f32.mxu0 0.0
        %v694 = vand.u32 %v626, 4294901760
        %v695 = vsub.f32 %v626, %v694
        %v696 = vand.u32 %v695, 4294901760
        %v697 = vsub.f32 %v695, %v696
        %v698 = vand.u32 %v697, 4294901760
        %699 = vmatmul.mubr.f32.gmra.mxu0 %v698
        %v700 = vpop.f32.mrf.mxu0
        %v701 = vadd.f32 %v622, %v700
        %v702 = vpop.f32.mrf.mxu0
        %703 = vdwg.mxu0
        %704 = vmatprep.subr.mxu0 0.0
        %705 = vmatpush1.msra.mxu0 0.0
        %706 = vmatprep.subr.mxu0 0.0
        %707 = vmatpush1.msra.mxu0 0.0
        %708 = vmatprep.subr.mxu0 0.0
        %709 = vmatpush1.msra.mxu0 0.0
        %710 = vmatprep.subr.mxu0 0.0
        %711 = vmatpush1.msra.mxu0 0.0
        %712 = vmatprep.subr.mxu0 0.0
        %713 = vmatpush1.msra.mxu0 0.0
        %714 = vmatprep.subr.mxu0 0.0
        %715 = vmatpush1.msra.mxu0 0.0
        %716 = vmatprep.subr.mxu0 0.0
        %717 = vmatpush1.msra.mxu0 0.0
        %718 = vmatprep.subr.mxu0 0.0
        %719 = vmatpush1.msra.mxu0 0.0
        %720 = vmatprep.subr.mxu0 0.0
        %721 = vmatpush1.msra.mxu0 0.0
        %722 = vmatprep.subr.mxu0 0.0
        %723 = vmatpush1.msra.mxu0 0.0
        %724 = vmatprep.subr.mxu0 0.0
        %725 = vmatpush1.msra.mxu0 0.0
        %726 = vmatprep.subr.mxu0 0.0
        %727 = vmatpush1.msra.mxu0 0.0
        %728 = vmatprep.subr.mxu0 0.0
        %729 = vmatpush1.msra.mxu0 0.0
        %730 = vmatprep.subr.mxu0 0.0
        %731 = vmatpush1.msra.mxu0 0.0
        %732 = vmatprep.subr.mxu0 0.0
        %733 = vmatpush1.msra.mxu0 0.0
        %734 = vmatprep.subr.mxu0 0.0
        %v735 = vand.u32 %v159, 4294901760
        %v736 = vsub.f32 %v159, %v735
        %v737 = vand.u32 %v736, 4294901760
        %v738 = vsub.f32 %v736, %v737
        %v739 = vand.u32 %v738, 4294901760
        %740 = vmatpush1.msra.mxu0 %v739
        %741 = vmatprep.subr.mxu0 0.0
        %742 = vmatpush2.msra.mxu0 0.0
        %743 = vmatprep.subr.mxu0 0.0
        %744 = vmatpush2.msra.mxu0 0.0
        %745 = vmatprep.subr.mxu0 0.0
        %746 = vmatpush2.msra.mxu0 0.0
        %747 = vmatprep.subr.mxu0 0.0
        %748 = vmatpush2.msra.mxu0 0.0
        %749 = vmatprep.subr.mxu0 0.0
        %750 = vmatpush2.msra.mxu0 0.0
        %751 = vmatprep.subr.mxu0 0.0
        %752 = vmatpush2.msra.mxu0 0.0
        %753 = vmatprep.subr.mxu0 0.0
        %754 = vmatpush2.msra.mxu0 0.0
        %755 = vmatprep.subr.mxu0 0.0
        %756 = vmatpush2.msra.mxu0 0.0
        %757 = vmatprep.subr.mxu0 0.0
        %758 = vmatpush2.msra.mxu0 0.0
        %759 = vmatprep.subr.mxu0 0.0
        %760 = vmatpush2.msra.mxu0 0.0
        %761 = vmatprep.subr.mxu0 0.0
        %762 = vmatpush2.msra.mxu0 0.0
        %763 = vmatprep.subr.mxu0 0.0
        %764 = vmatpush2.msra.mxu0 0.0
        %765 = vmatprep.subr.mxu0 0.0
        %766 = vmatpush2.msra.mxu0 0.0
        %767 = vmatprep.subr.mxu0 0.0
        %768 = vmatpush2.msra.mxu0 0.0
        %769 = vmatprep.subr.mxu0 0.0
        %770 = vmatpush2.msra.mxu0 0.0
        %771 = vmatprep.subr.mxu0 0.0
        %772 = vmatpush2.msra.mxu0 0.0
        %773 = vmatprep.mubr.f32.mxu0 0.0
        %v774 = vand.u32 %v626, 4294901760
        %775 = vmatmul.mubr.f32.gmra.mxu0 %v774
        %v776 = vpop.f32.mrf.mxu0
        %v777 = vadd.f32 %v701, %v776
        %v778 = vpop.f32.mrf.mxu0
        %779 = vdwg.mxu0
        %780 = vmatprep.subr.mxu0 0.0
        %781 = vmatpush1.msra.mxu0 0.0
        %782 = vmatprep.subr.mxu0 0.0
        %783 = vmatpush1.msra.mxu0 0.0
        %784 = vmatprep.subr.mxu0 0.0
        %785 = vmatpush1.msra.mxu0 0.0
        %786 = vmatprep.subr.mxu0 0.0
        %787 = vmatpush1.msra.mxu0 0.0
        %788 = vmatprep.subr.mxu0 0.0
        %789 = vmatpush1.msra.mxu0 0.0
        %790 = vmatprep.subr.mxu0 0.0
        %791 = vmatpush1.msra.mxu0 0.0
        %792 = vmatprep.subr.mxu0 0.0
        %793 = vmatpush1.msra.mxu0 0.0
        %794 = vmatprep.subr.mxu0 0.0
        %795 = vmatpush1.msra.mxu0 0.0
        %796 = vmatprep.subr.mxu0 0.0
        %797 = vmatpush1.msra.mxu0 0.0
        %798 = vmatprep.subr.mxu0 0.0
        %799 = vmatpush1.msra.mxu0 0.0
        %800 = vmatprep.subr.mxu0 0.0
        %801 = vmatpush1.msra.mxu0 0.0
        %802 = vmatprep.subr.mxu0 0.0
        %803 = vmatpush1.msra.mxu0 0.0
        %804 = vmatprep.subr.mxu0 0.0
        %805 = vmatpush1.msra.mxu0 0.0
        %806 = vmatprep.subr.mxu0 0.0
        %807 = vmatpush1.msra.mxu0 0.0
        %808 = vmatprep.subr.mxu0 0.0
        %809 = vmatpush1.msra.mxu0 0.0
        %810 = vmatprep.subr.mxu0 0.0
        %v811 = vand.u32 %v159, 4294901760
        %v812 = vsub.f32 %v159, %v811
        %813 = vmatpush1.msra.mxu0 %v812
        %814 = vmatprep.subr.mxu0 0.0
        %815 = vmatpush2.msra.mxu0 0.0
        %816 = vmatprep.subr.mxu0 0.0
        %817 = vmatpush2.msra.mxu0 0.0
        %818 = vmatprep.subr.mxu0 0.0
        %819 = vmatpush2.msra.mxu0 0.0
        %820 = vmatprep.subr.mxu0 0.0
        %821 = vmatpush2.msra.mxu0 0.0
        %822 = vmatprep.subr.mxu0 0.0
        %823 = vmatpush2.msra.mxu0 0.0
        %824 = vmatprep.subr.mxu0 0.0
        %825 = vmatpush2.msra.mxu0 0.0
        %826 = vmatprep.subr.mxu0 0.0
        %827 = vmatpush2.msra.mxu0 0.0
        %828 = vmatprep.subr.mxu0 0.0
        %829 = vmatpush2.msra.mxu0 0.0
        %830 = vmatprep.subr.mxu0 0.0
        %831 = vmatpush2.msra.mxu0 0.0
        %832 = vmatprep.subr.mxu0 0.0
        %833 = vmatpush2.msra.mxu0 0.0
        %834 = vmatprep.subr.mxu0 0.0
        %835 = vmatpush2.msra.mxu0 0.0
        %836 = vmatprep.subr.mxu0 0.0
        %837 = vmatpush2.msra.mxu0 0.0
        %838 = vmatprep.subr.mxu0 0.0
        %839 = vmatpush2.msra.mxu0 0.0
        %840 = vmatprep.subr.mxu0 0.0
        %841 = vmatpush2.msra.mxu0 0.0
        %842 = vmatprep.subr.mxu0 0.0
        %843 = vmatpush2.msra.mxu0 0.0
        %844 = vmatprep.subr.mxu0 0.0
        %845 = vmatpush2.msra.mxu0 0.0
        %846 = vmatprep.mubr.f32.mxu0 0.0
        %v847 = vand.u32 %v626, 4294901760
        %v848 = vsub.f32 %v626, %v847
        %849 = vmatmul.mubr.f32.gmra.mxu0 %v848
        %v850 = vpop.f32.mrf.mxu0
        %v851 = vadd.f32 %v777, %v850
        %v852 = vpop.f32.mrf.mxu0
        %853 = vdwg.mxu0
        %854 = vmatprep.subr.mxu0 0.0
        %855 = vmatpush1.msra.mxu0 0.0
        %856 = vmatprep.subr.mxu0 0.0
        %857 = vmatpush1.msra.mxu0 0.0
        %858 = vmatprep.subr.mxu0 0.0
        %859 = vmatpush1.msra.mxu0 0.0
        %860 = vmatprep.subr.mxu0 0.0
        %861 = vmatpush1.msra.mxu0 0.0
        %862 = vmatprep.subr.mxu0 0.0
        %863 = vmatpush1.msra.mxu0 0.0
        %864 = vmatprep.subr.mxu0 0.0
        %865 = vmatpush1.msra.mxu0 0.0
        %866 = vmatprep.subr.mxu0 0.0
        %867 = vmatpush1.msra.mxu0 0.0
        %868 = vmatprep.subr.mxu0 0.0
        %869 = vmatpush1.msra.mxu0 0.0
        %870 = vmatprep.subr.mxu0 0.0
        %871 = vmatpush1.msra.mxu0 0.0
        %872 = vmatprep.subr.mxu0 0.0
        %873 = vmatpush1.msra.mxu0 0.0
        %874 = vmatprep.subr.mxu0 0.0
        %875 = vmatpush1.msra.mxu0 0.0
        %876 = vmatprep.subr.mxu0 0.0
        %877 = vmatpush1.msra.mxu0 0.0
        %878 = vmatprep.subr.mxu0 0.0
        %879 = vmatpush1.msra.mxu0 0.0
        %880 = vmatprep.subr.mxu0 0.0
        %881 = vmatpush1.msra.mxu0 0.0
        %882 = vmatprep.subr.mxu0 0.0
        %883 = vmatpush1.msra.mxu0 0.0
        %884 = vmatprep.subr.mxu0 0.0
        %v885 = vand.u32 %v159, 4294901760
        %886 = vmatpush1.msra.mxu0 %v885
        %887 = vmatprep.subr.mxu0 0.0
        %888 = vmatpush2.msra.mxu0 0.0
        %889 = vmatprep.subr.mxu0 0.0
        %890 = vmatpush2.msra.mxu0 0.0
        %891 = vmatprep.subr.mxu0 0.0
        %892 = vmatpush2.msra.mxu0 0.0
        %893 = vmatprep.subr.mxu0 0.0
        %894 = vmatpush2.msra.mxu0 0.0
        %895 = vmatprep.subr.mxu0 0.0
        %896 = vmatpush2.msra.mxu0 0.0
        %897 = vmatprep.subr.mxu0 0.0
        %898 = vmatpush2.msra.mxu0 0.0
        %899 = vmatprep.subr.mxu0 0.0
        %900 = vmatpush2.msra.mxu0 0.0
        %901 = vmatprep.subr.mxu0 0.0
        %902 = vmatpush2.msra.mxu0 0.0
        %903 = vmatprep.subr.mxu0 0.0
        %904 = vmatpush2.msra.mxu0 0.0
        %905 = vmatprep.subr.mxu0 0.0
        %906 = vmatpush2.msra.mxu0 0.0
        %907 = vmatprep.subr.mxu0 0.0
        %908 = vmatpush2.msra.mxu0 0.0
        %909 = vmatprep.subr.mxu0 0.0
        %910 = vmatpush2.msra.mxu0 0.0
        %911 = vmatprep.subr.mxu0 0.0
        %912 = vmatpush2.msra.mxu0 0.0
        %913 = vmatprep.subr.mxu0 0.0
        %914 = vmatpush2.msra.mxu0 0.0
        %915 = vmatprep.subr.mxu0 0.0
        %916 = vmatpush2.msra.mxu0 0.0
        %917 = vmatprep.subr.mxu0 0.0
        %918 = vmatpush2.msra.mxu0 0.0
        %919 = vmatprep.mubr.f32.mxu0 0.0
        %v920 = vand.u32 %v626, 4294901760
        %v921 = vsub.f32 %v626, %v920
        %v922 = vand.u32 %v921, 4294901760
        %923 = vmatmul.mubr.f32.gmra.mxu0 %v922
        %v924 = vpop.f32.mrf.mxu0
        %v925 = vadd.f32 %v851, %v924
        %v926 = vpop.f32.mrf.mxu0
        %927 = vdwg.mxu0
        %928 = vmatprep.subr.mxu0 0.0
        %929 = vmatpush1.msra.mxu0 0.0
        %930 = vmatprep.subr.mxu0 0.0
        %931 = vmatpush1.msra.mxu0 0.0
        %932 = vmatprep.subr.mxu0 0.0
        %933 = vmatpush1.msra.mxu0 0.0
        %934 = vmatprep.subr.mxu0 0.0
        %935 = vmatpush1.msra.mxu0 0.0
        %936 = vmatprep.subr.mxu0 0.0
        %937 = vmatpush1.msra.mxu0 0.0
        %938 = vmatprep.subr.mxu0 0.0
        %939 = vmatpush1.msra.mxu0 0.0
        %940 = vmatprep.subr.mxu0 0.0
        %941 = vmatpush1.msra.mxu0 0.0
        %942 = vmatprep.subr.mxu0 0.0
        %943 = vmatpush1.msra.mxu0 0.0
        %944 = vmatprep.subr.mxu0 0.0
        %945 = vmatpush1.msra.mxu0 0.0
        %946 = vmatprep.subr.mxu0 0.0
        %947 = vmatpush1.msra.mxu0 0.0
        %948 = vmatprep.subr.mxu0 0.0
        %949 = vmatpush1.msra.mxu0 0.0
        %950 = vmatprep.subr.mxu0 0.0
        %951 = vmatpush1.msra.mxu0 0.0
        %952 = vmatprep.subr.mxu0 0.0
        %953 = vmatpush1.msra.mxu0 0.0
        %954 = vmatprep.subr.mxu0 0.0
        %955 = vmatpush1.msra.mxu0 0.0
        %956 = vmatprep.subr.mxu0 0.0
        %957 = vmatpush1.msra.mxu0 0.0
        %958 = vmatprep.subr.mxu0 0.0
        %v959 = vand.u32 %v159, 4294901760
        %v960 = vsub.f32 %v159, %v959
        %v961 = vand.u32 %v960, 4294901760
        %962 = vmatpush1.msra.mxu0 %v961
        %963 = vmatprep.subr.mxu0 0.0
        %964 = vmatpush2.msra.mxu0 0.0
        %965 = vmatprep.subr.mxu0 0.0
        %966 = vmatpush2.msra.mxu0 0.0
        %967 = vmatprep.subr.mxu0 0.0
        %968 = vmatpush2.msra.mxu0 0.0
        %969 = vmatprep.subr.mxu0 0.0
        %970 = vmatpush2.msra.mxu0 0.0
        %971 = vmatprep.subr.mxu0 0.0
        %972 = vmatpush2.msra.mxu0 0.0
        %973 = vmatprep.subr.mxu0 0.0
        %974 = vmatpush2.msra.mxu0 0.0
        %975 = vmatprep.subr.mxu0 0.0
        %976 = vmatpush2.msra.mxu0 0.0
        %977 = vmatprep.subr.mxu0 0.0
        %978 = vmatpush2.msra.mxu0 0.0
        %979 = vmatprep.subr.mxu0 0.0
        %980 = vmatpush2.msra.mxu0 0.0
        %981 = vmatprep.subr.mxu0 0.0
        %982 = vmatpush2.msra.mxu0 0.0
        %983 = vmatprep.subr.mxu0 0.0
        %984 = vmatpush2.msra.mxu0 0.0
        %985 = vmatprep.subr.mxu0 0.0
        %986 = vmatpush2.msra.mxu0 0.0
        %987 = vmatprep.subr.mxu0 0.0
        %988 = vmatpush2.msra.mxu0 0.0
        %989 = vmatprep.subr.mxu0 0.0
        %990 = vmatpush2.msra.mxu0 0.0
        %991 = vmatprep.subr.mxu0 0.0
        %992 = vmatpush2.msra.mxu0 0.0
        %993 = vmatprep.subr.mxu0 0.0
        %994 = vmatpush2.msra.mxu0 0.0
        %995 = vmatprep.mubr.f32.mxu0 0.0
        %v996 = vand.u32 %v626, 4294901760
        %997 = vmatmul.mubr.f32.gmra.mxu0 %v996
        %v998 = vpop.f32.mrf.mxu0
        %v999 = vadd.f32 %v925, %v998
        %v1000 = vpop.f32.mrf.mxu0
        %1001 = vdwg.mxu0
        %1002 = vmatprep.subr.mxu0 0.0
        %1003 = vmatpush1.msra.mxu0 0.0
        %1004 = vmatprep.subr.mxu0 0.0
        %1005 = vmatpush1.msra.mxu0 0.0
        %1006 = vmatprep.subr.mxu0 0.0
        %1007 = vmatpush1.msra.mxu0 0.0
        %1008 = vmatprep.subr.mxu0 0.0
        %1009 = vmatpush1.msra.mxu0 0.0
        %1010 = vmatprep.subr.mxu0 0.0
        %1011 = vmatpush1.msra.mxu0 0.0
        %1012 = vmatprep.subr.mxu0 0.0
        %1013 = vmatpush1.msra.mxu0 0.0
        %1014 = vmatprep.subr.mxu0 0.0
        %1015 = vmatpush1.msra.mxu0 0.0
        %1016 = vmatprep.subr.mxu0 0.0
        %1017 = vmatpush1.msra.mxu0 0.0
        %1018 = vmatprep.subr.mxu0 0.0
        %1019 = vmatpush1.msra.mxu0 0.0
        %1020 = vmatprep.subr.mxu0 0.0
        %1021 = vmatpush1.msra.mxu0 0.0
        %1022 = vmatprep.subr.mxu0 0.0
        %1023 = vmatpush1.msra.mxu0 0.0
        %1024 = vmatprep.subr.mxu0 0.0
        %1025 = vmatpush1.msra.mxu0 0.0
        %1026 = vmatprep.subr.mxu0 0.0
        %1027 = vmatpush1.msra.mxu0 0.0
        %1028 = vmatprep.subr.mxu0 0.0
        %1029 = vmatpush1.msra.mxu0 0.0
        %1030 = vmatprep.subr.mxu0 0.0
        %1031 = vmatpush1.msra.mxu0 0.0
        %1032 = vmatprep.subr.mxu0 0.0
        %v1033 = vand.u32 %v159, 4294901760
        %1034 = vmatpush1.msra.mxu0 %v1033
        %1035 = vmatprep.subr.mxu0 0.0
        %1036 = vmatpush2.msra.mxu0 0.0
        %1037 = vmatprep.subr.mxu0 0.0
        %1038 = vmatpush2.msra.mxu0 0.0
        %1039 = vmatprep.subr.mxu0 0.0
        %1040 = vmatpush2.msra.mxu0 0.0
        %1041 = vmatprep.subr.mxu0 0.0
        %1042 = vmatpush2.msra.mxu0 0.0
        %1043 = vmatprep.subr.mxu0 0.0
        %1044 = vmatpush2.msra.mxu0 0.0
        %1045 = vmatprep.subr.mxu0 0.0
        %1046 = vmatpush2.msra.mxu0 0.0
        %1047 = vmatprep.subr.mxu0 0.0
        %1048 = vmatpush2.msra.mxu0 0.0
        %1049 = vmatprep.subr.mxu0 0.0
        %1050 = vmatpush2.msra.mxu0 0.0
        %1051 = vmatprep.subr.mxu0 0.0
        %1052 = vmatpush2.msra.mxu0 0.0
        %1053 = vmatprep.subr.mxu0 0.0
        %1054 = vmatpush2.msra.mxu0 0.0
        %1055 = vmatprep.subr.mxu0 0.0
        %1056 = vmatpush2.msra.mxu0 0.0
        %1057 = vmatprep.subr.mxu0 0.0
        %1058 = vmatpush2.msra.mxu0 0.0
        %1059 = vmatprep.subr.mxu0 0.0
        %1060 = vmatpush2.msra.mxu0 0.0
        %1061 = vmatprep.subr.mxu0 0.0
        %1062 = vmatpush2.msra.mxu0 0.0
        %1063 = vmatprep.subr.mxu0 0.0
        %1064 = vmatpush2.msra.mxu0 0.0
        %1065 = vmatprep.subr.mxu0 0.0
        %1066 = vmatpush2.msra.mxu0 0.0
        %1067 = vmatprep.mubr.f32.mxu0 0.0
        %v1068 = vand.u32 %v626, 4294901760
        %1069 = vmatmul.mubr.f32.gmra.mxu0 %v1068
        %v1070 = vpop.f32.mrf.mxu0
        %v1071 = vadd.f32 %v999, %v1070
        %v1072 = vpop.f32.mrf.mxu0
        %1073 = vdwg.mxu0
        %s1074 = scalar_lea.vmem %s133, 16 [#allocation2]
        %v1075 = vld [vmem:[%s1074] sm:$0xff]
        %v1077 = vsel %vm175, %v1075, 0
        %1079 = vmatprep.subr.mxu0 0.0
        %1080 = vmatpush1.msra.mxu0 0.0
        %1081 = vmatprep.subr.mxu0 0.0
        %1082 = vmatpush1.msra.mxu0 0.0
        %1083 = vmatprep.subr.mxu0 0.0
        %1084 = vmatpush1.msra.mxu0 0.0
        %1085 = vmatprep.subr.mxu0 0.0
        %1086 = vmatpush1.msra.mxu0 0.0
        %1087 = vmatprep.subr.mxu0 0.0
        %1088 = vmatpush1.msra.mxu0 0.0
        %1089 = vmatprep.subr.mxu0 0.0
        %1090 = vmatpush1.msra.mxu0 0.0
        %1091 = vmatprep.subr.mxu0 0.0
        %1092 = vmatpush1.msra.mxu0 0.0
        %1093 = vmatprep.subr.mxu0 0.0
        %1094 = vmatpush1.msra.mxu0 0.0
        %1095 = vmatprep.subr.mxu0 0.0
        %1096 = vmatpush1.msra.mxu0 0.0
        %1097 = vmatprep.subr.mxu0 0.0
        %1098 = vmatpush1.msra.mxu0 0.0
        %1099 = vmatprep.subr.mxu0 0.0
        %1100 = vmatpush1.msra.mxu0 0.0
        %1101 = vmatprep.subr.mxu0 0.0
        %1102 = vmatpush1.msra.mxu0 0.0
        %1103 = vmatprep.subr.mxu0 0.0
        %1104 = vmatpush1.msra.mxu0 0.0
        %1105 = vmatprep.subr.mxu0 0.0
        %1106 = vmatpush1.msra.mxu0 0.0
        %1107 = vmatprep.subr.mxu0 0.0
        %1108 = vmatpush1.msra.mxu0 0.0
        %1109 = vmatprep.subr.mxu0 0.0
        %v1110 = vand.u32 %v167, 4294901760
        %1111 = vmatpush1.msra.mxu0 %v1110
        %1112 = vmatprep.subr.mxu0 0.0
        %1113 = vmatpush2.msra.mxu0 0.0
        %1114 = vmatprep.subr.mxu0 0.0
        %1115 = vmatpush2.msra.mxu0 0.0
        %1116 = vmatprep.subr.mxu0 0.0
        %1117 = vmatpush2.msra.mxu0 0.0
        %1118 = vmatprep.subr.mxu0 0.0
        %1119 = vmatpush2.msra.mxu0 0.0
        %1120 = vmatprep.subr.mxu0 0.0
        %1121 = vmatpush2.msra.mxu0 0.0
        %1122 = vmatprep.subr.mxu0 0.0
        %1123 = vmatpush2.msra.mxu0 0.0
        %1124 = vmatprep.subr.mxu0 0.0
        %1125 = vmatpush2.msra.mxu0 0.0
        %1126 = vmatprep.subr.mxu0 0.0
        %1127 = vmatpush2.msra.mxu0 0.0
        %1128 = vmatprep.subr.mxu0 0.0
        %1129 = vmatpush2.msra.mxu0 0.0
        %1130 = vmatprep.subr.mxu0 0.0
        %1131 = vmatpush2.msra.mxu0 0.0
        %1132 = vmatprep.subr.mxu0 0.0
        %1133 = vmatpush2.msra.mxu0 0.0
        %1134 = vmatprep.subr.mxu0 0.0
        %1135 = vmatpush2.msra.mxu0 0.0
        %1136 = vmatprep.subr.mxu0 0.0
        %1137 = vmatpush2.msra.mxu0 0.0
        %1138 = vmatprep.subr.mxu0 0.0
        %1139 = vmatpush2.msra.mxu0 0.0
        %1140 = vmatprep.subr.mxu0 0.0
        %1141 = vmatpush2.msra.mxu0 0.0
        %1142 = vmatprep.subr.mxu0 0.0
        %1143 = vmatpush2.msra.mxu0 0.0
        %1144 = vmatprep.mubr.f32.mxu0 0.0
        %v1145 = vand.u32 %v1077, 4294901760
        %v1146 = vsub.f32 %v1077, %v1145
        %v1147 = vand.u32 %v1146, 4294901760
        %v1148 = vsub.f32 %v1146, %v1147
        %v1149 = vand.u32 %v1148, 4294901760
        %1150 = vmatmul.mubr.f32.gmra.mxu0 %v1149
        %v1151 = vpop.f32.mrf.mxu0
        %v1152 = vadd.f32 0.0, %v1151
        %v1153 = vpop.f32.mrf.mxu0
        %1154 = vdwg.mxu0
        %1155 = vmatprep.subr.mxu0 0.0
        %1156 = vmatpush1.msra.mxu0 0.0
        %1157 = vmatprep.subr.mxu0 0.0
        %1158 = vmatpush1.msra.mxu0 0.0
        %1159 = vmatprep.subr.mxu0 0.0
        %1160 = vmatpush1.msra.mxu0 0.0
        %1161 = vmatprep.subr.mxu0 0.0
        %1162 = vmatpush1.msra.mxu0 0.0
        %1163 = vmatprep.subr.mxu0 0.0
        %1164 = vmatpush1.msra.mxu0 0.0
        %1165 = vmatprep.subr.mxu0 0.0
        %1166 = vmatpush1.msra.mxu0 0.0
        %1167 = vmatprep.subr.mxu0 0.0
        %1168 = vmatpush1.msra.mxu0 0.0
        %1169 = vmatprep.subr.mxu0 0.0
        %1170 = vmatpush1.msra.mxu0 0.0
        %1171 = vmatprep.subr.mxu0 0.0
        %1172 = vmatpush1.msra.mxu0 0.0
        %1173 = vmatprep.subr.mxu0 0.0
        %1174 = vmatpush1.msra.mxu0 0.0
        %1175 = vmatprep.subr.mxu0 0.0
        %1176 = vmatpush1.msra.mxu0 0.0
        %1177 = vmatprep.subr.mxu0 0.0
        %1178 = vmatpush1.msra.mxu0 0.0
        %1179 = vmatprep.subr.mxu0 0.0
        %1180 = vmatpush1.msra.mxu0 0.0
        %1181 = vmatprep.subr.mxu0 0.0
        %1182 = vmatpush1.msra.mxu0 0.0
        %1183 = vmatprep.subr.mxu0 0.0
        %1184 = vmatpush1.msra.mxu0 0.0
        %1185 = vmatprep.subr.mxu0 0.0
        %v1186 = vand.u32 %v167, 4294901760
        %v1187 = vsub.f32 %v167, %v1186
        %v1188 = vand.u32 %v1187, 4294901760
        %v1189 = vsub.f32 %v1187, %v1188
        %v1190 = vand.u32 %v1189, 4294901760
        %1191 = vmatpush1.msra.mxu0 %v1190
        %1192 = vmatprep.subr.mxu0 0.0
        %1193 = vmatpush2.msra.mxu0 0.0
        %1194 = vmatprep.subr.mxu0 0.0
        %1195 = vmatpush2.msra.mxu0 0.0
        %1196 = vmatprep.subr.mxu0 0.0
        %1197 = vmatpush2.msra.mxu0 0.0
        %1198 = vmatprep.subr.mxu0 0.0
        %1199 = vmatpush2.msra.mxu0 0.0
        %1200 = vmatprep.subr.mxu0 0.0
        %1201 = vmatpush2.msra.mxu0 0.0
        %1202 = vmatprep.subr.mxu0 0.0
        %1203 = vmatpush2.msra.mxu0 0.0
        %1204 = vmatprep.subr.mxu0 0.0
        %1205 = vmatpush2.msra.mxu0 0.0
        %1206 = vmatprep.subr.mxu0 0.0
        %1207 = vmatpush2.msra.mxu0 0.0
        %1208 = vmatprep.subr.mxu0 0.0
        %1209 = vmatpush2.msra.mxu0 0.0
        %1210 = vmatprep.subr.mxu0 0.0
        %1211 = vmatpush2.msra.mxu0 0.0
        %1212 = vmatprep.subr.mxu0 0.0
        %1213 = vmatpush2.msra.mxu0 0.0
        %1214 = vmatprep.subr.mxu0 0.0
        %1215 = vmatpush2.msra.mxu0 0.0
        %1216 = vmatprep.subr.mxu0 0.0
        %1217 = vmatpush2.msra.mxu0 0.0
        %1218 = vmatprep.subr.mxu0 0.0
        %1219 = vmatpush2.msra.mxu0 0.0
        %1220 = vmatprep.subr.mxu0 0.0
        %1221 = vmatpush2.msra.mxu0 0.0
        %1222 = vmatprep.subr.mxu0 0.0
        %1223 = vmatpush2.msra.mxu0 0.0
        %1224 = vmatprep.mubr.f32.mxu0 0.0
        %v1225 = vand.u32 %v1077, 4294901760
        %1226 = vmatmul.mubr.f32.gmra.mxu0 %v1225
        %v1227 = vpop.f32.mrf.mxu0
        %v1228 = vadd.f32 %v1152, %v1227
        %v1229 = vpop.f32.mrf.mxu0
        %1230 = vdwg.mxu0
        %1231 = vmatprep.subr.mxu0 0.0
        %1232 = vmatpush1.msra.mxu0 0.0
        %1233 = vmatprep.subr.mxu0 0.0
        %1234 = vmatpush1.msra.mxu0 0.0
        %1235 = vmatprep.subr.mxu0 0.0
        %1236 = vmatpush1.msra.mxu0 0.0
        %1237 = vmatprep.subr.mxu0 0.0
        %1238 = vmatpush1.msra.mxu0 0.0
        %1239 = vmatprep.subr.mxu0 0.0
        %1240 = vmatpush1.msra.mxu0 0.0
        %1241 = vmatprep.subr.mxu0 0.0
        %1242 = vmatpush1.msra.mxu0 0.0
        %1243 = vmatprep.subr.mxu0 0.0
        %1244 = vmatpush1.msra.mxu0 0.0
        %1245 = vmatprep.subr.mxu0 0.0
        %1246 = vmatpush1.msra.mxu0 0.0
        %1247 = vmatprep.subr.mxu0 0.0
        %1248 = vmatpush1.msra.mxu0 0.0
        %1249 = vmatprep.subr.mxu0 0.0
        %1250 = vmatpush1.msra.mxu0 0.0
        %1251 = vmatprep.subr.mxu0 0.0
        %1252 = vmatpush1.msra.mxu0 0.0
        %1253 = vmatprep.subr.mxu0 0.0
        %1254 = vmatpush1.msra.mxu0 0.0
        %1255 = vmatprep.subr.mxu0 0.0
        %1256 = vmatpush1.msra.mxu0 0.0
        %1257 = vmatprep.subr.mxu0 0.0
        %1258 = vmatpush1.msra.mxu0 0.0
        %1259 = vmatprep.subr.mxu0 0.0
        %1260 = vmatpush1.msra.mxu0 0.0
        %1261 = vmatprep.subr.mxu0 0.0
        %v1262 = vand.u32 %v167, 4294901760
        %v1263 = vsub.f32 %v167, %v1262
        %1264 = vmatpush1.msra.mxu0 %v1263
        %1265 = vmatprep.subr.mxu0 0.0
        %1266 = vmatpush2.msra.mxu0 0.0
        %1267 = vmatprep.subr.mxu0 0.0
        %1268 = vmatpush2.msra.mxu0 0.0
        %1269 = vmatprep.subr.mxu0 0.0
        %1270 = vmatpush2.msra.mxu0 0.0
        %1271 = vmatprep.subr.mxu0 0.0
        %1272 = vmatpush2.msra.mxu0 0.0
        %1273 = vmatprep.subr.mxu0 0.0
        %1274 = vmatpush2.msra.mxu0 0.0
        %1275 = vmatprep.subr.mxu0 0.0
        %1276 = vmatpush2.msra.mxu0 0.0
        %1277 = vmatprep.subr.mxu0 0.0
        %1278 = vmatpush2.msra.mxu0 0.0
        %1279 = vmatprep.subr.mxu0 0.0
        %1280 = vmatpush2.msra.mxu0 0.0
        %1281 = vmatprep.subr.mxu0 0.0
        %1282 = vmatpush2.msra.mxu0 0.0
        %1283 = vmatprep.subr.mxu0 0.0
        %1284 = vmatpush2.msra.mxu0 0.0
        %1285 = vmatprep.subr.mxu0 0.0
        %1286 = vmatpush2.msra.mxu0 0.0
        %1287 = vmatprep.subr.mxu0 0.0
        %1288 = vmatpush2.msra.mxu0 0.0
        %1289 = vmatprep.subr.mxu0 0.0
        %1290 = vmatpush2.msra.mxu0 0.0
        %1291 = vmatprep.subr.mxu0 0.0
        %1292 = vmatpush2.msra.mxu0 0.0
        %1293 = vmatprep.subr.mxu0 0.0
        %1294 = vmatpush2.msra.mxu0 0.0
        %1295 = vmatprep.subr.mxu0 0.0
        %1296 = vmatpush2.msra.mxu0 0.0
        %1297 = vmatprep.mubr.f32.mxu0 0.0
        %v1298 = vand.u32 %v1077, 4294901760
        %v1299 = vsub.f32 %v1077, %v1298
        %1300 = vmatmul.mubr.f32.gmra.mxu0 %v1299
        %v1301 = vpop.f32.mrf.mxu0
        %v1302 = vadd.f32 %v1228, %v1301
        %v1303 = vpop.f32.mrf.mxu0
        %1304 = vdwg.mxu0
        %1305 = vmatprep.subr.mxu0 0.0
        %1306 = vmatpush1.msra.mxu0 0.0
        %1307 = vmatprep.subr.mxu0 0.0
        %1308 = vmatpush1.msra.mxu0 0.0
        %1309 = vmatprep.subr.mxu0 0.0
        %1310 = vmatpush1.msra.mxu0 0.0
        %1311 = vmatprep.subr.mxu0 0.0
        %1312 = vmatpush1.msra.mxu0 0.0
        %1313 = vmatprep.subr.mxu0 0.0
        %1314 = vmatpush1.msra.mxu0 0.0
        %1315 = vmatprep.subr.mxu0 0.0
        %1316 = vmatpush1.msra.mxu0 0.0
        %1317 = vmatprep.subr.mxu0 0.0
        %1318 = vmatpush1.msra.mxu0 0.0
        %1319 = vmatprep.subr.mxu0 0.0
        %1320 = vmatpush1.msra.mxu0 0.0
        %1321 = vmatprep.subr.mxu0 0.0
        %1322 = vmatpush1.msra.mxu0 0.0
        %1323 = vmatprep.subr.mxu0 0.0
        %1324 = vmatpush1.msra.mxu0 0.0
        %1325 = vmatprep.subr.mxu0 0.0
        %1326 = vmatpush1.msra.mxu0 0.0
        %1327 = vmatprep.subr.mxu0 0.0
        %1328 = vmatpush1.msra.mxu0 0.0
        %1329 = vmatprep.subr.mxu0 0.0
        %1330 = vmatpush1.msra.mxu0 0.0
        %1331 = vmatprep.subr.mxu0 0.0
        %1332 = vmatpush1.msra.mxu0 0.0
        %1333 = vmatprep.subr.mxu0 0.0
        %1334 = vmatpush1.msra.mxu0 0.0
        %1335 = vmatprep.subr.mxu0 0.0
        %v1336 = vand.u32 %v167, 4294901760
        %1337 = vmatpush1.msra.mxu0 %v1336
        %1338 = vmatprep.subr.mxu0 0.0
        %1339 = vmatpush2.msra.mxu0 0.0
        %1340 = vmatprep.subr.mxu0 0.0
        %1341 = vmatpush2.msra.mxu0 0.0
        %1342 = vmatprep.subr.mxu0 0.0
        %1343 = vmatpush2.msra.mxu0 0.0
        %1344 = vmatprep.subr.mxu0 0.0
        %1345 = vmatpush2.msra.mxu0 0.0
        %1346 = vmatprep.subr.mxu0 0.0
        %1347 = vmatpush2.msra.mxu0 0.0
        %1348 = vmatprep.subr.mxu0 0.0
        %1349 = vmatpush2.msra.mxu0 0.0
        %1350 = vmatprep.subr.mxu0 0.0
        %1351 = vmatpush2.msra.mxu0 0.0
        %1352 = vmatprep.subr.mxu0 0.0
        %1353 = vmatpush2.msra.mxu0 0.0
        %1354 = vmatprep.subr.mxu0 0.0
        %1355 = vmatpush2.msra.mxu0 0.0
        %1356 = vmatprep.subr.mxu0 0.0
        %1357 = vmatpush2.msra.mxu0 0.0
        %1358 = vmatprep.subr.mxu0 0.0
        %1359 = vmatpush2.msra.mxu0 0.0
        %1360 = vmatprep.subr.mxu0 0.0
        %1361 = vmatpush2.msra.mxu0 0.0
        %1362 = vmatprep.subr.mxu0 0.0
        %1363 = vmatpush2.msra.mxu0 0.0
        %1364 = vmatprep.subr.mxu0 0.0
        %1365 = vmatpush2.msra.mxu0 0.0
        %1366 = vmatprep.subr.mxu0 0.0
        %1367 = vmatpush2.msra.mxu0 0.0
        %1368 = vmatprep.subr.mxu0 0.0
        %1369 = vmatpush2.msra.mxu0 0.0
        %1370 = vmatprep.mubr.f32.mxu0 0.0
        %v1371 = vand.u32 %v1077, 4294901760
        %v1372 = vsub.f32 %v1077, %v1371
        %v1373 = vand.u32 %v1372, 4294901760
        %1374 = vmatmul.mubr.f32.gmra.mxu0 %v1373
        %v1375 = vpop.f32.mrf.mxu0
        %v1376 = vadd.f32 %v1302, %v1375
        %v1377 = vpop.f32.mrf.mxu0
        %1378 = vdwg.mxu0
        %1379 = vmatprep.subr.mxu0 0.0
        %1380 = vmatpush1.msra.mxu0 0.0
        %1381 = vmatprep.subr.mxu0 0.0
        %1382 = vmatpush1.msra.mxu0 0.0
        %1383 = vmatprep.subr.mxu0 0.0
        %1384 = vmatpush1.msra.mxu0 0.0
        %1385 = vmatprep.subr.mxu0 0.0
        %1386 = vmatpush1.msra.mxu0 0.0
        %1387 = vmatprep.subr.mxu0 0.0
        %1388 = vmatpush1.msra.mxu0 0.0
        %1389 = vmatprep.subr.mxu0 0.0
        %1390 = vmatpush1.msra.mxu0 0.0
        %1391 = vmatprep.subr.mxu0 0.0
        %1392 = vmatpush1.msra.mxu0 0.0
        %1393 = vmatprep.subr.mxu0 0.0
        %1394 = vmatpush1.msra.mxu0 0.0
        %1395 = vmatprep.subr.mxu0 0.0
        %1396 = vmatpush1.msra.mxu0 0.0
        %1397 = vmatprep.subr.mxu0 0.0
        %1398 = vmatpush1.msra.mxu0 0.0
        %1399 = vmatprep.subr.mxu0 0.0
        %1400 = vmatpush1.msra.mxu0 0.0
        %1401 = vmatprep.subr.mxu0 0.0
        %1402 = vmatpush1.msra.mxu0 0.0
        %1403 = vmatprep.subr.mxu0 0.0
        %1404 = vmatpush1.msra.mxu0 0.0
        %1405 = vmatprep.subr.mxu0 0.0
        %1406 = vmatpush1.msra.mxu0 0.0
        %1407 = vmatprep.subr.mxu0 0.0
        %1408 = vmatpush1.msra.mxu0 0.0
        %1409 = vmatprep.subr.mxu0 0.0
        %v1410 = vand.u32 %v167, 4294901760
        %v1411 = vsub.f32 %v167, %v1410
        %v1412 = vand.u32 %v1411, 4294901760
        %1413 = vmatpush1.msra.mxu0 %v1412
        %1414 = vmatprep.subr.mxu0 0.0
        %1415 = vmatpush2.msra.mxu0 0.0
        %1416 = vmatprep.subr.mxu0 0.0
        %1417 = vmatpush2.msra.mxu0 0.0
        %1418 = vmatprep.subr.mxu0 0.0
        %1419 = vmatpush2.msra.mxu0 0.0
        %1420 = vmatprep.subr.mxu0 0.0
        %1421 = vmatpush2.msra.mxu0 0.0
        %1422 = vmatprep.subr.mxu0 0.0
        %1423 = vmatpush2.msra.mxu0 0.0
        %1424 = vmatprep.subr.mxu0 0.0
        %1425 = vmatpush2.msra.mxu0 0.0
        %1426 = vmatprep.subr.mxu0 0.0
        %1427 = vmatpush2.msra.mxu0 0.0
        %1428 = vmatprep.subr.mxu0 0.0
        %1429 = vmatpush2.msra.mxu0 0.0
        %1430 = vmatprep.subr.mxu0 0.0
        %1431 = vmatpush2.msra.mxu0 0.0
        %1432 = vmatprep.subr.mxu0 0.0
        %1433 = vmatpush2.msra.mxu0 0.0
        %1434 = vmatprep.subr.mxu0 0.0
        %1435 = vmatpush2.msra.mxu0 0.0
        %1436 = vmatprep.subr.mxu0 0.0
        %1437 = vmatpush2.msra.mxu0 0.0
        %1438 = vmatprep.subr.mxu0 0.0
        %1439 = vmatpush2.msra.mxu0 0.0
        %1440 = vmatprep.subr.mxu0 0.0
        %1441 = vmatpush2.msra.mxu0 0.0
        %1442 = vmatprep.subr.mxu0 0.0
        %1443 = vmatpush2.msra.mxu0 0.0
        %1444 = vmatprep.subr.mxu0 0.0
        %1445 = vmatpush2.msra.mxu0 0.0
        %1446 = vmatprep.mubr.f32.mxu0 0.0
        %v1447 = vand.u32 %v1077, 4294901760
        %1448 = vmatmul.mubr.f32.gmra.mxu0 %v1447
        %v1449 = vpop.f32.mrf.mxu0
        %v1450 = vadd.f32 %v1376, %v1449
        %v1451 = vpop.f32.mrf.mxu0
        %1452 = vdwg.mxu0
        %1453 = vmatprep.subr.mxu0 0.0
        %1454 = vmatpush1.msra.mxu0 0.0
        %1455 = vmatprep.subr.mxu0 0.0
        %1456 = vmatpush1.msra.mxu0 0.0
        %1457 = vmatprep.subr.mxu0 0.0
        %1458 = vmatpush1.msra.mxu0 0.0
        %1459 = vmatprep.subr.mxu0 0.0
        %1460 = vmatpush1.msra.mxu0 0.0
        %1461 = vmatprep.subr.mxu0 0.0
        %1462 = vmatpush1.msra.mxu0 0.0
        %1463 = vmatprep.subr.mxu0 0.0
        %1464 = vmatpush1.msra.mxu0 0.0
        %1465 = vmatprep.subr.mxu0 0.0
        %1466 = vmatpush1.msra.mxu0 0.0
        %1467 = vmatprep.subr.mxu0 0.0
        %1468 = vmatpush1.msra.mxu0 0.0
        %1469 = vmatprep.subr.mxu0 0.0
        %1470 = vmatpush1.msra.mxu0 0.0
        %1471 = vmatprep.subr.mxu0 0.0
        %1472 = vmatpush1.msra.mxu0 0.0
        %1473 = vmatprep.subr.mxu0 0.0
        %1474 = vmatpush1.msra.mxu0 0.0
        %1475 = vmatprep.subr.mxu0 0.0
        %1476 = vmatpush1.msra.mxu0 0.0
        %1477 = vmatprep.subr.mxu0 0.0
        %1478 = vmatpush1.msra.mxu0 0.0
        %1479 = vmatprep.subr.mxu0 0.0
        %1480 = vmatpush1.msra.mxu0 0.0
        %1481 = vmatprep.subr.mxu0 0.0
        %1482 = vmatpush1.msra.mxu0 0.0
        %1483 = vmatprep.subr.mxu0 0.0
        %v1484 = vand.u32 %v167, 4294901760
        %1485 = vmatpush1.msra.mxu0 %v1484
        %1486 = vmatprep.subr.mxu0 0.0
        %1487 = vmatpush2.msra.mxu0 0.0
        %1488 = vmatprep.subr.mxu0 0.0
        %1489 = vmatpush2.msra.mxu0 0.0
        %1490 = vmatprep.subr.mxu0 0.0
        %1491 = vmatpush2.msra.mxu0 0.0
        %1492 = vmatprep.subr.mxu0 0.0
        %1493 = vmatpush2.msra.mxu0 0.0
        %1494 = vmatprep.subr.mxu0 0.0
        %1495 = vmatpush2.msra.mxu0 0.0
        %1496 = vmatprep.subr.mxu0 0.0
        %1497 = vmatpush2.msra.mxu0 0.0
        %1498 = vmatprep.subr.mxu0 0.0
        %1499 = vmatpush2.msra.mxu0 0.0
        %1500 = vmatprep.subr.mxu0 0.0
        %1501 = vmatpush2.msra.mxu0 0.0
        %1502 = vmatprep.subr.mxu0 0.0
        %1503 = vmatpush2.msra.mxu0 0.0
        %1504 = vmatprep.subr.mxu0 0.0
        %1505 = vmatpush2.msra.mxu0 0.0
        %1506 = vmatprep.subr.mxu0 0.0
        %1507 = vmatpush2.msra.mxu0 0.0
        %1508 = vmatprep.subr.mxu0 0.0
        %1509 = vmatpush2.msra.mxu0 0.0
        %1510 = vmatprep.subr.mxu0 0.0
        %1511 = vmatpush2.msra.mxu0 0.0
        %1512 = vmatprep.subr.mxu0 0.0
        %1513 = vmatpush2.msra.mxu0 0.0
        %1514 = vmatprep.subr.mxu0 0.0
        %1515 = vmatpush2.msra.mxu0 0.0
        %1516 = vmatprep.subr.mxu0 0.0
        %1517 = vmatpush2.msra.mxu0 0.0
        %1518 = vmatprep.mubr.f32.mxu0 0.0
        %v1519 = vand.u32 %v1077, 4294901760
        %1520 = vmatmul.mubr.f32.gmra.mxu0 %v1519
        %v1521 = vpop.f32.mrf.mxu0
        %v1522 = vadd.f32 %v1450, %v1521
        %v1523 = vpop.f32.mrf.mxu0
        %1524 = vdwg.mxu0
        %v1525 = vadd.f32 %v1071, %v1522
        %s1526 = scalar_lea.vmem %s133, 24 [#allocation2]
        %v1527 = vld [vmem:[%s1526] sm:$0xff]
        %v1529 = vsel %vm175, %v1527, 0
        %1531 = vmatprep.subr.mxu0 0.0
        %1532 = vmatpush1.msra.mxu0 0.0
        %1533 = vmatprep.subr.mxu0 0.0
        %1534 = vmatpush1.msra.mxu0 0.0
        %1535 = vmatprep.subr.mxu0 0.0
        %1536 = vmatpush1.msra.mxu0 0.0
        %1537 = vmatprep.subr.mxu0 0.0
        %1538 = vmatpush1.msra.mxu0 0.0
        %1539 = vmatprep.subr.mxu0 0.0
        %1540 = vmatpush1.msra.mxu0 0.0
        %1541 = vmatprep.subr.mxu0 0.0
        %1542 = vmatpush1.msra.mxu0 0.0
        %1543 = vmatprep.subr.mxu0 0.0
        %1544 = vmatpush1.msra.mxu0 0.0
        %1545 = vmatprep.subr.mxu0 0.0
        %1546 = vmatpush1.msra.mxu0 0.0
        %1547 = vmatprep.subr.mxu0 0.0
        %1548 = vmatpush1.msra.mxu0 0.0
        %1549 = vmatprep.subr.mxu0 0.0
        %1550 = vmatpush1.msra.mxu0 0.0
        %1551 = vmatprep.subr.mxu0 0.0
        %1552 = vmatpush1.msra.mxu0 0.0
        %1553 = vmatprep.subr.mxu0 0.0
        %1554 = vmatpush1.msra.mxu0 0.0
        %1555 = vmatprep.subr.mxu0 0.0
        %1556 = vmatpush1.msra.mxu0 0.0
        %1557 = vmatprep.subr.mxu0 0.0
        %1558 = vmatpush1.msra.mxu0 0.0
        %1559 = vmatprep.subr.mxu0 0.0
        %1560 = vmatpush1.msra.mxu0 0.0
        %1561 = vmatprep.subr.mxu0 0.0
        %v1562 = vand.u32 %v171, 4294901760
        %1563 = vmatpush1.msra.mxu0 %v1562
        %1564 = vmatprep.subr.mxu0 0.0
        %1565 = vmatpush2.msra.mxu0 0.0
        %1566 = vmatprep.subr.mxu0 0.0
        %1567 = vmatpush2.msra.mxu0 0.0
        %1568 = vmatprep.subr.mxu0 0.0
        %1569 = vmatpush2.msra.mxu0 0.0
        %1570 = vmatprep.subr.mxu0 0.0
        %1571 = vmatpush2.msra.mxu0 0.0
        %1572 = vmatprep.subr.mxu0 0.0
        %1573 = vmatpush2.msra.mxu0 0.0
        %1574 = vmatprep.subr.mxu0 0.0
        %1575 = vmatpush2.msra.mxu0 0.0
        %1576 = vmatprep.subr.mxu0 0.0
        %1577 = vmatpush2.msra.mxu0 0.0
        %1578 = vmatprep.subr.mxu0 0.0
        %1579 = vmatpush2.msra.mxu0 0.0
        %1580 = vmatprep.subr.mxu0 0.0
        %1581 = vmatpush2.msra.mxu0 0.0
        %1582 = vmatprep.subr.mxu0 0.0
        %1583 = vmatpush2.msra.mxu0 0.0
        %1584 = vmatprep.subr.mxu0 0.0
        %1585 = vmatpush2.msra.mxu0 0.0
        %1586 = vmatprep.subr.mxu0 0.0
        %1587 = vmatpush2.msra.mxu0 0.0
        %1588 = vmatprep.subr.mxu0 0.0
        %1589 = vmatpush2.msra.mxu0 0.0
        %1590 = vmatprep.subr.mxu0 0.0
        %1591 = vmatpush2.msra.mxu0 0.0
        %1592 = vmatprep.subr.mxu0 0.0
        %1593 = vmatpush2.msra.mxu0 0.0
        %1594 = vmatprep.subr.mxu0 0.0
        %1595 = vmatpush2.msra.mxu0 0.0
        %1596 = vmatprep.mubr.f32.mxu0 0.0
        %v1597 = vand.u32 %v1529, 4294901760
        %v1598 = vsub.f32 %v1529, %v1597
        %v1599 = vand.u32 %v1598, 4294901760
        %v1600 = vsub.f32 %v1598, %v1599
        %v1601 = vand.u32 %v1600, 4294901760
        %1602 = vmatmul.mubr.f32.gmra.mxu0 %v1601
        %v1603 = vpop.f32.mrf.mxu0
        %v1604 = vadd.f32 0.0, %v1603
        %v1605 = vpop.f32.mrf.mxu0
        %1606 = vdwg.mxu0
        %1607 = vmatprep.subr.mxu0 0.0
        %1608 = vmatpush1.msra.mxu0 0.0
        %1609 = vmatprep.subr.mxu0 0.0
        %1610 = vmatpush1.msra.mxu0 0.0
        %1611 = vmatprep.subr.mxu0 0.0
        %1612 = vmatpush1.msra.mxu0 0.0
        %1613 = vmatprep.subr.mxu0 0.0
        %1614 = vmatpush1.msra.mxu0 0.0
        %1615 = vmatprep.subr.mxu0 0.0
        %1616 = vmatpush1.msra.mxu0 0.0
        %1617 = vmatprep.subr.mxu0 0.0
        %1618 = vmatpush1.msra.mxu0 0.0
        %1619 = vmatprep.subr.mxu0 0.0
        %1620 = vmatpush1.msra.mxu0 0.0
        %1621 = vmatprep.subr.mxu0 0.0
        %1622 = vmatpush1.msra.mxu0 0.0
        %1623 = vmatprep.subr.mxu0 0.0
        %1624 = vmatpush1.msra.mxu0 0.0
        %1625 = vmatprep.subr.mxu0 0.0
        %1626 = vmatpush1.msra.mxu0 0.0
        %1627 = vmatprep.subr.mxu0 0.0
        %1628 = vmatpush1.msra.mxu0 0.0
        %1629 = vmatprep.subr.mxu0 0.0
        %1630 = vmatpush1.msra.mxu0 0.0
        %1631 = vmatprep.subr.mxu0 0.0
        %1632 = vmatpush1.msra.mxu0 0.0
        %1633 = vmatprep.subr.mxu0 0.0
        %1634 = vmatpush1.msra.mxu0 0.0
        %1635 = vmatprep.subr.mxu0 0.0
        %1636 = vmatpush1.msra.mxu0 0.0
        %1637 = vmatprep.subr.mxu0 0.0
        %v1638 = vand.u32 %v171, 4294901760
        %v1639 = vsub.f32 %v171, %v1638
        %v1640 = vand.u32 %v1639, 4294901760
        %v1641 = vsub.f32 %v1639, %v1640
        %v1642 = vand.u32 %v1641, 4294901760
        %1643 = vmatpush1.msra.mxu0 %v1642
        %1644 = vmatprep.subr.mxu0 0.0
        %1645 = vmatpush2.msra.mxu0 0.0
        %1646 = vmatprep.subr.mxu0 0.0
        %1647 = vmatpush2.msra.mxu0 0.0
        %1648 = vmatprep.subr.mxu0 0.0
        %1649 = vmatpush2.msra.mxu0 0.0
        %1650 = vmatprep.subr.mxu0 0.0
        %1651 = vmatpush2.msra.mxu0 0.0
        %1652 = vmatprep.subr.mxu0 0.0
        %1653 = vmatpush2.msra.mxu0 0.0
        %1654 = vmatprep.subr.mxu0 0.0
        %1655 = vmatpush2.msra.mxu0 0.0
        %1656 = vmatprep.subr.mxu0 0.0
        %1657 = vmatpush2.msra.mxu0 0.0
        %1658 = vmatprep.subr.mxu0 0.0
        %1659 = vmatpush2.msra.mxu0 0.0
        %1660 = vmatprep.subr.mxu0 0.0
        %1661 = vmatpush2.msra.mxu0 0.0
        %1662 = vmatprep.subr.mxu0 0.0
        %1663 = vmatpush2.msra.mxu0 0.0
        %1664 = vmatprep.subr.mxu0 0.0
        %1665 = vmatpush2.msra.mxu0 0.0
        %1666 = vmatprep.subr.mxu0 0.0
        %1667 = vmatpush2.msra.mxu0 0.0
        %1668 = vmatprep.subr.mxu0 0.0
        %1669 = vmatpush2.msra.mxu0 0.0
        %1670 = vmatprep.subr.mxu0 0.0
        %1671 = vmatpush2.msra.mxu0 0.0
        %1672 = vmatprep.subr.mxu0 0.0
        %1673 = vmatpush2.msra.mxu0 0.0
        %1674 = vmatprep.subr.mxu0 0.0
        %1675 = vmatpush2.msra.mxu0 0.0
        %1676 = vmatprep.mubr.f32.mxu0 0.0
        %v1677 = vand.u32 %v1529, 4294901760
        %1678 = vmatmul.mubr.f32.gmra.mxu0 %v1677
        %v1679 = vpop.f32.mrf.mxu0
        %v1680 = vadd.f32 %v1604, %v1679
        %v1681 = vpop.f32.mrf.mxu0
        %1682 = vdwg.mxu0
        %1683 = vmatprep.subr.mxu0 0.0
        %1684 = vmatpush1.msra.mxu0 0.0
        %1685 = vmatprep.subr.mxu0 0.0
        %1686 = vmatpush1.msra.mxu0 0.0
        %1687 = vmatprep.subr.mxu0 0.0
        %1688 = vmatpush1.msra.mxu0 0.0
        %1689 = vmatprep.subr.mxu0 0.0
        %1690 = vmatpush1.msra.mxu0 0.0
        %1691 = vmatprep.subr.mxu0 0.0
        %1692 = vmatpush1.msra.mxu0 0.0
        %1693 = vmatprep.subr.mxu0 0.0
        %1694 = vmatpush1.msra.mxu0 0.0
        %1695 = vmatprep.subr.mxu0 0.0
        %1696 = vmatpush1.msra.mxu0 0.0
        %1697 = vmatprep.subr.mxu0 0.0
        %1698 = vmatpush1.msra.mxu0 0.0
        %1699 = vmatprep.subr.mxu0 0.0
        %1700 = vmatpush1.msra.mxu0 0.0
        %1701 = vmatprep.subr.mxu0 0.0
        %1702 = vmatpush1.msra.mxu0 0.0
        %1703 = vmatprep.subr.mxu0 0.0
        %1704 = vmatpush1.msra.mxu0 0.0
        %1705 = vmatprep.subr.mxu0 0.0
        %1706 = vmatpush1.msra.mxu0 0.0
        %1707 = vmatprep.subr.mxu0 0.0
        %1708 = vmatpush1.msra.mxu0 0.0
        %1709 = vmatprep.subr.mxu0 0.0
        %1710 = vmatpush1.msra.mxu0 0.0
        %1711 = vmatprep.subr.mxu0 0.0
        %1712 = vmatpush1.msra.mxu0 0.0
        %1713 = vmatprep.subr.mxu0 0.0
        %v1714 = vand.u32 %v171, 4294901760
        %v1715 = vsub.f32 %v171, %v1714
        %1716 = vmatpush1.msra.mxu0 %v1715
        %1717 = vmatprep.subr.mxu0 0.0
        %1718 = vmatpush2.msra.mxu0 0.0
        %1719 = vmatprep.subr.mxu0 0.0
        %1720 = vmatpush2.msra.mxu0 0.0
        %1721 = vmatprep.subr.mxu0 0.0
        %1722 = vmatpush2.msra.mxu0 0.0
        %1723 = vmatprep.subr.mxu0 0.0
        %1724 = vmatpush2.msra.mxu0 0.0
        %1725 = vmatprep.subr.mxu0 0.0
        %1726 = vmatpush2.msra.mxu0 0.0
        %1727 = vmatprep.subr.mxu0 0.0
        %1728 = vmatpush2.msra.mxu0 0.0
        %1729 = vmatprep.subr.mxu0 0.0
        %1730 = vmatpush2.msra.mxu0 0.0
        %1731 = vmatprep.subr.mxu0 0.0
        %1732 = vmatpush2.msra.mxu0 0.0
        %1733 = vmatprep.subr.mxu0 0.0
        %1734 = vmatpush2.msra.mxu0 0.0
        %1735 = vmatprep.subr.mxu0 0.0
        %1736 = vmatpush2.msra.mxu0 0.0
        %1737 = vmatprep.subr.mxu0 0.0
        %1738 = vmatpush2.msra.mxu0 0.0
        %1739 = vmatprep.subr.mxu0 0.0
        %1740 = vmatpush2.msra.mxu0 0.0
        %1741 = vmatprep.subr.mxu0 0.0
        %1742 = vmatpush2.msra.mxu0 0.0
        %1743 = vmatprep.subr.mxu0 0.0
        %1744 = vmatpush2.msra.mxu0 0.0
        %1745 = vmatprep.subr.mxu0 0.0
        %1746 = vmatpush2.msra.mxu0 0.0
        %1747 = vmatprep.subr.mxu0 0.0
        %1748 = vmatpush2.msra.mxu0 0.0
        %1749 = vmatprep.mubr.f32.mxu0 0.0
        %v1750 = vand.u32 %v1529, 4294901760
        %v1751 = vsub.f32 %v1529, %v1750
        %1752 = vmatmul.mubr.f32.gmra.mxu0 %v1751
        %v1753 = vpop.f32.mrf.mxu0
        %v1754 = vadd.f32 %v1680, %v1753
        %v1755 = vpop.f32.mrf.mxu0
        %1756 = vdwg.mxu0
        %1757 = vmatprep.subr.mxu0 0.0
        %1758 = vmatpush1.msra.mxu0 0.0
        %1759 = vmatprep.subr.mxu0 0.0
        %1760 = vmatpush1.msra.mxu0 0.0
        %1761 = vmatprep.subr.mxu0 0.0
        %1762 = vmatpush1.msra.mxu0 0.0
        %1763 = vmatprep.subr.mxu0 0.0
        %1764 = vmatpush1.msra.mxu0 0.0
        %1765 = vmatprep.subr.mxu0 0.0
        %1766 = vmatpush1.msra.mxu0 0.0
        %1767 = vmatprep.subr.mxu0 0.0
        %1768 = vmatpush1.msra.mxu0 0.0
        %1769 = vmatprep.subr.mxu0 0.0
        %1770 = vmatpush1.msra.mxu0 0.0
        %1771 = vmatprep.subr.mxu0 0.0
        %1772 = vmatpush1.msra.mxu0 0.0
        %1773 = vmatprep.subr.mxu0 0.0
        %1774 = vmatpush1.msra.mxu0 0.0
        %1775 = vmatprep.subr.mxu0 0.0
        %1776 = vmatpush1.msra.mxu0 0.0
        %1777 = vmatprep.subr.mxu0 0.0
        %1778 = vmatpush1.msra.mxu0 0.0
        %1779 = vmatprep.subr.mxu0 0.0
        %1780 = vmatpush1.msra.mxu0 0.0
        %1781 = vmatprep.subr.mxu0 0.0
        %1782 = vmatpush1.msra.mxu0 0.0
        %1783 = vmatprep.subr.mxu0 0.0
        %1784 = vmatpush1.msra.mxu0 0.0
        %1785 = vmatprep.subr.mxu0 0.0
        %1786 = vmatpush1.msra.mxu0 0.0
        %1787 = vmatprep.subr.mxu0 0.0
        %v1788 = vand.u32 %v171, 4294901760
        %1789 = vmatpush1.msra.mxu0 %v1788
        %1790 = vmatprep.subr.mxu0 0.0
        %1791 = vmatpush2.msra.mxu0 0.0
        %1792 = vmatprep.subr.mxu0 0.0
        %1793 = vmatpush2.msra.mxu0 0.0
        %1794 = vmatprep.subr.mxu0 0.0
        %1795 = vmatpush2.msra.mxu0 0.0
        %1796 = vmatprep.subr.mxu0 0.0
        %1797 = vmatpush2.msra.mxu0 0.0
        %1798 = vmatprep.subr.mxu0 0.0
        %1799 = vmatpush2.msra.mxu0 0.0
        %1800 = vmatprep.subr.mxu0 0.0
        %1801 = vmatpush2.msra.mxu0 0.0
        %1802 = vmatprep.subr.mxu0 0.0
        %1803 = vmatpush2.msra.mxu0 0.0
        %1804 = vmatprep.subr.mxu0 0.0
        %1805 = vmatpush2.msra.mxu0 0.0
        %1806 = vmatprep.subr.mxu0 0.0
        %1807 = vmatpush2.msra.mxu0 0.0
        %1808 = vmatprep.subr.mxu0 0.0
        %1809 = vmatpush2.msra.mxu0 0.0
        %1810 = vmatprep.subr.mxu0 0.0
        %1811 = vmatpush2.msra.mxu0 0.0
        %1812 = vmatprep.subr.mxu0 0.0
        %1813 = vmatpush2.msra.mxu0 0.0
        %1814 = vmatprep.subr.mxu0 0.0
        %1815 = vmatpush2.msra.mxu0 0.0
        %1816 = vmatprep.subr.mxu0 0.0
        %1817 = vmatpush2.msra.mxu0 0.0
        %1818 = vmatprep.subr.mxu0 0.0
        %1819 = vmatpush2.msra.mxu0 0.0
        %1820 = vmatprep.subr.mxu0 0.0
        %1821 = vmatpush2.msra.mxu0 0.0
        %1822 = vmatprep.mubr.f32.mxu0 0.0
        %v1823 = vand.u32 %v1529, 4294901760
        %v1824 = vsub.f32 %v1529, %v1823
        %v1825 = vand.u32 %v1824, 4294901760
        %1826 = vmatmul.mubr.f32.gmra.mxu0 %v1825
        %v1827 = vpop.f32.mrf.mxu0
        %v1828 = vadd.f32 %v1754, %v1827
        %v1829 = vpop.f32.mrf.mxu0
        %1830 = vdwg.mxu0
        %1831 = vmatprep.subr.mxu0 0.0
        %1832 = vmatpush1.msra.mxu0 0.0
        %1833 = vmatprep.subr.mxu0 0.0
        %1834 = vmatpush1.msra.mxu0 0.0
        %1835 = vmatprep.subr.mxu0 0.0
        %1836 = vmatpush1.msra.mxu0 0.0
        %1837 = vmatprep.subr.mxu0 0.0
        %1838 = vmatpush1.msra.mxu0 0.0
        %1839 = vmatprep.subr.mxu0 0.0
        %1840 = vmatpush1.msra.mxu0 0.0
        %1841 = vmatprep.subr.mxu0 0.0
        %1842 = vmatpush1.msra.mxu0 0.0
        %1843 = vmatprep.subr.mxu0 0.0
        %1844 = vmatpush1.msra.mxu0 0.0
        %1845 = vmatprep.subr.mxu0 0.0
        %1846 = vmatpush1.msra.mxu0 0.0
        %1847 = vmatprep.subr.mxu0 0.0
        %1848 = vmatpush1.msra.mxu0 0.0
        %1849 = vmatprep.subr.mxu0 0.0
        %1850 = vmatpush1.msra.mxu0 0.0
        %1851 = vmatprep.subr.mxu0 0.0
        %1852 = vmatpush1.msra.mxu0 0.0
        %1853 = vmatprep.subr.mxu0 0.0
        %1854 = vmatpush1.msra.mxu0 0.0
        %1855 = vmatprep.subr.mxu0 0.0
        %1856 = vmatpush1.msra.mxu0 0.0
        %1857 = vmatprep.subr.mxu0 0.0
        %1858 = vmatpush1.msra.mxu0 0.0
        %1859 = vmatprep.subr.mxu0 0.0
        %1860 = vmatpush1.msra.mxu0 0.0
        %1861 = vmatprep.subr.mxu0 0.0
        %v1862 = vand.u32 %v171, 4294901760
        %v1863 = vsub.f32 %v171, %v1862
        %v1864 = vand.u32 %v1863, 4294901760
        %1865 = vmatpush1.msra.mxu0 %v1864
        %1866 = vmatprep.subr.mxu0 0.0
        %1867 = vmatpush2.msra.mxu0 0.0
        %1868 = vmatprep.subr.mxu0 0.0
        %1869 = vmatpush2.msra.mxu0 0.0
        %1870 = vmatprep.subr.mxu0 0.0
        %1871 = vmatpush2.msra.mxu0 0.0
        %1872 = vmatprep.subr.mxu0 0.0
        %1873 = vmatpush2.msra.mxu0 0.0
        %1874 = vmatprep.subr.mxu0 0.0
        %1875 = vmatpush2.msra.mxu0 0.0
        %1876 = vmatprep.subr.mxu0 0.0
        %1877 = vmatpush2.msra.mxu0 0.0
        %1878 = vmatprep.subr.mxu0 0.0
        %1879 = vmatpush2.msra.mxu0 0.0
        %1880 = vmatprep.subr.mxu0 0.0
        %1881 = vmatpush2.msra.mxu0 0.0
        %1882 = vmatprep.subr.mxu0 0.0
        %1883 = vmatpush2.msra.mxu0 0.0
        %1884 = vmatprep.subr.mxu0 0.0
        %1885 = vmatpush2.msra.mxu0 0.0
        %1886 = vmatprep.subr.mxu0 0.0
        %1887 = vmatpush2.msra.mxu0 0.0
        %1888 = vmatprep.subr.mxu0 0.0
        %1889 = vmatpush2.msra.mxu0 0.0
        %1890 = vmatprep.subr.mxu0 0.0
        %1891 = vmatpush2.msra.mxu0 0.0
        %1892 = vmatprep.subr.mxu0 0.0
        %1893 = vmatpush2.msra.mxu0 0.0
        %1894 = vmatprep.subr.mxu0 0.0
        %1895 = vmatpush2.msra.mxu0 0.0
        %1896 = vmatprep.subr.mxu0 0.0
        %1897 = vmatpush2.msra.mxu0 0.0
        %1898 = vmatprep.mubr.f32.mxu0 0.0
        %v1899 = vand.u32 %v1529, 4294901760
        %1900 = vmatmul.mubr.f32.gmra.mxu0 %v1899
        %v1901 = vpop.f32.mrf.mxu0
        %v1902 = vadd.f32 %v1828, %v1901
        %v1903 = vpop.f32.mrf.mxu0
        %1904 = vdwg.mxu0
        %1905 = vmatprep.subr.mxu0 0.0
        %1906 = vmatpush1.msra.mxu0 0.0
        %1907 = vmatprep.subr.mxu0 0.0
        %1908 = vmatpush1.msra.mxu0 0.0
        %1909 = vmatprep.subr.mxu0 0.0
        %1910 = vmatpush1.msra.mxu0 0.0
        %1911 = vmatprep.subr.mxu0 0.0
        %1912 = vmatpush1.msra.mxu0 0.0
        %1913 = vmatprep.subr.mxu0 0.0
        %1914 = vmatpush1.msra.mxu0 0.0
        %1915 = vmatprep.subr.mxu0 0.0
        %1916 = vmatpush1.msra.mxu0 0.0
        %1917 = vmatprep.subr.mxu0 0.0
        %1918 = vmatpush1.msra.mxu0 0.0
        %1919 = vmatprep.subr.mxu0 0.0
        %1920 = vmatpush1.msra.mxu0 0.0
        %1921 = vmatprep.subr.mxu0 0.0
        %1922 = vmatpush1.msra.mxu0 0.0
        %1923 = vmatprep.subr.mxu0 0.0
        %1924 = vmatpush1.msra.mxu0 0.0
        %1925 = vmatprep.subr.mxu0 0.0
        %1926 = vmatpush1.msra.mxu0 0.0
        %1927 = vmatprep.subr.mxu0 0.0
        %1928 = vmatpush1.msra.mxu0 0.0
        %1929 = vmatprep.subr.mxu0 0.0
        %1930 = vmatpush1.msra.mxu0 0.0
        %1931 = vmatprep.subr.mxu0 0.0
        %1932 = vmatpush1.msra.mxu0 0.0
        %1933 = vmatprep.subr.mxu0 0.0
        %1934 = vmatpush1.msra.mxu0 0.0
        %1935 = vmatprep.subr.mxu0 0.0
        %v1936 = vand.u32 %v171, 4294901760
        %1937 = vmatpush1.msra.mxu0 %v1936
        %1938 = vmatprep.subr.mxu0 0.0
        %1939 = vmatpush2.msra.mxu0 0.0
        %1940 = vmatprep.subr.mxu0 0.0
        %1941 = vmatpush2.msra.mxu0 0.0
        %1942 = vmatprep.subr.mxu0 0.0
        %1943 = vmatpush2.msra.mxu0 0.0
        %1944 = vmatprep.subr.mxu0 0.0
        %1945 = vmatpush2.msra.mxu0 0.0
        %1946 = vmatprep.subr.mxu0 0.0
        %1947 = vmatpush2.msra.mxu0 0.0
        %1948 = vmatprep.subr.mxu0 0.0
        %1949 = vmatpush2.msra.mxu0 0.0
        %1950 = vmatprep.subr.mxu0 0.0
        %1951 = vmatpush2.msra.mxu0 0.0
        %1952 = vmatprep.subr.mxu0 0.0
        %1953 = vmatpush2.msra.mxu0 0.0
        %1954 = vmatprep.subr.mxu0 0.0
        %1955 = vmatpush2.msra.mxu0 0.0
        %1956 = vmatprep.subr.mxu0 0.0
        %1957 = vmatpush2.msra.mxu0 0.0
        %1958 = vmatprep.subr.mxu0 0.0
        %1959 = vmatpush2.msra.mxu0 0.0
        %1960 = vmatprep.subr.mxu0 0.0
        %1961 = vmatpush2.msra.mxu0 0.0
        %1962 = vmatprep.subr.mxu0 0.0
        %1963 = vmatpush2.msra.mxu0 0.0
        %1964 = vmatprep.subr.mxu0 0.0
        %1965 = vmatpush2.msra.mxu0 0.0
        %1966 = vmatprep.subr.mxu0 0.0
        %1967 = vmatpush2.msra.mxu0 0.0
        %1968 = vmatprep.subr.mxu0 0.0
        %1969 = vmatpush2.msra.mxu0 0.0
        %1970 = vmatprep.mubr.f32.mxu0 0.0
        %v1971 = vand.u32 %v1529, 4294901760
        %1972 = vmatmul.mubr.f32.gmra.mxu0 %v1971
        %v1973 = vpop.f32.mrf.mxu0
        %v1974 = vadd.f32 %v1902, %v1973
        %v1975 = vpop.f32.mrf.mxu0
        %1976 = vdwg.mxu0
        %v1977 = vadd.f32 %v1525, %v1974
        %vm1978 = vcmask 261120
        %1979 = vst.msk [vmem:[%s151] sm:$0xff] %vm1978, %v1977
        %s1980 = scalar_lea.vmem %s133, 32 [#allocation2]
        %v1981 = vld [vmem:[%s1980] sm:$0xff]
        %s1982 = scalar_lea.vmem %s133, 40 [#allocation2]
        %v1983 = vld [vmem:[%s1982] sm:$0xff]
        %v1985 = vsel %vm175, %v1983, 0
        %1987 = vmatprep.subr.mxu0 0.0
        %1988 = vmatpush1.msra.mxu0 0.0
        %1989 = vmatprep.subr.mxu0 0.0
        %1990 = vmatpush1.msra.mxu0 0.0
        %1991 = vmatprep.subr.mxu0 0.0
        %1992 = vmatpush1.msra.mxu0 0.0
        %1993 = vmatprep.subr.mxu0 0.0
        %1994 = vmatpush1.msra.mxu0 0.0
        %1995 = vmatprep.subr.mxu0 0.0
        %1996 = vmatpush1.msra.mxu0 0.0
        %1997 = vmatprep.subr.mxu0 0.0
        %1998 = vmatpush1.msra.mxu0 0.0
        %1999 = vmatprep.subr.mxu0 0.0
        %2000 = vmatpush1.msra.mxu0 0.0
        %2001 = vmatprep.subr.mxu0 0.0
        %2002 = vmatpush1.msra.mxu0 0.0
        %2003 = vmatprep.subr.mxu0 0.0
        %2004 = vmatpush1.msra.mxu0 0.0
        %2005 = vmatprep.subr.mxu0 0.0
        %2006 = vmatpush1.msra.mxu0 0.0
        %2007 = vmatprep.subr.mxu0 0.0
        %2008 = vmatpush1.msra.mxu0 0.0
        %2009 = vmatprep.subr.mxu0 0.0
        %2010 = vmatpush1.msra.mxu0 0.0
        %2011 = vmatprep.subr.mxu0 0.0
        %2012 = vmatpush1.msra.mxu0 0.0
        %2013 = vmatprep.subr.mxu0 0.0
        %2014 = vmatpush1.msra.mxu0 0.0
        %2015 = vmatprep.subr.mxu0 0.0
        %2016 = vmatpush1.msra.mxu0 0.0
        %2017 = vmatprep.subr.mxu0 0.0
        %v2018 = vand.u32 %v163, 4294901760
        %2019 = vmatpush1.msra.mxu0 %v2018
        %2020 = vmatprep.subr.mxu0 0.0
        %2021 = vmatpush2.msra.mxu0 0.0
        %2022 = vmatprep.subr.mxu0 0.0
        %2023 = vmatpush2.msra.mxu0 0.0
        %2024 = vmatprep.subr.mxu0 0.0
        %2025 = vmatpush2.msra.mxu0 0.0
        %2026 = vmatprep.subr.mxu0 0.0
        %2027 = vmatpush2.msra.mxu0 0.0
        %2028 = vmatprep.subr.mxu0 0.0
        %2029 = vmatpush2.msra.mxu0 0.0
        %2030 = vmatprep.subr.mxu0 0.0
        %2031 = vmatpush2.msra.mxu0 0.0
        %2032 = vmatprep.subr.mxu0 0.0
        %2033 = vmatpush2.msra.mxu0 0.0
        %2034 = vmatprep.subr.mxu0 0.0
        %2035 = vmatpush2.msra.mxu0 0.0
        %2036 = vmatprep.subr.mxu0 0.0
        %2037 = vmatpush2.msra.mxu0 0.0
        %2038 = vmatprep.subr.mxu0 0.0
        %2039 = vmatpush2.msra.mxu0 0.0
        %2040 = vmatprep.subr.mxu0 0.0
        %2041 = vmatpush2.msra.mxu0 0.0
        %2042 = vmatprep.subr.mxu0 0.0
        %2043 = vmatpush2.msra.mxu0 0.0
        %2044 = vmatprep.subr.mxu0 0.0
        %2045 = vmatpush2.msra.mxu0 0.0
        %2046 = vmatprep.subr.mxu0 0.0
        %2047 = vmatpush2.msra.mxu0 0.0
        %2048 = vmatprep.subr.mxu0 0.0
        %2049 = vmatpush2.msra.mxu0 0.0
        %2050 = vmatprep.subr.mxu0 0.0
        %2051 = vmatpush2.msra.mxu0 0.0
        %2052 = vmatprep.mubr.f32.mxu0 0.0
        %v2053 = vand.u32 %v1985, 4294901760
        %v2054 = vsub.f32 %v1985, %v2053
        %v2055 = vand.u32 %v2054, 4294901760
        %v2056 = vsub.f32 %v2054, %v2055
        %v2057 = vand.u32 %v2056, 4294901760
        %2058 = vmatmul.mubr.f32.gmra.mxu0 %v2057
        %v2059 = vpop.f32.mrf.mxu0
        %v2060 = vadd.f32 0.0, %v2059
        %v2061 = vpop.f32.mrf.mxu0
        %2062 = vdwg.mxu0
        %2063 = vmatprep.subr.mxu0 0.0
        %2064 = vmatpush1.msra.mxu0 0.0
        %2065 = vmatprep.subr.mxu0 0.0
        %2066 = vmatpush1.msra.mxu0 0.0
        %2067 = vmatprep.subr.mxu0 0.0
        %2068 = vmatpush1.msra.mxu0 0.0
        %2069 = vmatprep.subr.mxu0 0.0
        %2070 = vmatpush1.msra.mxu0 0.0
        %2071 = vmatprep.subr.mxu0 0.0
        %2072 = vmatpush1.msra.mxu0 0.0
        %2073 = vmatprep.subr.mxu0 0.0
        %2074 = vmatpush1.msra.mxu0 0.0
        %2075 = vmatprep.subr.mxu0 0.0
        %2076 = vmatpush1.msra.mxu0 0.0
        %2077 = vmatprep.subr.mxu0 0.0
        %2078 = vmatpush1.msra.mxu0 0.0
        %2079 = vmatprep.subr.mxu0 0.0
        %2080 = vmatpush1.msra.mxu0 0.0
        %2081 = vmatprep.subr.mxu0 0.0
        %2082 = vmatpush1.msra.mxu0 0.0
        %2083 = vmatprep.subr.mxu0 0.0
        %2084 = vmatpush1.msra.mxu0 0.0
        %2085 = vmatprep.subr.mxu0 0.0
        %2086 = vmatpush1.msra.mxu0 0.0
        %2087 = vmatprep.subr.mxu0 0.0
        %2088 = vmatpush1.msra.mxu0 0.0
        %2089 = vmatprep.subr.mxu0 0.0
        %2090 = vmatpush1.msra.mxu0 0.0
        %2091 = vmatprep.subr.mxu0 0.0
        %2092 = vmatpush1.msra.mxu0 0.0
        %2093 = vmatprep.subr.mxu0 0.0
        %v2094 = vand.u32 %v163, 4294901760
        %v2095 = vsub.f32 %v163, %v2094
        %v2096 = vand.u32 %v2095, 4294901760
        %v2097 = vsub.f32 %v2095, %v2096
        %v2098 = vand.u32 %v2097, 4294901760
        %2099 = vmatpush1.msra.mxu0 %v2098
        %2100 = vmatprep.subr.mxu0 0.0
        %2101 = vmatpush2.msra.mxu0 0.0
        %2102 = vmatprep.subr.mxu0 0.0
        %2103 = vmatpush2.msra.mxu0 0.0
        %2104 = vmatprep.subr.mxu0 0.0
        %2105 = vmatpush2.msra.mxu0 0.0
        %2106 = vmatprep.subr.mxu0 0.0
        %2107 = vmatpush2.msra.mxu0 0.0
        %2108 = vmatprep.subr.mxu0 0.0
        %2109 = vmatpush2.msra.mxu0 0.0
        %2110 = vmatprep.subr.mxu0 0.0
        %2111 = vmatpush2.msra.mxu0 0.0
        %2112 = vmatprep.subr.mxu0 0.0
        %2113 = vmatpush2.msra.mxu0 0.0
        %2114 = vmatprep.subr.mxu0 0.0
        %2115 = vmatpush2.msra.mxu0 0.0
        %2116 = vmatprep.subr.mxu0 0.0
        %2117 = vmatpush2.msra.mxu0 0.0
        %2118 = vmatprep.subr.mxu0 0.0
        %2119 = vmatpush2.msra.mxu0 0.0
        %2120 = vmatprep.subr.mxu0 0.0
        %2121 = vmatpush2.msra.mxu0 0.0
        %2122 = vmatprep.subr.mxu0 0.0
        %2123 = vmatpush2.msra.mxu0 0.0
        %2124 = vmatprep.subr.mxu0 0.0
        %2125 = vmatpush2.msra.mxu0 0.0
        %2126 = vmatprep.subr.mxu0 0.0
        %2127 = vmatpush2.msra.mxu0 0.0
        %2128 = vmatprep.subr.mxu0 0.0
        %2129 = vmatpush2.msra.mxu0 0.0
        %2130 = vmatprep.subr.mxu0 0.0
        %2131 = vmatpush2.msra.mxu0 0.0
        %2132 = vmatprep.mubr.f32.mxu0 0.0
        %v2133 = vand.u32 %v1985, 4294901760
        %2134 = vmatmul.mubr.f32.gmra.mxu0 %v2133
        %v2135 = vpop.f32.mrf.mxu0
        %v2136 = vadd.f32 %v2060, %v2135
        %v2137 = vpop.f32.mrf.mxu0
        %2138 = vdwg.mxu0
        %2139 = vmatprep.subr.mxu0 0.0
        %2140 = vmatpush1.msra.mxu0 0.0
        %2141 = vmatprep.subr.mxu0 0.0
        %2142 = vmatpush1.msra.mxu0 0.0
        %2143 = vmatprep.subr.mxu0 0.0
        %2144 = vmatpush1.msra.mxu0 0.0
        %2145 = vmatprep.subr.mxu0 0.0
        %2146 = vmatpush1.msra.mxu0 0.0
        %2147 = vmatprep.subr.mxu0 0.0
        %2148 = vmatpush1.msra.mxu0 0.0
        %2149 = vmatprep.subr.mxu0 0.0
        %2150 = vmatpush1.msra.mxu0 0.0
        %2151 = vmatprep.subr.mxu0 0.0
        %2152 = vmatpush1.msra.mxu0 0.0
        %2153 = vmatprep.subr.mxu0 0.0
        %2154 = vmatpush1.msra.mxu0 0.0
        %2155 = vmatprep.subr.mxu0 0.0
        %2156 = vmatpush1.msra.mxu0 0.0
        %2157 = vmatprep.subr.mxu0 0.0
        %2158 = vmatpush1.msra.mxu0 0.0
        %2159 = vmatprep.subr.mxu0 0.0
        %2160 = vmatpush1.msra.mxu0 0.0
        %2161 = vmatprep.subr.mxu0 0.0
        %2162 = vmatpush1.msra.mxu0 0.0
        %2163 = vmatprep.subr.mxu0 0.0
        %2164 = vmatpush1.msra.mxu0 0.0
        %2165 = vmatprep.subr.mxu0 0.0
        %2166 = vmatpush1.msra.mxu0 0.0
        %2167 = vmatprep.subr.mxu0 0.0
        %2168 = vmatpush1.msra.mxu0 0.0
        %2169 = vmatprep.subr.mxu0 0.0
        %v2170 = vand.u32 %v163, 4294901760
        %v2171 = vsub.f32 %v163, %v2170
        %2172 = vmatpush1.msra.mxu0 %v2171
        %2173 = vmatprep.subr.mxu0 0.0
        %2174 = vmatpush2.msra.mxu0 0.0
        %2175 = vmatprep.subr.mxu0 0.0
        %2176 = vmatpush2.msra.mxu0 0.0
        %2177 = vmatprep.subr.mxu0 0.0
        %2178 = vmatpush2.msra.mxu0 0.0
        %2179 = vmatprep.subr.mxu0 0.0
        %2180 = vmatpush2.msra.mxu0 0.0
        %2181 = vmatprep.subr.mxu0 0.0
        %2182 = vmatpush2.msra.mxu0 0.0
        %2183 = vmatprep.subr.mxu0 0.0
        %2184 = vmatpush2.msra.mxu0 0.0
        %2185 = vmatprep.subr.mxu0 0.0
        %2186 = vmatpush2.msra.mxu0 0.0
        %2187 = vmatprep.subr.mxu0 0.0
        %2188 = vmatpush2.msra.mxu0 0.0
        %2189 = vmatprep.subr.mxu0 0.0
        %2190 = vmatpush2.msra.mxu0 0.0
        %2191 = vmatprep.subr.mxu0 0.0
        %2192 = vmatpush2.msra.mxu0 0.0
        %2193 = vmatprep.subr.mxu0 0.0
        %2194 = vmatpush2.msra.mxu0 0.0
        %2195 = vmatprep.subr.mxu0 0.0
        %2196 = vmatpush2.msra.mxu0 0.0
        %2197 = vmatprep.subr.mxu0 0.0
        %2198 = vmatpush2.msra.mxu0 0.0
        %2199 = vmatprep.subr.mxu0 0.0
        %2200 = vmatpush2.msra.mxu0 0.0
        %2201 = vmatprep.subr.mxu0 0.0
        %2202 = vmatpush2.msra.mxu0 0.0
        %2203 = vmatprep.subr.mxu0 0.0
        %2204 = vmatpush2.msra.mxu0 0.0
        %2205 = vmatprep.mubr.f32.mxu0 0.0
        %v2206 = vand.u32 %v1985, 4294901760
        %v2207 = vsub.f32 %v1985, %v2206
        %2208 = vmatmul.mubr.f32.gmra.mxu0 %v2207
        %v2209 = vpop.f32.mrf.mxu0
        %v2210 = vadd.f32 %v2136, %v2209
        %v2211 = vpop.f32.mrf.mxu0
        %2212 = vdwg.mxu0
        %2213 = vmatprep.subr.mxu0 0.0
        %2214 = vmatpush1.msra.mxu0 0.0
        %2215 = vmatprep.subr.mxu0 0.0
        %2216 = vmatpush1.msra.mxu0 0.0
        %2217 = vmatprep.subr.mxu0 0.0
        %2218 = vmatpush1.msra.mxu0 0.0
        %2219 = vmatprep.subr.mxu0 0.0
        %2220 = vmatpush1.msra.mxu0 0.0
        %2221 = vmatprep.subr.mxu0 0.0
        %2222 = vmatpush1.msra.mxu0 0.0
        %2223 = vmatprep.subr.mxu0 0.0
        %2224 = vmatpush1.msra.mxu0 0.0
        %2225 = vmatprep.subr.mxu0 0.0
        %2226 = vmatpush1.msra.mxu0 0.0
        %2227 = vmatprep.subr.mxu0 0.0
        %2228 = vmatpush1.msra.mxu0 0.0
        %2229 = vmatprep.subr.mxu0 0.0
        %2230 = vmatpush1.msra.mxu0 0.0
        %2231 = vmatprep.subr.mxu0 0.0
        %2232 = vmatpush1.msra.mxu0 0.0
        %2233 = vmatprep.subr.mxu0 0.0
        %2234 = vmatpush1.msra.mxu0 0.0
        %2235 = vmatprep.subr.mxu0 0.0
        %2236 = vmatpush1.msra.mxu0 0.0
        %2237 = vmatprep.subr.mxu0 0.0
        %2238 = vmatpush1.msra.mxu0 0.0
        %2239 = vmatprep.subr.mxu0 0.0
        %2240 = vmatpush1.msra.mxu0 0.0
        %2241 = vmatprep.subr.mxu0 0.0
        %2242 = vmatpush1.msra.mxu0 0.0
        %2243 = vmatprep.subr.mxu0 0.0
        %v2244 = vand.u32 %v163, 4294901760
        %2245 = vmatpush1.msra.mxu0 %v2244
        %2246 = vmatprep.subr.mxu0 0.0
        %2247 = vmatpush2.msra.mxu0 0.0
        %2248 = vmatprep.subr.mxu0 0.0
        %2249 = vmatpush2.msra.mxu0 0.0
        %2250 = vmatprep.subr.mxu0 0.0
        %2251 = vmatpush2.msra.mxu0 0.0
        %2252 = vmatprep.subr.mxu0 0.0
        %2253 = vmatpush2.msra.mxu0 0.0
        %2254 = vmatprep.subr.mxu0 0.0
        %2255 = vmatpush2.msra.mxu0 0.0
        %2256 = vmatprep.subr.mxu0 0.0
        %2257 = vmatpush2.msra.mxu0 0.0
        %2258 = vmatprep.subr.mxu0 0.0
        %2259 = vmatpush2.msra.mxu0 0.0
        %2260 = vmatprep.subr.mxu0 0.0
        %2261 = vmatpush2.msra.mxu0 0.0
        %2262 = vmatprep.subr.mxu0 0.0
        %2263 = vmatpush2.msra.mxu0 0.0
        %2264 = vmatprep.subr.mxu0 0.0
        %2265 = vmatpush2.msra.mxu0 0.0
        %2266 = vmatprep.subr.mxu0 0.0
        %2267 = vmatpush2.msra.mxu0 0.0
        %2268 = vmatprep.subr.mxu0 0.0
        %2269 = vmatpush2.msra.mxu0 0.0
        %2270 = vmatprep.subr.mxu0 0.0
        %2271 = vmatpush2.msra.mxu0 0.0
        %2272 = vmatprep.subr.mxu0 0.0
        %2273 = vmatpush2.msra.mxu0 0.0
        %2274 = vmatprep.subr.mxu0 0.0
        %2275 = vmatpush2.msra.mxu0 0.0
        %2276 = vmatprep.subr.mxu0 0.0
        %2277 = vmatpush2.msra.mxu0 0.0
        %2278 = vmatprep.mubr.f32.mxu0 0.0
        %v2279 = vand.u32 %v1985, 4294901760
        %v2280 = vsub.f32 %v1985, %v2279
        %v2281 = vand.u32 %v2280, 4294901760
        %2282 = vmatmul.mubr.f32.gmra.mxu0 %v2281
        %v2283 = vpop.f32.mrf.mxu0
        %v2284 = vadd.f32 %v2210, %v2283
        %v2285 = vpop.f32.mrf.mxu0
        %2286 = vdwg.mxu0
        %2287 = vmatprep.subr.mxu0 0.0
        %2288 = vmatpush1.msra.mxu0 0.0
        %2289 = vmatprep.subr.mxu0 0.0
        %2290 = vmatpush1.msra.mxu0 0.0
        %2291 = vmatprep.subr.mxu0 0.0
        %2292 = vmatpush1.msra.mxu0 0.0
        %2293 = vmatprep.subr.mxu0 0.0
        %2294 = vmatpush1.msra.mxu0 0.0
        %2295 = vmatprep.subr.mxu0 0.0
        %2296 = vmatpush1.msra.mxu0 0.0
        %2297 = vmatprep.subr.mxu0 0.0
        %2298 = vmatpush1.msra.mxu0 0.0
        %2299 = vmatprep.subr.mxu0 0.0
        %2300 = vmatpush1.msra.mxu0 0.0
        %2301 = vmatprep.subr.mxu0 0.0
        %2302 = vmatpush1.msra.mxu0 0.0
        %2303 = vmatprep.subr.mxu0 0.0
        %2304 = vmatpush1.msra.mxu0 0.0
        %2305 = vmatprep.subr.mxu0 0.0
        %2306 = vmatpush1.msra.mxu0 0.0
        %2307 = vmatprep.subr.mxu0 0.0
        %2308 = vmatpush1.msra.mxu0 0.0
        %2309 = vmatprep.subr.mxu0 0.0
        %2310 = vmatpush1.msra.mxu0 0.0
        %2311 = vmatprep.subr.mxu0 0.0
        %2312 = vmatpush1.msra.mxu0 0.0
        %2313 = vmatprep.subr.mxu0 0.0
        %2314 = vmatpush1.msra.mxu0 0.0
        %2315 = vmatprep.subr.mxu0 0.0
        %2316 = vmatpush1.msra.mxu0 0.0
        %2317 = vmatprep.subr.mxu0 0.0
        %v2318 = vand.u32 %v163, 4294901760
        %v2319 = vsub.f32 %v163, %v2318
        %v2320 = vand.u32 %v2319, 4294901760
        %2321 = vmatpush1.msra.mxu0 %v2320
        %2322 = vmatprep.subr.mxu0 0.0
        %2323 = vmatpush2.msra.mxu0 0.0
        %2324 = vmatprep.subr.mxu0 0.0
        %2325 = vmatpush2.msra.mxu0 0.0
        %2326 = vmatprep.subr.mxu0 0.0
        %2327 = vmatpush2.msra.mxu0 0.0
        %2328 = vmatprep.subr.mxu0 0.0
        %2329 = vmatpush2.msra.mxu0 0.0
        %2330 = vmatprep.subr.mxu0 0.0
        %2331 = vmatpush2.msra.mxu0 0.0
        %2332 = vmatprep.subr.mxu0 0.0
        %2333 = vmatpush2.msra.mxu0 0.0
        %2334 = vmatprep.subr.mxu0 0.0
        %2335 = vmatpush2.msra.mxu0 0.0
        %2336 = vmatprep.subr.mxu0 0.0
        %2337 = vmatpush2.msra.mxu0 0.0
        %2338 = vmatprep.subr.mxu0 0.0
        %2339 = vmatpush2.msra.mxu0 0.0
        %2340 = vmatprep.subr.mxu0 0.0
        %2341 = vmatpush2.msra.mxu0 0.0
        %2342 = vmatprep.subr.mxu0 0.0
        %2343 = vmatpush2.msra.mxu0 0.0
        %2344 = vmatprep.subr.mxu0 0.0
        %2345 = vmatpush2.msra.mxu0 0.0
        %2346 = vmatprep.subr.mxu0 0.0
        %2347 = vmatpush2.msra.mxu0 0.0
        %2348 = vmatprep.subr.mxu0 0.0
        %2349 = vmatpush2.msra.mxu0 0.0
        %2350 = vmatprep.subr.mxu0 0.0
        %2351 = vmatpush2.msra.mxu0 0.0
        %2352 = vmatprep.subr.mxu0 0.0
        %2353 = vmatpush2.msra.mxu0 0.0
        %2354 = vmatprep.mubr.f32.mxu0 0.0
        %v2355 = vand.u32 %v1985, 4294901760
        %2356 = vmatmul.mubr.f32.gmra.mxu0 %v2355
        %v2357 = vpop.f32.mrf.mxu0
        %v2358 = vadd.f32 %v2284, %v2357
        %v2359 = vpop.f32.mrf.mxu0
        %2360 = vdwg.mxu0
        %2361 = vmatprep.subr.mxu0 0.0
        %2362 = vmatpush1.msra.mxu0 0.0
        %2363 = vmatprep.subr.mxu0 0.0
        %2364 = vmatpush1.msra.mxu0 0.0
        %2365 = vmatprep.subr.mxu0 0.0
        %2366 = vmatpush1.msra.mxu0 0.0
        %2367 = vmatprep.subr.mxu0 0.0
        %2368 = vmatpush1.msra.mxu0 0.0
        %2369 = vmatprep.subr.mxu0 0.0
        %2370 = vmatpush1.msra.mxu0 0.0
        %2371 = vmatprep.subr.mxu0 0.0
        %2372 = vmatpush1.msra.mxu0 0.0
        %2373 = vmatprep.subr.mxu0 0.0
        %2374 = vmatpush1.msra.mxu0 0.0
        %2375 = vmatprep.subr.mxu0 0.0
        %2376 = vmatpush1.msra.mxu0 0.0
        %2377 = vmatprep.subr.mxu0 0.0
        %2378 = vmatpush1.msra.mxu0 0.0
        %2379 = vmatprep.subr.mxu0 0.0
        %2380 = vmatpush1.msra.mxu0 0.0
        %2381 = vmatprep.subr.mxu0 0.0
        %2382 = vmatpush1.msra.mxu0 0.0
        %2383 = vmatprep.subr.mxu0 0.0
        %2384 = vmatpush1.msra.mxu0 0.0
        %2385 = vmatprep.subr.mxu0 0.0
        %2386 = vmatpush1.msra.mxu0 0.0
        %2387 = vmatprep.subr.mxu0 0.0
        %2388 = vmatpush1.msra.mxu0 0.0
        %2389 = vmatprep.subr.mxu0 0.0
        %2390 = vmatpush1.msra.mxu0 0.0
        %2391 = vmatprep.subr.mxu0 0.0
        %v2392 = vand.u32 %v163, 4294901760
        %2393 = vmatpush1.msra.mxu0 %v2392
        %2394 = vmatprep.subr.mxu0 0.0
        %2395 = vmatpush2.msra.mxu0 0.0
        %2396 = vmatprep.subr.mxu0 0.0
        %2397 = vmatpush2.msra.mxu0 0.0
        %2398 = vmatprep.subr.mxu0 0.0
        %2399 = vmatpush2.msra.mxu0 0.0
        %2400 = vmatprep.subr.mxu0 0.0
        %2401 = vmatpush2.msra.mxu0 0.0
        %2402 = vmatprep.subr.mxu0 0.0
        %2403 = vmatpush2.msra.mxu0 0.0
        %2404 = vmatprep.subr.mxu0 0.0
        %2405 = vmatpush2.msra.mxu0 0.0
        %2406 = vmatprep.subr.mxu0 0.0
        %2407 = vmatpush2.msra.mxu0 0.0
        %2408 = vmatprep.subr.mxu0 0.0
        %2409 = vmatpush2.msra.mxu0 0.0
        %2410 = vmatprep.subr.mxu0 0.0
        %2411 = vmatpush2.msra.mxu0 0.0
        %2412 = vmatprep.subr.mxu0 0.0
        %2413 = vmatpush2.msra.mxu0 0.0
        %2414 = vmatprep.subr.mxu0 0.0
        %2415 = vmatpush2.msra.mxu0 0.0
        %2416 = vmatprep.subr.mxu0 0.0
        %2417 = vmatpush2.msra.mxu0 0.0
        %2418 = vmatprep.subr.mxu0 0.0
        %2419 = vmatpush2.msra.mxu0 0.0
        %2420 = vmatprep.subr.mxu0 0.0
        %2421 = vmatpush2.msra.mxu0 0.0
        %2422 = vmatprep.subr.mxu0 0.0
        %2423 = vmatpush2.msra.mxu0 0.0
        %2424 = vmatprep.subr.mxu0 0.0
        %2425 = vmatpush2.msra.mxu0 0.0
        %2426 = vmatprep.mubr.f32.mxu0 0.0
        %v2427 = vand.u32 %v1985, 4294901760
        %2428 = vmatmul.mubr.f32.gmra.mxu0 %v2427
        %v2429 = vpop.f32.mrf.mxu0
        %v2430 = vadd.f32 %v2358, %v2429
        %v2431 = vpop.f32.mrf.mxu0
        %2432 = vdwg.mxu0
        %v2434 = vsel %vm175, %v1981, 0
        %2436 = vmatprep.subr.mxu0 0.0
        %2437 = vmatpush1.msra.mxu0 0.0
        %2438 = vmatprep.subr.mxu0 0.0
        %2439 = vmatpush1.msra.mxu0 0.0
        %2440 = vmatprep.subr.mxu0 0.0
        %2441 = vmatpush1.msra.mxu0 0.0
        %2442 = vmatprep.subr.mxu0 0.0
        %2443 = vmatpush1.msra.mxu0 0.0
        %2444 = vmatprep.subr.mxu0 0.0
        %2445 = vmatpush1.msra.mxu0 0.0
        %2446 = vmatprep.subr.mxu0 0.0
        %2447 = vmatpush1.msra.mxu0 0.0
        %2448 = vmatprep.subr.mxu0 0.0
        %2449 = vmatpush1.msra.mxu0 0.0
        %2450 = vmatprep.subr.mxu0 0.0
        %2451 = vmatpush1.msra.mxu0 0.0
        %2452 = vmatprep.subr.mxu0 0.0
        %2453 = vmatpush1.msra.mxu0 0.0
        %2454 = vmatprep.subr.mxu0 0.0
        %2455 = vmatpush1.msra.mxu0 0.0
        %2456 = vmatprep.subr.mxu0 0.0
        %2457 = vmatpush1.msra.mxu0 0.0
        %2458 = vmatprep.subr.mxu0 0.0
        %2459 = vmatpush1.msra.mxu0 0.0
        %2460 = vmatprep.subr.mxu0 0.0
        %2461 = vmatpush1.msra.mxu0 0.0
        %2462 = vmatprep.subr.mxu0 0.0
        %2463 = vmatpush1.msra.mxu0 0.0
        %2464 = vmatprep.subr.mxu0 0.0
        %2465 = vmatpush1.msra.mxu0 0.0
        %2466 = vmatprep.subr.mxu0 0.0
        %v2467 = vand.u32 %v159, 4294901760
        %2468 = vmatpush1.msra.mxu0 %v2467
        %2469 = vmatprep.subr.mxu0 0.0
        %2470 = vmatpush2.msra.mxu0 0.0
        %2471 = vmatprep.subr.mxu0 0.0
        %2472 = vmatpush2.msra.mxu0 0.0
        %2473 = vmatprep.subr.mxu0 0.0
        %2474 = vmatpush2.msra.mxu0 0.0
        %2475 = vmatprep.subr.mxu0 0.0
        %2476 = vmatpush2.msra.mxu0 0.0
        %2477 = vmatprep.subr.mxu0 0.0
        %2478 = vmatpush2.msra.mxu0 0.0
        %2479 = vmatprep.subr.mxu0 0.0
        %2480 = vmatpush2.msra.mxu0 0.0
        %2481 = vmatprep.subr.mxu0 0.0
        %2482 = vmatpush2.msra.mxu0 0.0
        %2483 = vmatprep.subr.mxu0 0.0
        %2484 = vmatpush2.msra.mxu0 0.0
        %2485 = vmatprep.subr.mxu0 0.0
        %2486 = vmatpush2.msra.mxu0 0.0
        %2487 = vmatprep.subr.mxu0 0.0
        %2488 = vmatpush2.msra.mxu0 0.0
        %2489 = vmatprep.subr.mxu0 0.0
        %2490 = vmatpush2.msra.mxu0 0.0
        %2491 = vmatprep.subr.mxu0 0.0
        %2492 = vmatpush2.msra.mxu0 0.0
        %2493 = vmatprep.subr.mxu0 0.0
        %2494 = vmatpush2.msra.mxu0 0.0
        %2495 = vmatprep.subr.mxu0 0.0
        %2496 = vmatpush2.msra.mxu0 0.0
        %2497 = vmatprep.subr.mxu0 0.0
        %2498 = vmatpush2.msra.mxu0 0.0
        %2499 = vmatprep.subr.mxu0 0.0
        %2500 = vmatpush2.msra.mxu0 0.0
        %2501 = vmatprep.mubr.f32.mxu0 0.0
        %v2502 = vand.u32 %v2434, 4294901760
        %v2503 = vsub.f32 %v2434, %v2502
        %v2504 = vand.u32 %v2503, 4294901760
        %v2505 = vsub.f32 %v2503, %v2504
        %v2506 = vand.u32 %v2505, 4294901760
        %2507 = vmatmul.mubr.f32.gmra.mxu0 %v2506
        %v2508 = vpop.f32.mrf.mxu0
        %v2509 = vadd.f32 %v2430, %v2508
        %v2510 = vpop.f32.mrf.mxu0
        %2511 = vdwg.mxu0
        %2512 = vmatprep.subr.mxu0 0.0
        %2513 = vmatpush1.msra.mxu0 0.0
        %2514 = vmatprep.subr.mxu0 0.0
        %2515 = vmatpush1.msra.mxu0 0.0
        %2516 = vmatprep.subr.mxu0 0.0
        %2517 = vmatpush1.msra.mxu0 0.0
        %2518 = vmatprep.subr.mxu0 0.0
        %2519 = vmatpush1.msra.mxu0 0.0
        %2520 = vmatprep.subr.mxu0 0.0
        %2521 = vmatpush1.msra.mxu0 0.0
        %2522 = vmatprep.subr.mxu0 0.0
        %2523 = vmatpush1.msra.mxu0 0.0
        %2524 = vmatprep.subr.mxu0 0.0
        %2525 = vmatpush1.msra.mxu0 0.0
        %2526 = vmatprep.subr.mxu0 0.0
        %2527 = vmatpush1.msra.mxu0 0.0
        %2528 = vmatprep.subr.mxu0 0.0
        %2529 = vmatpush1.msra.mxu0 0.0
        %2530 = vmatprep.subr.mxu0 0.0
        %2531 = vmatpush1.msra.mxu0 0.0
        %2532 = vmatprep.subr.mxu0 0.0
        %2533 = vmatpush1.msra.mxu0 0.0
        %2534 = vmatprep.subr.mxu0 0.0
        %2535 = vmatpush1.msra.mxu0 0.0
        %2536 = vmatprep.subr.mxu0 0.0
        %2537 = vmatpush1.msra.mxu0 0.0
        %2538 = vmatprep.subr.mxu0 0.0
        %2539 = vmatpush1.msra.mxu0 0.0
        %2540 = vmatprep.subr.mxu0 0.0
        %2541 = vmatpush1.msra.mxu0 0.0
        %2542 = vmatprep.subr.mxu0 0.0
        %v2543 = vand.u32 %v159, 4294901760
        %v2544 = vsub.f32 %v159, %v2543
        %v2545 = vand.u32 %v2544, 4294901760
        %v2546 = vsub.f32 %v2544, %v2545
        %v2547 = vand.u32 %v2546, 4294901760
        %2548 = vmatpush1.msra.mxu0 %v2547
        %2549 = vmatprep.subr.mxu0 0.0
        %2550 = vmatpush2.msra.mxu0 0.0
        %2551 = vmatprep.subr.mxu0 0.0
        %2552 = vmatpush2.msra.mxu0 0.0
        %2553 = vmatprep.subr.mxu0 0.0
        %2554 = vmatpush2.msra.mxu0 0.0
        %2555 = vmatprep.subr.mxu0 0.0
        %2556 = vmatpush2.msra.mxu0 0.0
        %2557 = vmatprep.subr.mxu0 0.0
        %2558 = vmatpush2.msra.mxu0 0.0
        %2559 = vmatprep.subr.mxu0 0.0
        %2560 = vmatpush2.msra.mxu0 0.0
        %2561 = vmatprep.subr.mxu0 0.0
        %2562 = vmatpush2.msra.mxu0 0.0
        %2563 = vmatprep.subr.mxu0 0.0
        %2564 = vmatpush2.msra.mxu0 0.0
        %2565 = vmatprep.subr.mxu0 0.0
        %2566 = vmatpush2.msra.mxu0 0.0
        %2567 = vmatprep.subr.mxu0 0.0
        %2568 = vmatpush2.msra.mxu0 0.0
        %2569 = vmatprep.subr.mxu0 0.0
        %2570 = vmatpush2.msra.mxu0 0.0
        %2571 = vmatprep.subr.mxu0 0.0
        %2572 = vmatpush2.msra.mxu0 0.0
        %2573 = vmatprep.subr.mxu0 0.0
        %2574 = vmatpush2.msra.mxu0 0.0
        %2575 = vmatprep.subr.mxu0 0.0
        %2576 = vmatpush2.msra.mxu0 0.0
        %2577 = vmatprep.subr.mxu0 0.0
        %2578 = vmatpush2.msra.mxu0 0.0
        %2579 = vmatprep.subr.mxu0 0.0
        %2580 = vmatpush2.msra.mxu0 0.0
        %2581 = vmatprep.mubr.f32.mxu0 0.0
        %v2582 = vand.u32 %v2434, 4294901760
        %2583 = vmatmul.mubr.f32.gmra.mxu0 %v2582
        %v2584 = vpop.f32.mrf.mxu0
        %v2585 = vadd.f32 %v2509, %v2584
        %v2586 = vpop.f32.mrf.mxu0
        %2587 = vdwg.mxu0
        %2588 = vmatprep.subr.mxu0 0.0
        %2589 = vmatpush1.msra.mxu0 0.0
        %2590 = vmatprep.subr.mxu0 0.0
        %2591 = vmatpush1.msra.mxu0 0.0
        %2592 = vmatprep.subr.mxu0 0.0
        %2593 = vmatpush1.msra.mxu0 0.0
        %2594 = vmatprep.subr.mxu0 0.0
        %2595 = vmatpush1.msra.mxu0 0.0
        %2596 = vmatprep.subr.mxu0 0.0
        %2597 = vmatpush1.msra.mxu0 0.0
        %2598 = vmatprep.subr.mxu0 0.0
        %2599 = vmatpush1.msra.mxu0 0.0
        %2600 = vmatprep.subr.mxu0 0.0
        %2601 = vmatpush1.msra.mxu0 0.0
        %2602 = vmatprep.subr.mxu0 0.0
        %2603 = vmatpush1.msra.mxu0 0.0
        %2604 = vmatprep.subr.mxu0 0.0
        %2605 = vmatpush1.msra.mxu0 0.0
        %2606 = vmatprep.subr.mxu0 0.0
        %2607 = vmatpush1.msra.mxu0 0.0
        %2608 = vmatprep.subr.mxu0 0.0
        %2609 = vmatpush1.msra.mxu0 0.0
        %2610 = vmatprep.subr.mxu0 0.0
        %2611 = vmatpush1.msra.mxu0 0.0
        %2612 = vmatprep.subr.mxu0 0.0
        %2613 = vmatpush1.msra.mxu0 0.0
        %2614 = vmatprep.subr.mxu0 0.0
        %2615 = vmatpush1.msra.mxu0 0.0
        %2616 = vmatprep.subr.mxu0 0.0
        %2617 = vmatpush1.msra.mxu0 0.0
        %2618 = vmatprep.subr.mxu0 0.0
        %v2619 = vand.u32 %v159, 4294901760
        %v2620 = vsub.f32 %v159, %v2619
        %2621 = vmatpush1.msra.mxu0 %v2620
        %2622 = vmatprep.subr.mxu0 0.0
        %2623 = vmatpush2.msra.mxu0 0.0
        %2624 = vmatprep.subr.mxu0 0.0
        %2625 = vmatpush2.msra.mxu0 0.0
        %2626 = vmatprep.subr.mxu0 0.0
        %2627 = vmatpush2.msra.mxu0 0.0
        %2628 = vmatprep.subr.mxu0 0.0
        %2629 = vmatpush2.msra.mxu0 0.0
        %2630 = vmatprep.subr.mxu0 0.0
        %2631 = vmatpush2.msra.mxu0 0.0
        %2632 = vmatprep.subr.mxu0 0.0
        %2633 = vmatpush2.msra.mxu0 0.0
        %2634 = vmatprep.subr.mxu0 0.0
        %2635 = vmatpush2.msra.mxu0 0.0
        %2636 = vmatprep.subr.mxu0 0.0
        %2637 = vmatpush2.msra.mxu0 0.0
        %2638 = vmatprep.subr.mxu0 0.0
        %2639 = vmatpush2.msra.mxu0 0.0
        %2640 = vmatprep.subr.mxu0 0.0
        %2641 = vmatpush2.msra.mxu0 0.0
        %2642 = vmatprep.subr.mxu0 0.0
        %2643 = vmatpush2.msra.mxu0 0.0
        %2644 = vmatprep.subr.mxu0 0.0
        %2645 = vmatpush2.msra.mxu0 0.0
        %2646 = vmatprep.subr.mxu0 0.0
        %2647 = vmatpush2.msra.mxu0 0.0
        %2648 = vmatprep.subr.mxu0 0.0
        %2649 = vmatpush2.msra.mxu0 0.0
        %2650 = vmatprep.subr.mxu0 0.0
        %2651 = vmatpush2.msra.mxu0 0.0
        %2652 = vmatprep.subr.mxu0 0.0
        %2653 = vmatpush2.msra.mxu0 0.0
        %2654 = vmatprep.mubr.f32.mxu0 0.0
        %v2655 = vand.u32 %v2434, 4294901760
        %v2656 = vsub.f32 %v2434, %v2655
        %2657 = vmatmul.mubr.f32.gmra.mxu0 %v2656
        %v2658 = vpop.f32.mrf.mxu0
        %v2659 = vadd.f32 %v2585, %v2658
        %v2660 = vpop.f32.mrf.mxu0
        %2661 = vdwg.mxu0
        %2662 = vmatprep.subr.mxu0 0.0
        %2663 = vmatpush1.msra.mxu0 0.0
        %2664 = vmatprep.subr.mxu0 0.0
        %2665 = vmatpush1.msra.mxu0 0.0
        %2666 = vmatprep.subr.mxu0 0.0
        %2667 = vmatpush1.msra.mxu0 0.0
        %2668 = vmatprep.subr.mxu0 0.0
        %2669 = vmatpush1.msra.mxu0 0.0
        %2670 = vmatprep.subr.mxu0 0.0
        %2671 = vmatpush1.msra.mxu0 0.0
        %2672 = vmatprep.subr.mxu0 0.0
        %2673 = vmatpush1.msra.mxu0 0.0
        %2674 = vmatprep.subr.mxu0 0.0
        %2675 = vmatpush1.msra.mxu0 0.0
        %2676 = vmatprep.subr.mxu0 0.0
        %2677 = vmatpush1.msra.mxu0 0.0
        %2678 = vmatprep.subr.mxu0 0.0
        %2679 = vmatpush1.msra.mxu0 0.0
        %2680 = vmatprep.subr.mxu0 0.0
        %2681 = vmatpush1.msra.mxu0 0.0
        %2682 = vmatprep.subr.mxu0 0.0
        %2683 = vmatpush1.msra.mxu0 0.0
        %2684 = vmatprep.subr.mxu0 0.0
        %2685 = vmatpush1.msra.mxu0 0.0
        %2686 = vmatprep.subr.mxu0 0.0
        %2687 = vmatpush1.msra.mxu0 0.0
        %2688 = vmatprep.subr.mxu0 0.0
        %2689 = vmatpush1.msra.mxu0 0.0
        %2690 = vmatprep.subr.mxu0 0.0
        %2691 = vmatpush1.msra.mxu0 0.0
        %2692 = vmatprep.subr.mxu0 0.0
        %v2693 = vand.u32 %v159, 4294901760
        %2694 = vmatpush1.msra.mxu0 %v2693
        %2695 = vmatprep.subr.mxu0 0.0
        %2696 = vmatpush2.msra.mxu0 0.0
        %2697 = vmatprep.subr.mxu0 0.0
        %2698 = vmatpush2.msra.mxu0 0.0
        %2699 = vmatprep.subr.mxu0 0.0
        %2700 = vmatpush2.msra.mxu0 0.0
        %2701 = vmatprep.subr.mxu0 0.0
        %2702 = vmatpush2.msra.mxu0 0.0
        %2703 = vmatprep.subr.mxu0 0.0
        %2704 = vmatpush2.msra.mxu0 0.0
        %2705 = vmatprep.subr.mxu0 0.0
        %2706 = vmatpush2.msra.mxu0 0.0
        %2707 = vmatprep.subr.mxu0 0.0
        %2708 = vmatpush2.msra.mxu0 0.0
        %2709 = vmatprep.subr.mxu0 0.0
        %2710 = vmatpush2.msra.mxu0 0.0
        %2711 = vmatprep.subr.mxu0 0.0
        %2712 = vmatpush2.msra.mxu0 0.0
        %2713 = vmatprep.subr.mxu0 0.0
        %2714 = vmatpush2.msra.mxu0 0.0
        %2715 = vmatprep.subr.mxu0 0.0
        %2716 = vmatpush2.msra.mxu0 0.0
        %2717 = vmatprep.subr.mxu0 0.0
        %2718 = vmatpush2.msra.mxu0 0.0
        %2719 = vmatprep.subr.mxu0 0.0
        %2720 = vmatpush2.msra.mxu0 0.0
        %2721 = vmatprep.subr.mxu0 0.0
        %2722 = vmatpush2.msra.mxu0 0.0
        %2723 = vmatprep.subr.mxu0 0.0
        %2724 = vmatpush2.msra.mxu0 0.0
        %2725 = vmatprep.subr.mxu0 0.0
        %2726 = vmatpush2.msra.mxu0 0.0
        %2727 = vmatprep.mubr.f32.mxu0 0.0
        %v2728 = vand.u32 %v2434, 4294901760
        %v2729 = vsub.f32 %v2434, %v2728
        %v2730 = vand.u32 %v2729, 4294901760
        %2731 = vmatmul.mubr.f32.gmra.mxu0 %v2730
        %v2732 = vpop.f32.mrf.mxu0
        %v2733 = vadd.f32 %v2659, %v2732
        %v2734 = vpop.f32.mrf.mxu0
        %2735 = vdwg.mxu0
        %2736 = vmatprep.subr.mxu0 0.0
        %2737 = vmatpush1.msra.mxu0 0.0
        %2738 = vmatprep.subr.mxu0 0.0
        %2739 = vmatpush1.msra.mxu0 0.0
        %2740 = vmatprep.subr.mxu0 0.0
        %2741 = vmatpush1.msra.mxu0 0.0
        %2742 = vmatprep.subr.mxu0 0.0
        %2743 = vmatpush1.msra.mxu0 0.0
        %2744 = vmatprep.subr.mxu0 0.0
        %2745 = vmatpush1.msra.mxu0 0.0
        %2746 = vmatprep.subr.mxu0 0.0
        %2747 = vmatpush1.msra.mxu0 0.0
        %2748 = vmatprep.subr.mxu0 0.0
        %2749 = vmatpush1.msra.mxu0 0.0
        %2750 = vmatprep.subr.mxu0 0.0
        %2751 = vmatpush1.msra.mxu0 0.0
        %2752 = vmatprep.subr.mxu0 0.0
        %2753 = vmatpush1.msra.mxu0 0.0
        %2754 = vmatprep.subr.mxu0 0.0
        %2755 = vmatpush1.msra.mxu0 0.0
        %2756 = vmatprep.subr.mxu0 0.0
        %2757 = vmatpush1.msra.mxu0 0.0
        %2758 = vmatprep.subr.mxu0 0.0
        %2759 = vmatpush1.msra.mxu0 0.0
        %2760 = vmatprep.subr.mxu0 0.0
        %2761 = vmatpush1.msra.mxu0 0.0
        %2762 = vmatprep.subr.mxu0 0.0
        %2763 = vmatpush1.msra.mxu0 0.0
        %2764 = vmatprep.subr.mxu0 0.0
        %2765 = vmatpush1.msra.mxu0 0.0
        %2766 = vmatprep.subr.mxu0 0.0
        %v2767 = vand.u32 %v159, 4294901760
        %v2768 = vsub.f32 %v159, %v2767
        %v2769 = vand.u32 %v2768, 4294901760
        %2770 = vmatpush1.msra.mxu0 %v2769
        %2771 = vmatprep.subr.mxu0 0.0
        %2772 = vmatpush2.msra.mxu0 0.0
        %2773 = vmatprep.subr.mxu0 0.0
        %2774 = vmatpush2.msra.mxu0 0.0
        %2775 = vmatprep.subr.mxu0 0.0
        %2776 = vmatpush2.msra.mxu0 0.0
        %2777 = vmatprep.subr.mxu0 0.0
        %2778 = vmatpush2.msra.mxu0 0.0
        %2779 = vmatprep.subr.mxu0 0.0
        %2780 = vmatpush2.msra.mxu0 0.0
        %2781 = vmatprep.subr.mxu0 0.0
        %2782 = vmatpush2.msra.mxu0 0.0
        %2783 = vmatprep.subr.mxu0 0.0
        %2784 = vmatpush2.msra.mxu0 0.0
        %2785 = vmatprep.subr.mxu0 0.0
        %2786 = vmatpush2.msra.mxu0 0.0
        %2787 = vmatprep.subr.mxu0 0.0
        %2788 = vmatpush2.msra.mxu0 0.0
        %2789 = vmatprep.subr.mxu0 0.0
        %2790 = vmatpush2.msra.mxu0 0.0
        %2791 = vmatprep.subr.mxu0 0.0
        %2792 = vmatpush2.msra.mxu0 0.0
        %2793 = vmatprep.subr.mxu0 0.0
        %2794 = vmatpush2.msra.mxu0 0.0
        %2795 = vmatprep.subr.mxu0 0.0
        %2796 = vmatpush2.msra.mxu0 0.0
        %2797 = vmatprep.subr.mxu0 0.0
        %2798 = vmatpush2.msra.mxu0 0.0
        %2799 = vmatprep.subr.mxu0 0.0
        %2800 = vmatpush2.msra.mxu0 0.0
        %2801 = vmatprep.subr.mxu0 0.0
        %2802 = vmatpush2.msra.mxu0 0.0
        %2803 = vmatprep.mubr.f32.mxu0 0.0
        %v2804 = vand.u32 %v2434, 4294901760
        %2805 = vmatmul.mubr.f32.gmra.mxu0 %v2804
        %v2806 = vpop.f32.mrf.mxu0
        %v2807 = vadd.f32 %v2733, %v2806
        %v2808 = vpop.f32.mrf.mxu0
        %2809 = vdwg.mxu0
        %2810 = vmatprep.subr.mxu0 0.0
        %2811 = vmatpush1.msra.mxu0 0.0
        %2812 = vmatprep.subr.mxu0 0.0
        %2813 = vmatpush1.msra.mxu0 0.0
        %2814 = vmatprep.subr.mxu0 0.0
        %2815 = vmatpush1.msra.mxu0 0.0
        %2816 = vmatprep.subr.mxu0 0.0
        %2817 = vmatpush1.msra.mxu0 0.0
        %2818 = vmatprep.subr.mxu0 0.0
        %2819 = vmatpush1.msra.mxu0 0.0
        %2820 = vmatprep.subr.mxu0 0.0
        %2821 = vmatpush1.msra.mxu0 0.0
        %2822 = vmatprep.subr.mxu0 0.0
        %2823 = vmatpush1.msra.mxu0 0.0
        %2824 = vmatprep.subr.mxu0 0.0
        %2825 = vmatpush1.msra.mxu0 0.0
        %2826 = vmatprep.subr.mxu0 0.0
        %2827 = vmatpush1.msra.mxu0 0.0
        %2828 = vmatprep.subr.mxu0 0.0
        %2829 = vmatpush1.msra.mxu0 0.0
        %2830 = vmatprep.subr.mxu0 0.0
        %2831 = vmatpush1.msra.mxu0 0.0
        %2832 = vmatprep.subr.mxu0 0.0
        %2833 = vmatpush1.msra.mxu0 0.0
        %2834 = vmatprep.subr.mxu0 0.0
        %2835 = vmatpush1.msra.mxu0 0.0
        %2836 = vmatprep.subr.mxu0 0.0
        %2837 = vmatpush1.msra.mxu0 0.0
        %2838 = vmatprep.subr.mxu0 0.0
        %2839 = vmatpush1.msra.mxu0 0.0
        %2840 = vmatprep.subr.mxu0 0.0
        %v2841 = vand.u32 %v159, 4294901760
        %2842 = vmatpush1.msra.mxu0 %v2841
        %2843 = vmatprep.subr.mxu0 0.0
        %2844 = vmatpush2.msra.mxu0 0.0
        %2845 = vmatprep.subr.mxu0 0.0
        %2846 = vmatpush2.msra.mxu0 0.0
        %2847 = vmatprep.subr.mxu0 0.0
        %2848 = vmatpush2.msra.mxu0 0.0
        %2849 = vmatprep.subr.mxu0 0.0
        %2850 = vmatpush2.msra.mxu0 0.0
        %2851 = vmatprep.subr.mxu0 0.0
        %2852 = vmatpush2.msra.mxu0 0.0
        %2853 = vmatprep.subr.mxu0 0.0
        %2854 = vmatpush2.msra.mxu0 0.0
        %2855 = vmatprep.subr.mxu0 0.0
        %2856 = vmatpush2.msra.mxu0 0.0
        %2857 = vmatprep.subr.mxu0 0.0
        %2858 = vmatpush2.msra.mxu0 0.0
        %2859 = vmatprep.subr.mxu0 0.0
        %2860 = vmatpush2.msra.mxu0 0.0
        %2861 = vmatprep.subr.mxu0 0.0
        %2862 = vmatpush2.msra.mxu0 0.0
        %2863 = vmatprep.subr.mxu0 0.0
        %2864 = vmatpush2.msra.mxu0 0.0
        %2865 = vmatprep.subr.mxu0 0.0
        %2866 = vmatpush2.msra.mxu0 0.0
        %2867 = vmatprep.subr.mxu0 0.0
        %2868 = vmatpush2.msra.mxu0 0.0
        %2869 = vmatprep.subr.mxu0 0.0
        %2870 = vmatpush2.msra.mxu0 0.0
        %2871 = vmatprep.subr.mxu0 0.0
        %2872 = vmatpush2.msra.mxu0 0.0
        %2873 = vmatprep.subr.mxu0 0.0
        %2874 = vmatpush2.msra.mxu0 0.0
        %2875 = vmatprep.mubr.f32.mxu0 0.0
        %v2876 = vand.u32 %v2434, 4294901760
        %2877 = vmatmul.mubr.f32.gmra.mxu0 %v2876
        %v2878 = vpop.f32.mrf.mxu0
        %v2879 = vadd.f32 %v2807, %v2878
        %v2880 = vpop.f32.mrf.mxu0
        %2881 = vdwg.mxu0
        %s2882 = scalar_lea.vmem %s133, 48 [#allocation2]
        %v2883 = vld [vmem:[%s2882] sm:$0xff]
        %v2885 = vsel %vm175, %v2883, 0
        %2887 = vmatprep.subr.mxu0 0.0
        %2888 = vmatpush1.msra.mxu0 0.0
        %2889 = vmatprep.subr.mxu0 0.0
        %2890 = vmatpush1.msra.mxu0 0.0
        %2891 = vmatprep.subr.mxu0 0.0
        %2892 = vmatpush1.msra.mxu0 0.0
        %2893 = vmatprep.subr.mxu0 0.0
        %2894 = vmatpush1.msra.mxu0 0.0
        %2895 = vmatprep.subr.mxu0 0.0
        %2896 = vmatpush1.msra.mxu0 0.0
        %2897 = vmatprep.subr.mxu0 0.0
        %2898 = vmatpush1.msra.mxu0 0.0
        %2899 = vmatprep.subr.mxu0 0.0
        %2900 = vmatpush1.msra.mxu0 0.0
        %2901 = vmatprep.subr.mxu0 0.0
        %2902 = vmatpush1.msra.mxu0 0.0
        %2903 = vmatprep.subr.mxu0 0.0
        %2904 = vmatpush1.msra.mxu0 0.0
        %2905 = vmatprep.subr.mxu0 0.0
        %2906 = vmatpush1.msra.mxu0 0.0
        %2907 = vmatprep.subr.mxu0 0.0
        %2908 = vmatpush1.msra.mxu0 0.0
        %2909 = vmatprep.subr.mxu0 0.0
        %2910 = vmatpush1.msra.mxu0 0.0
        %2911 = vmatprep.subr.mxu0 0.0
        %2912 = vmatpush1.msra.mxu0 0.0
        %2913 = vmatprep.subr.mxu0 0.0
        %2914 = vmatpush1.msra.mxu0 0.0
        %2915 = vmatprep.subr.mxu0 0.0
        %2916 = vmatpush1.msra.mxu0 0.0
        %2917 = vmatprep.subr.mxu0 0.0
        %v2918 = vand.u32 %v167, 4294901760
        %2919 = vmatpush1.msra.mxu0 %v2918
        %2920 = vmatprep.subr.mxu0 0.0
        %2921 = vmatpush2.msra.mxu0 0.0
        %2922 = vmatprep.subr.mxu0 0.0
        %2923 = vmatpush2.msra.mxu0 0.0
        %2924 = vmatprep.subr.mxu0 0.0
        %2925 = vmatpush2.msra.mxu0 0.0
        %2926 = vmatprep.subr.mxu0 0.0
        %2927 = vmatpush2.msra.mxu0 0.0
        %2928 = vmatprep.subr.mxu0 0.0
        %2929 = vmatpush2.msra.mxu0 0.0
        %2930 = vmatprep.subr.mxu0 0.0
        %2931 = vmatpush2.msra.mxu0 0.0
        %2932 = vmatprep.subr.mxu0 0.0
        %2933 = vmatpush2.msra.mxu0 0.0
        %2934 = vmatprep.subr.mxu0 0.0
        %2935 = vmatpush2.msra.mxu0 0.0
        %2936 = vmatprep.subr.mxu0 0.0
        %2937 = vmatpush2.msra.mxu0 0.0
        %2938 = vmatprep.subr.mxu0 0.0
        %2939 = vmatpush2.msra.mxu0 0.0
        %2940 = vmatprep.subr.mxu0 0.0
        %2941 = vmatpush2.msra.mxu0 0.0
        %2942 = vmatprep.subr.mxu0 0.0
        %2943 = vmatpush2.msra.mxu0 0.0
        %2944 = vmatprep.subr.mxu0 0.0
        %2945 = vmatpush2.msra.mxu0 0.0
        %2946 = vmatprep.subr.mxu0 0.0
        %2947 = vmatpush2.msra.mxu0 0.0
        %2948 = vmatprep.subr.mxu0 0.0
        %2949 = vmatpush2.msra.mxu0 0.0
        %2950 = vmatprep.subr.mxu0 0.0
        %2951 = vmatpush2.msra.mxu0 0.0
        %2952 = vmatprep.mubr.f32.mxu0 0.0
        %v2953 = vand.u32 %v2885, 4294901760
        %v2954 = vsub.f32 %v2885, %v2953
        %v2955 = vand.u32 %v2954, 4294901760
        %v2956 = vsub.f32 %v2954, %v2955
        %v2957 = vand.u32 %v2956, 4294901760
        %2958 = vmatmul.mubr.f32.gmra.mxu0 %v2957
        %v2959 = vpop.f32.mrf.mxu0
        %v2960 = vadd.f32 0.0, %v2959
        %v2961 = vpop.f32.mrf.mxu0
        %2962 = vdwg.mxu0
        %2963 = vmatprep.subr.mxu0 0.0
        %2964 = vmatpush1.msra.mxu0 0.0
        %2965 = vmatprep.subr.mxu0 0.0
        %2966 = vmatpush1.msra.mxu0 0.0
        %2967 = vmatprep.subr.mxu0 0.0
        %2968 = vmatpush1.msra.mxu0 0.0
        %2969 = vmatprep.subr.mxu0 0.0
        %2970 = vmatpush1.msra.mxu0 0.0
        %2971 = vmatprep.subr.mxu0 0.0
        %2972 = vmatpush1.msra.mxu0 0.0
        %2973 = vmatprep.subr.mxu0 0.0
        %2974 = vmatpush1.msra.mxu0 0.0
        %2975 = vmatprep.subr.mxu0 0.0
        %2976 = vmatpush1.msra.mxu0 0.0
        %2977 = vmatprep.subr.mxu0 0.0
        %2978 = vmatpush1.msra.mxu0 0.0
        %2979 = vmatprep.subr.mxu0 0.0
        %2980 = vmatpush1.msra.mxu0 0.0
        %2981 = vmatprep.subr.mxu0 0.0
        %2982 = vmatpush1.msra.mxu0 0.0
        %2983 = vmatprep.subr.mxu0 0.0
        %2984 = vmatpush1.msra.mxu0 0.0
        %2985 = vmatprep.subr.mxu0 0.0
        %2986 = vmatpush1.msra.mxu0 0.0
        %2987 = vmatprep.subr.mxu0 0.0
        %2988 = vmatpush1.msra.mxu0 0.0
        %2989 = vmatprep.subr.mxu0 0.0
        %2990 = vmatpush1.msra.mxu0 0.0
        %2991 = vmatprep.subr.mxu0 0.0
        %2992 = vmatpush1.msra.mxu0 0.0
        %2993 = vmatprep.subr.mxu0 0.0
        %v2994 = vand.u32 %v167, 4294901760
        %v2995 = vsub.f32 %v167, %v2994
        %v2996 = vand.u32 %v2995, 4294901760
        %v2997 = vsub.f32 %v2995, %v2996
        %v2998 = vand.u32 %v2997, 4294901760
        %2999 = vmatpush1.msra.mxu0 %v2998
        %3000 = vmatprep.subr.mxu0 0.0
        %3001 = vmatpush2.msra.mxu0 0.0
        %3002 = vmatprep.subr.mxu0 0.0
        %3003 = vmatpush2.msra.mxu0 0.0
        %3004 = vmatprep.subr.mxu0 0.0
        %3005 = vmatpush2.msra.mxu0 0.0
        %3006 = vmatprep.subr.mxu0 0.0
        %3007 = vmatpush2.msra.mxu0 0.0
        %3008 = vmatprep.subr.mxu0 0.0
        %3009 = vmatpush2.msra.mxu0 0.0
        %3010 = vmatprep.subr.mxu0 0.0
        %3011 = vmatpush2.msra.mxu0 0.0
        %3012 = vmatprep.subr.mxu0 0.0
        %3013 = vmatpush2.msra.mxu0 0.0
        %3014 = vmatprep.subr.mxu0 0.0
        %3015 = vmatpush2.msra.mxu0 0.0
        %3016 = vmatprep.subr.mxu0 0.0
        %3017 = vmatpush2.msra.mxu0 0.0
        %3018 = vmatprep.subr.mxu0 0.0
        %3019 = vmatpush2.msra.mxu0 0.0
        %3020 = vmatprep.subr.mxu0 0.0
        %3021 = vmatpush2.msra.mxu0 0.0
        %3022 = vmatprep.subr.mxu0 0.0
        %3023 = vmatpush2.msra.mxu0 0.0
        %3024 = vmatprep.subr.mxu0 0.0
        %3025 = vmatpush2.msra.mxu0 0.0
        %3026 = vmatprep.subr.mxu0 0.0
        %3027 = vmatpush2.msra.mxu0 0.0
        %3028 = vmatprep.subr.mxu0 0.0
        %3029 = vmatpush2.msra.mxu0 0.0
        %3030 = vmatprep.subr.mxu0 0.0
        %3031 = vmatpush2.msra.mxu0 0.0
        %3032 = vmatprep.mubr.f32.mxu0 0.0
        %v3033 = vand.u32 %v2885, 4294901760
        %3034 = vmatmul.mubr.f32.gmra.mxu0 %v3033
        %v3035 = vpop.f32.mrf.mxu0
        %v3036 = vadd.f32 %v2960, %v3035
        %v3037 = vpop.f32.mrf.mxu0
        %3038 = vdwg.mxu0
        %3039 = vmatprep.subr.mxu0 0.0
        %3040 = vmatpush1.msra.mxu0 0.0
        %3041 = vmatprep.subr.mxu0 0.0
        %3042 = vmatpush1.msra.mxu0 0.0
        %3043 = vmatprep.subr.mxu0 0.0
        %3044 = vmatpush1.msra.mxu0 0.0
        %3045 = vmatprep.subr.mxu0 0.0
        %3046 = vmatpush1.msra.mxu0 0.0
        %3047 = vmatprep.subr.mxu0 0.0
        %3048 = vmatpush1.msra.mxu0 0.0
        %3049 = vmatprep.subr.mxu0 0.0
        %3050 = vmatpush1.msra.mxu0 0.0
        %3051 = vmatprep.subr.mxu0 0.0
        %3052 = vmatpush1.msra.mxu0 0.0
        %3053 = vmatprep.subr.mxu0 0.0
        %3054 = vmatpush1.msra.mxu0 0.0
        %3055 = vmatprep.subr.mxu0 0.0
        %3056 = vmatpush1.msra.mxu0 0.0
        %3057 = vmatprep.subr.mxu0 0.0
        %3058 = vmatpush1.msra.mxu0 0.0
        %3059 = vmatprep.subr.mxu0 0.0
        %3060 = vmatpush1.msra.mxu0 0.0
        %3061 = vmatprep.subr.mxu0 0.0
        %3062 = vmatpush1.msra.mxu0 0.0
        %3063 = vmatprep.subr.mxu0 0.0
        %3064 = vmatpush1.msra.mxu0 0.0
        %3065 = vmatprep.subr.mxu0 0.0
        %3066 = vmatpush1.msra.mxu0 0.0
        %3067 = vmatprep.subr.mxu0 0.0
        %3068 = vmatpush1.msra.mxu0 0.0
        %3069 = vmatprep.subr.mxu0 0.0
        %v3070 = vand.u32 %v167, 4294901760
        %v3071 = vsub.f32 %v167, %v3070
        %3072 = vmatpush1.msra.mxu0 %v3071
        %3073 = vmatprep.subr.mxu0 0.0
        %3074 = vmatpush2.msra.mxu0 0.0
        %3075 = vmatprep.subr.mxu0 0.0
        %3076 = vmatpush2.msra.mxu0 0.0
        %3077 = vmatprep.subr.mxu0 0.0
        %3078 = vmatpush2.msra.mxu0 0.0
        %3079 = vmatprep.subr.mxu0 0.0
        %3080 = vmatpush2.msra.mxu0 0.0
        %3081 = vmatprep.subr.mxu0 0.0
        %3082 = vmatpush2.msra.mxu0 0.0
        %3083 = vmatprep.subr.mxu0 0.0
        %3084 = vmatpush2.msra.mxu0 0.0
        %3085 = vmatprep.subr.mxu0 0.0
        %3086 = vmatpush2.msra.mxu0 0.0
        %3087 = vmatprep.subr.mxu0 0.0
        %3088 = vmatpush2.msra.mxu0 0.0
        %3089 = vmatprep.subr.mxu0 0.0
        %3090 = vmatpush2.msra.mxu0 0.0
        %3091 = vmatprep.subr.mxu0 0.0
        %3092 = vmatpush2.msra.mxu0 0.0
        %3093 = vmatprep.subr.mxu0 0.0
        %3094 = vmatpush2.msra.mxu0 0.0
        %3095 = vmatprep.subr.mxu0 0.0
        %3096 = vmatpush2.msra.mxu0 0.0
        %3097 = vmatprep.subr.mxu0 0.0
        %3098 = vmatpush2.msra.mxu0 0.0
        %3099 = vmatprep.subr.mxu0 0.0
        %3100 = vmatpush2.msra.mxu0 0.0
        %3101 = vmatprep.subr.mxu0 0.0
        %3102 = vmatpush2.msra.mxu0 0.0
        %3103 = vmatprep.subr.mxu0 0.0
        %3104 = vmatpush2.msra.mxu0 0.0
        %3105 = vmatprep.mubr.f32.mxu0 0.0
        %v3106 = vand.u32 %v2885, 4294901760
        %v3107 = vsub.f32 %v2885, %v3106
        %3108 = vmatmul.mubr.f32.gmra.mxu0 %v3107
        %v3109 = vpop.f32.mrf.mxu0
        %v3110 = vadd.f32 %v3036, %v3109
        %v3111 = vpop.f32.mrf.mxu0
        %3112 = vdwg.mxu0
        %3113 = vmatprep.subr.mxu0 0.0
        %3114 = vmatpush1.msra.mxu0 0.0
        %3115 = vmatprep.subr.mxu0 0.0
        %3116 = vmatpush1.msra.mxu0 0.0
        %3117 = vmatprep.subr.mxu0 0.0
        %3118 = vmatpush1.msra.mxu0 0.0
        %3119 = vmatprep.subr.mxu0 0.0
        %3120 = vmatpush1.msra.mxu0 0.0
        %3121 = vmatprep.subr.mxu0 0.0
        %3122 = vmatpush1.msra.mxu0 0.0
        %3123 = vmatprep.subr.mxu0 0.0
        %3124 = vmatpush1.msra.mxu0 0.0
        %3125 = vmatprep.subr.mxu0 0.0
        %3126 = vmatpush1.msra.mxu0 0.0
        %3127 = vmatprep.subr.mxu0 0.0
        %3128 = vmatpush1.msra.mxu0 0.0
        %3129 = vmatprep.subr.mxu0 0.0
        %3130 = vmatpush1.msra.mxu0 0.0
        %3131 = vmatprep.subr.mxu0 0.0
        %3132 = vmatpush1.msra.mxu0 0.0
        %3133 = vmatprep.subr.mxu0 0.0
        %3134 = vmatpush1.msra.mxu0 0.0
        %3135 = vmatprep.subr.mxu0 0.0
        %3136 = vmatpush1.msra.mxu0 0.0
        %3137 = vmatprep.subr.mxu0 0.0
        %3138 = vmatpush1.msra.mxu0 0.0
        %3139 = vmatprep.subr.mxu0 0.0
        %3140 = vmatpush1.msra.mxu0 0.0
        %3141 = vmatprep.subr.mxu0 0.0
        %3142 = vmatpush1.msra.mxu0 0.0
        %3143 = vmatprep.subr.mxu0 0.0
        %v3144 = vand.u32 %v167, 4294901760
        %3145 = vmatpush1.msra.mxu0 %v3144
        %3146 = vmatprep.subr.mxu0 0.0
        %3147 = vmatpush2.msra.mxu0 0.0
        %3148 = vmatprep.subr.mxu0 0.0
        %3149 = vmatpush2.msra.mxu0 0.0
        %3150 = vmatprep.subr.mxu0 0.0
        %3151 = vmatpush2.msra.mxu0 0.0
        %3152 = vmatprep.subr.mxu0 0.0
        %3153 = vmatpush2.msra.mxu0 0.0
        %3154 = vmatprep.subr.mxu0 0.0
        %3155 = vmatpush2.msra.mxu0 0.0
        %3156 = vmatprep.subr.mxu0 0.0
        %3157 = vmatpush2.msra.mxu0 0.0
        %3158 = vmatprep.subr.mxu0 0.0
        %3159 = vmatpush2.msra.mxu0 0.0
        %3160 = vmatprep.subr.mxu0 0.0
        %3161 = vmatpush2.msra.mxu0 0.0
        %3162 = vmatprep.subr.mxu0 0.0
        %3163 = vmatpush2.msra.mxu0 0.0
        %3164 = vmatprep.subr.mxu0 0.0
        %3165 = vmatpush2.msra.mxu0 0.0
        %3166 = vmatprep.subr.mxu0 0.0
        %3167 = vmatpush2.msra.mxu0 0.0
        %3168 = vmatprep.subr.mxu0 0.0
        %3169 = vmatpush2.msra.mxu0 0.0
        %3170 = vmatprep.subr.mxu0 0.0
        %3171 = vmatpush2.msra.mxu0 0.0
        %3172 = vmatprep.subr.mxu0 0.0
        %3173 = vmatpush2.msra.mxu0 0.0
        %3174 = vmatprep.subr.mxu0 0.0
        %3175 = vmatpush2.msra.mxu0 0.0
        %3176 = vmatprep.subr.mxu0 0.0
        %3177 = vmatpush2.msra.mxu0 0.0
        %3178 = vmatprep.mubr.f32.mxu0 0.0
        %v3179 = vand.u32 %v2885, 4294901760
        %v3180 = vsub.f32 %v2885, %v3179
        %v3181 = vand.u32 %v3180, 4294901760
        %3182 = vmatmul.mubr.f32.gmra.mxu0 %v3181
        %v3183 = vpop.f32.mrf.mxu0
        %v3184 = vadd.f32 %v3110, %v3183
        %v3185 = vpop.f32.mrf.mxu0
        %3186 = vdwg.mxu0
        %3187 = vmatprep.subr.mxu0 0.0
        %3188 = vmatpush1.msra.mxu0 0.0
        %3189 = vmatprep.subr.mxu0 0.0
        %3190 = vmatpush1.msra.mxu0 0.0
        %3191 = vmatprep.subr.mxu0 0.0
        %3192 = vmatpush1.msra.mxu0 0.0
        %3193 = vmatprep.subr.mxu0 0.0
        %3194 = vmatpush1.msra.mxu0 0.0
        %3195 = vmatprep.subr.mxu0 0.0
        %3196 = vmatpush1.msra.mxu0 0.0
        %3197 = vmatprep.subr.mxu0 0.0
        %3198 = vmatpush1.msra.mxu0 0.0
        %3199 = vmatprep.subr.mxu0 0.0
        %3200 = vmatpush1.msra.mxu0 0.0
        %3201 = vmatprep.subr.mxu0 0.0
        %3202 = vmatpush1.msra.mxu0 0.0
        %3203 = vmatprep.subr.mxu0 0.0
        %3204 = vmatpush1.msra.mxu0 0.0
        %3205 = vmatprep.subr.mxu0 0.0
        %3206 = vmatpush1.msra.mxu0 0.0
        %3207 = vmatprep.subr.mxu0 0.0
        %3208 = vmatpush1.msra.mxu0 0.0
        %3209 = vmatprep.subr.mxu0 0.0
        %3210 = vmatpush1.msra.mxu0 0.0
        %3211 = vmatprep.subr.mxu0 0.0
        %3212 = vmatpush1.msra.mxu0 0.0
        %3213 = vmatprep.subr.mxu0 0.0
        %3214 = vmatpush1.msra.mxu0 0.0
        %3215 = vmatprep.subr.mxu0 0.0
        %3216 = vmatpush1.msra.mxu0 0.0
        %3217 = vmatprep.subr.mxu0 0.0
        %v3218 = vand.u32 %v167, 4294901760
        %v3219 = vsub.f32 %v167, %v3218
        %v3220 = vand.u32 %v3219, 4294901760
        %3221 = vmatpush1.msra.mxu0 %v3220
        %3222 = vmatprep.subr.mxu0 0.0
        %3223 = vmatpush2.msra.mxu0 0.0
        %3224 = vmatprep.subr.mxu0 0.0
        %3225 = vmatpush2.msra.mxu0 0.0
        %3226 = vmatprep.subr.mxu0 0.0
        %3227 = vmatpush2.msra.mxu0 0.0
        %3228 = vmatprep.subr.mxu0 0.0
        %3229 = vmatpush2.msra.mxu0 0.0
        %3230 = vmatprep.subr.mxu0 0.0
        %3231 = vmatpush2.msra.mxu0 0.0
        %3232 = vmatprep.subr.mxu0 0.0
        %3233 = vmatpush2.msra.mxu0 0.0
        %3234 = vmatprep.subr.mxu0 0.0
        %3235 = vmatpush2.msra.mxu0 0.0
        %3236 = vmatprep.subr.mxu0 0.0
        %3237 = vmatpush2.msra.mxu0 0.0
        %3238 = vmatprep.subr.mxu0 0.0
        %3239 = vmatpush2.msra.mxu0 0.0
        %3240 = vmatprep.subr.mxu0 0.0
        %3241 = vmatpush2.msra.mxu0 0.0
        %3242 = vmatprep.subr.mxu0 0.0
        %3243 = vmatpush2.msra.mxu0 0.0
        %3244 = vmatprep.subr.mxu0 0.0
        %3245 = vmatpush2.msra.mxu0 0.0
        %3246 = vmatprep.subr.mxu0 0.0
        %3247 = vmatpush2.msra.mxu0 0.0
        %3248 = vmatprep.subr.mxu0 0.0
        %3249 = vmatpush2.msra.mxu0 0.0
        %3250 = vmatprep.subr.mxu0 0.0
        %3251 = vmatpush2.msra.mxu0 0.0
        %3252 = vmatprep.subr.mxu0 0.0
        %3253 = vmatpush2.msra.mxu0 0.0
        %3254 = vmatprep.mubr.f32.mxu0 0.0
        %v3255 = vand.u32 %v2885, 4294901760
        %3256 = vmatmul.mubr.f32.gmra.mxu0 %v3255
        %v3257 = vpop.f32.mrf.mxu0
        %v3258 = vadd.f32 %v3184, %v3257
        %v3259 = vpop.f32.mrf.mxu0
        %3260 = vdwg.mxu0
        %3261 = vmatprep.subr.mxu0 0.0
        %3262 = vmatpush1.msra.mxu0 0.0
        %3263 = vmatprep.subr.mxu0 0.0
        %3264 = vmatpush1.msra.mxu0 0.0
        %3265 = vmatprep.subr.mxu0 0.0
        %3266 = vmatpush1.msra.mxu0 0.0
        %3267 = vmatprep.subr.mxu0 0.0
        %3268 = vmatpush1.msra.mxu0 0.0
        %3269 = vmatprep.subr.mxu0 0.0
        %3270 = vmatpush1.msra.mxu0 0.0
        %3271 = vmatprep.subr.mxu0 0.0
        %3272 = vmatpush1.msra.mxu0 0.0
        %3273 = vmatprep.subr.mxu0 0.0
        %3274 = vmatpush1.msra.mxu0 0.0
        %3275 = vmatprep.subr.mxu0 0.0
        %3276 = vmatpush1.msra.mxu0 0.0
        %3277 = vmatprep.subr.mxu0 0.0
        %3278 = vmatpush1.msra.mxu0 0.0
        %3279 = vmatprep.subr.mxu0 0.0
        %3280 = vmatpush1.msra.mxu0 0.0
        %3281 = vmatprep.subr.mxu0 0.0
        %3282 = vmatpush1.msra.mxu0 0.0
        %3283 = vmatprep.subr.mxu0 0.0
        %3284 = vmatpush1.msra.mxu0 0.0
        %3285 = vmatprep.subr.mxu0 0.0
        %3286 = vmatpush1.msra.mxu0 0.0
        %3287 = vmatprep.subr.mxu0 0.0
        %3288 = vmatpush1.msra.mxu0 0.0
        %3289 = vmatprep.subr.mxu0 0.0
        %3290 = vmatpush1.msra.mxu0 0.0
        %3291 = vmatprep.subr.mxu0 0.0
        %v3292 = vand.u32 %v167, 4294901760
        %3293 = vmatpush1.msra.mxu0 %v3292
        %3294 = vmatprep.subr.mxu0 0.0
        %3295 = vmatpush2.msra.mxu0 0.0
        %3296 = vmatprep.subr.mxu0 0.0
        %3297 = vmatpush2.msra.mxu0 0.0
        %3298 = vmatprep.subr.mxu0 0.0
        %3299 = vmatpush2.msra.mxu0 0.0
        %3300 = vmatprep.subr.mxu0 0.0
        %3301 = vmatpush2.msra.mxu0 0.0
        %3302 = vmatprep.subr.mxu0 0.0
        %3303 = vmatpush2.msra.mxu0 0.0
        %3304 = vmatprep.subr.mxu0 0.0
        %3305 = vmatpush2.msra.mxu0 0.0
        %3306 = vmatprep.subr.mxu0 0.0
        %3307 = vmatpush2.msra.mxu0 0.0
        %3308 = vmatprep.subr.mxu0 0.0
        %3309 = vmatpush2.msra.mxu0 0.0
        %3310 = vmatprep.subr.mxu0 0.0
        %3311 = vmatpush2.msra.mxu0 0.0
        %3312 = vmatprep.subr.mxu0 0.0
        %3313 = vmatpush2.msra.mxu0 0.0
        %3314 = vmatprep.subr.mxu0 0.0
        %3315 = vmatpush2.msra.mxu0 0.0
        %3316 = vmatprep.subr.mxu0 0.0
        %3317 = vmatpush2.msra.mxu0 0.0
        %3318 = vmatprep.subr.mxu0 0.0
        %3319 = vmatpush2.msra.mxu0 0.0
        %3320 = vmatprep.subr.mxu0 0.0
        %3321 = vmatpush2.msra.mxu0 0.0
        %3322 = vmatprep.subr.mxu0 0.0
        %3323 = vmatpush2.msra.mxu0 0.0
        %3324 = vmatprep.subr.mxu0 0.0
        %3325 = vmatpush2.msra.mxu0 0.0
        %3326 = vmatprep.mubr.f32.mxu0 0.0
        %v3327 = vand.u32 %v2885, 4294901760
        %3328 = vmatmul.mubr.f32.gmra.mxu0 %v3327
        %v3329 = vpop.f32.mrf.mxu0
        %v3330 = vadd.f32 %v3258, %v3329
        %v3331 = vpop.f32.mrf.mxu0
        %3332 = vdwg.mxu0
        %v3333 = vadd.f32 %v2879, %v3330
        %s3334 = scalar_lea.vmem %s133, 56 [#allocation2]
        %v3335 = vld [vmem:[%s3334] sm:$0xff]
        %v3337 = vsel %vm175, %v3335, 0
        %3339 = vmatprep.subr.mxu0 0.0
        %3340 = vmatpush1.msra.mxu0 0.0
        %3341 = vmatprep.subr.mxu0 0.0
        %3342 = vmatpush1.msra.mxu0 0.0
        %3343 = vmatprep.subr.mxu0 0.0
        %3344 = vmatpush1.msra.mxu0 0.0
        %3345 = vmatprep.subr.mxu0 0.0
        %3346 = vmatpush1.msra.mxu0 0.0
        %3347 = vmatprep.subr.mxu0 0.0
        %3348 = vmatpush1.msra.mxu0 0.0
        %3349 = vmatprep.subr.mxu0 0.0
        %3350 = vmatpush1.msra.mxu0 0.0
        %3351 = vmatprep.subr.mxu0 0.0
        %3352 = vmatpush1.msra.mxu0 0.0
        %3353 = vmatprep.subr.mxu0 0.0
        %3354 = vmatpush1.msra.mxu0 0.0
        %3355 = vmatprep.subr.mxu0 0.0
        %3356 = vmatpush1.msra.mxu0 0.0
        %3357 = vmatprep.subr.mxu0 0.0
        %3358 = vmatpush1.msra.mxu0 0.0
        %3359 = vmatprep.subr.mxu0 0.0
        %3360 = vmatpush1.msra.mxu0 0.0
        %3361 = vmatprep.subr.mxu0 0.0
        %3362 = vmatpush1.msra.mxu0 0.0
        %3363 = vmatprep.subr.mxu0 0.0
        %3364 = vmatpush1.msra.mxu0 0.0
        %3365 = vmatprep.subr.mxu0 0.0
        %3366 = vmatpush1.msra.mxu0 0.0
        %3367 = vmatprep.subr.mxu0 0.0
        %3368 = vmatpush1.msra.mxu0 0.0
        %3369 = vmatprep.subr.mxu0 0.0
        %v3370 = vand.u32 %v171, 4294901760
        %3371 = vmatpush1.msra.mxu0 %v3370
        %3372 = vmatprep.subr.mxu0 0.0
        %3373 = vmatpush2.msra.mxu0 0.0
        %3374 = vmatprep.subr.mxu0 0.0
        %3375 = vmatpush2.msra.mxu0 0.0
        %3376 = vmatprep.subr.mxu0 0.0
        %3377 = vmatpush2.msra.mxu0 0.0
        %3378 = vmatprep.subr.mxu0 0.0
        %3379 = vmatpush2.msra.mxu0 0.0
        %3380 = vmatprep.subr.mxu0 0.0
        %3381 = vmatpush2.msra.mxu0 0.0
        %3382 = vmatprep.subr.mxu0 0.0
        %3383 = vmatpush2.msra.mxu0 0.0
        %3384 = vmatprep.subr.mxu0 0.0
        %3385 = vmatpush2.msra.mxu0 0.0
        %3386 = vmatprep.subr.mxu0 0.0
        %3387 = vmatpush2.msra.mxu0 0.0
        %3388 = vmatprep.subr.mxu0 0.0
        %3389 = vmatpush2.msra.mxu0 0.0
        %3390 = vmatprep.subr.mxu0 0.0
        %3391 = vmatpush2.msra.mxu0 0.0
        %3392 = vmatprep.subr.mxu0 0.0
        %3393 = vmatpush2.msra.mxu0 0.0
        %3394 = vmatprep.subr.mxu0 0.0
        %3395 = vmatpush2.msra.mxu0 0.0
        %3396 = vmatprep.subr.mxu0 0.0
        %3397 = vmatpush2.msra.mxu0 0.0
        %3398 = vmatprep.subr.mxu0 0.0
        %3399 = vmatpush2.msra.mxu0 0.0
        %3400 = vmatprep.subr.mxu0 0.0
        %3401 = vmatpush2.msra.mxu0 0.0
        %3402 = vmatprep.subr.mxu0 0.0
        %3403 = vmatpush2.msra.mxu0 0.0
        %3404 = vmatprep.mubr.f32.mxu0 0.0
        %v3405 = vand.u32 %v3337, 4294901760
        %v3406 = vsub.f32 %v3337, %v3405
        %v3407 = vand.u32 %v3406, 4294901760
        %v3408 = vsub.f32 %v3406, %v3407
        %v3409 = vand.u32 %v3408, 4294901760
        %3410 = vmatmul.mubr.f32.gmra.mxu0 %v3409
        %v3411 = vpop.f32.mrf.mxu0
        %v3412 = vadd.f32 0.0, %v3411
        %v3413 = vpop.f32.mrf.mxu0
        %3414 = vdwg.mxu0
        %3415 = vmatprep.subr.mxu0 0.0
        %3416 = vmatpush1.msra.mxu0 0.0
        %3417 = vmatprep.subr.mxu0 0.0
        %3418 = vmatpush1.msra.mxu0 0.0
        %3419 = vmatprep.subr.mxu0 0.0
        %3420 = vmatpush1.msra.mxu0 0.0
        %3421 = vmatprep.subr.mxu0 0.0
        %3422 = vmatpush1.msra.mxu0 0.0
        %3423 = vmatprep.subr.mxu0 0.0
        %3424 = vmatpush1.msra.mxu0 0.0
        %3425 = vmatprep.subr.mxu0 0.0
        %3426 = vmatpush1.msra.mxu0 0.0
        %3427 = vmatprep.subr.mxu0 0.0
        %3428 = vmatpush1.msra.mxu0 0.0
        %3429 = vmatprep.subr.mxu0 0.0
        %3430 = vmatpush1.msra.mxu0 0.0
        %3431 = vmatprep.subr.mxu0 0.0
        %3432 = vmatpush1.msra.mxu0 0.0
        %3433 = vmatprep.subr.mxu0 0.0
        %3434 = vmatpush1.msra.mxu0 0.0
        %3435 = vmatprep.subr.mxu0 0.0
        %3436 = vmatpush1.msra.mxu0 0.0
        %3437 = vmatprep.subr.mxu0 0.0
        %3438 = vmatpush1.msra.mxu0 0.0
        %3439 = vmatprep.subr.mxu0 0.0
        %3440 = vmatpush1.msra.mxu0 0.0
        %3441 = vmatprep.subr.mxu0 0.0
        %3442 = vmatpush1.msra.mxu0 0.0
        %3443 = vmatprep.subr.mxu0 0.0
        %3444 = vmatpush1.msra.mxu0 0.0
        %3445 = vmatprep.subr.mxu0 0.0
        %v3446 = vand.u32 %v171, 4294901760
        %v3447 = vsub.f32 %v171, %v3446
        %v3448 = vand.u32 %v3447, 4294901760
        %v3449 = vsub.f32 %v3447, %v3448
        %v3450 = vand.u32 %v3449, 4294901760
        %3451 = vmatpush1.msra.mxu0 %v3450
        %3452 = vmatprep.subr.mxu0 0.0
        %3453 = vmatpush2.msra.mxu0 0.0
        %3454 = vmatprep.subr.mxu0 0.0
        %3455 = vmatpush2.msra.mxu0 0.0
        %3456 = vmatprep.subr.mxu0 0.0
        %3457 = vmatpush2.msra.mxu0 0.0
        %3458 = vmatprep.subr.mxu0 0.0
        %3459 = vmatpush2.msra.mxu0 0.0
        %3460 = vmatprep.subr.mxu0 0.0
        %3461 = vmatpush2.msra.mxu0 0.0
        %3462 = vmatprep.subr.mxu0 0.0
        %3463 = vmatpush2.msra.mxu0 0.0
        %3464 = vmatprep.subr.mxu0 0.0
        %3465 = vmatpush2.msra.mxu0 0.0
        %3466 = vmatprep.subr.mxu0 0.0
        %3467 = vmatpush2.msra.mxu0 0.0
        %3468 = vmatprep.subr.mxu0 0.0
        %3469 = vmatpush2.msra.mxu0 0.0
        %3470 = vmatprep.subr.mxu0 0.0
        %3471 = vmatpush2.msra.mxu0 0.0
        %3472 = vmatprep.subr.mxu0 0.0
        %3473 = vmatpush2.msra.mxu0 0.0
        %3474 = vmatprep.subr.mxu0 0.0
        %3475 = vmatpush2.msra.mxu0 0.0
        %3476 = vmatprep.subr.mxu0 0.0
        %3477 = vmatpush2.msra.mxu0 0.0
        %3478 = vmatprep.subr.mxu0 0.0
        %3479 = vmatpush2.msra.mxu0 0.0
        %3480 = vmatprep.subr.mxu0 0.0
        %3481 = vmatpush2.msra.mxu0 0.0
        %3482 = vmatprep.subr.mxu0 0.0
        %3483 = vmatpush2.msra.mxu0 0.0
        %3484 = vmatprep.mubr.f32.mxu0 0.0
        %v3485 = vand.u32 %v3337, 4294901760
        %3486 = vmatmul.mubr.f32.gmra.mxu0 %v3485
        %v3487 = vpop.f32.mrf.mxu0
        %v3488 = vadd.f32 %v3412, %v3487
        %v3489 = vpop.f32.mrf.mxu0
        %3490 = vdwg.mxu0
        %3491 = vmatprep.subr.mxu0 0.0
        %3492 = vmatpush1.msra.mxu0 0.0
        %3493 = vmatprep.subr.mxu0 0.0
        %3494 = vmatpush1.msra.mxu0 0.0
        %3495 = vmatprep.subr.mxu0 0.0
        %3496 = vmatpush1.msra.mxu0 0.0
        %3497 = vmatprep.subr.mxu0 0.0
        %3498 = vmatpush1.msra.mxu0 0.0
        %3499 = vmatprep.subr.mxu0 0.0
        %3500 = vmatpush1.msra.mxu0 0.0
        %3501 = vmatprep.subr.mxu0 0.0
        %3502 = vmatpush1.msra.mxu0 0.0
        %3503 = vmatprep.subr.mxu0 0.0
        %3504 = vmatpush1.msra.mxu0 0.0
        %3505 = vmatprep.subr.mxu0 0.0
        %3506 = vmatpush1.msra.mxu0 0.0
        %3507 = vmatprep.subr.mxu0 0.0
        %3508 = vmatpush1.msra.mxu0 0.0
        %3509 = vmatprep.subr.mxu0 0.0
        %3510 = vmatpush1.msra.mxu0 0.0
        %3511 = vmatprep.subr.mxu0 0.0
        %3512 = vmatpush1.msra.mxu0 0.0
        %3513 = vmatprep.subr.mxu0 0.0
        %3514 = vmatpush1.msra.mxu0 0.0
        %3515 = vmatprep.subr.mxu0 0.0
        %3516 = vmatpush1.msra.mxu0 0.0
        %3517 = vmatprep.subr.mxu0 0.0
        %3518 = vmatpush1.msra.mxu0 0.0
        %3519 = vmatprep.subr.mxu0 0.0
        %3520 = vmatpush1.msra.mxu0 0.0
        %3521 = vmatprep.subr.mxu0 0.0
        %v3522 = vand.u32 %v171, 4294901760
        %v3523 = vsub.f32 %v171, %v3522
        %3524 = vmatpush1.msra.mxu0 %v3523
        %3525 = vmatprep.subr.mxu0 0.0
        %3526 = vmatpush2.msra.mxu0 0.0
        %3527 = vmatprep.subr.mxu0 0.0
        %3528 = vmatpush2.msra.mxu0 0.0
        %3529 = vmatprep.subr.mxu0 0.0
        %3530 = vmatpush2.msra.mxu0 0.0
        %3531 = vmatprep.subr.mxu0 0.0
        %3532 = vmatpush2.msra.mxu0 0.0
        %3533 = vmatprep.subr.mxu0 0.0
        %3534 = vmatpush2.msra.mxu0 0.0
        %3535 = vmatprep.subr.mxu0 0.0
        %3536 = vmatpush2.msra.mxu0 0.0
        %3537 = vmatprep.subr.mxu0 0.0
        %3538 = vmatpush2.msra.mxu0 0.0
        %3539 = vmatprep.subr.mxu0 0.0
        %3540 = vmatpush2.msra.mxu0 0.0
        %3541 = vmatprep.subr.mxu0 0.0
        %3542 = vmatpush2.msra.mxu0 0.0
        %3543 = vmatprep.subr.mxu0 0.0
        %3544 = vmatpush2.msra.mxu0 0.0
        %3545 = vmatprep.subr.mxu0 0.0
        %3546 = vmatpush2.msra.mxu0 0.0
        %3547 = vmatprep.subr.mxu0 0.0
        %3548 = vmatpush2.msra.mxu0 0.0
        %3549 = vmatprep.subr.mxu0 0.0
        %3550 = vmatpush2.msra.mxu0 0.0
        %3551 = vmatprep.subr.mxu0 0.0
        %3552 = vmatpush2.msra.mxu0 0.0
        %3553 = vmatprep.subr.mxu0 0.0
        %3554 = vmatpush2.msra.mxu0 0.0
        %3555 = vmatprep.subr.mxu0 0.0
        %3556 = vmatpush2.msra.mxu0 0.0
        %3557 = vmatprep.mubr.f32.mxu0 0.0
        %v3558 = vand.u32 %v3337, 4294901760
        %v3559 = vsub.f32 %v3337, %v3558
        %3560 = vmatmul.mubr.f32.gmra.mxu0 %v3559
        %v3561 = vpop.f32.mrf.mxu0
        %v3562 = vadd.f32 %v3488, %v3561
        %v3563 = vpop.f32.mrf.mxu0
        %3564 = vdwg.mxu0
        %3565 = vmatprep.subr.mxu0 0.0
        %3566 = vmatpush1.msra.mxu0 0.0
        %3567 = vmatprep.subr.mxu0 0.0
        %3568 = vmatpush1.msra.mxu0 0.0
        %3569 = vmatprep.subr.mxu0 0.0
        %3570 = vmatpush1.msra.mxu0 0.0
        %3571 = vmatprep.subr.mxu0 0.0
        %3572 = vmatpush1.msra.mxu0 0.0
        %3573 = vmatprep.subr.mxu0 0.0
        %3574 = vmatpush1.msra.mxu0 0.0
        %3575 = vmatprep.subr.mxu0 0.0
        %3576 = vmatpush1.msra.mxu0 0.0
        %3577 = vmatprep.subr.mxu0 0.0
        %3578 = vmatpush1.msra.mxu0 0.0
        %3579 = vmatprep.subr.mxu0 0.0
        %3580 = vmatpush1.msra.mxu0 0.0
        %3581 = vmatprep.subr.mxu0 0.0
        %3582 = vmatpush1.msra.mxu0 0.0
        %3583 = vmatprep.subr.mxu0 0.0
        %3584 = vmatpush1.msra.mxu0 0.0
        %3585 = vmatprep.subr.mxu0 0.0
        %3586 = vmatpush1.msra.mxu0 0.0
        %3587 = vmatprep.subr.mxu0 0.0
        %3588 = vmatpush1.msra.mxu0 0.0
        %3589 = vmatprep.subr.mxu0 0.0
        %3590 = vmatpush1.msra.mxu0 0.0
        %3591 = vmatprep.subr.mxu0 0.0
        %3592 = vmatpush1.msra.mxu0 0.0
        %3593 = vmatprep.subr.mxu0 0.0
        %3594 = vmatpush1.msra.mxu0 0.0
        %3595 = vmatprep.subr.mxu0 0.0
        %v3596 = vand.u32 %v171, 4294901760
        %3597 = vmatpush1.msra.mxu0 %v3596
        %3598 = vmatprep.subr.mxu0 0.0
        %3599 = vmatpush2.msra.mxu0 0.0
        %3600 = vmatprep.subr.mxu0 0.0
        %3601 = vmatpush2.msra.mxu0 0.0
        %3602 = vmatprep.subr.mxu0 0.0
        %3603 = vmatpush2.msra.mxu0 0.0
        %3604 = vmatprep.subr.mxu0 0.0
        %3605 = vmatpush2.msra.mxu0 0.0
        %3606 = vmatprep.subr.mxu0 0.0
        %3607 = vmatpush2.msra.mxu0 0.0
        %3608 = vmatprep.subr.mxu0 0.0
        %3609 = vmatpush2.msra.mxu0 0.0
        %3610 = vmatprep.subr.mxu0 0.0
        %3611 = vmatpush2.msra.mxu0 0.0
        %3612 = vmatprep.subr.mxu0 0.0
        %3613 = vmatpush2.msra.mxu0 0.0
        %3614 = vmatprep.subr.mxu0 0.0
        %3615 = vmatpush2.msra.mxu0 0.0
        %3616 = vmatprep.subr.mxu0 0.0
        %3617 = vmatpush2.msra.mxu0 0.0
        %3618 = vmatprep.subr.mxu0 0.0
        %3619 = vmatpush2.msra.mxu0 0.0
        %3620 = vmatprep.subr.mxu0 0.0
        %3621 = vmatpush2.msra.mxu0 0.0
        %3622 = vmatprep.subr.mxu0 0.0
        %3623 = vmatpush2.msra.mxu0 0.0
        %3624 = vmatprep.subr.mxu0 0.0
        %3625 = vmatpush2.msra.mxu0 0.0
        %3626 = vmatprep.subr.mxu0 0.0
        %3627 = vmatpush2.msra.mxu0 0.0
        %3628 = vmatprep.subr.mxu0 0.0
        %3629 = vmatpush2.msra.mxu0 0.0
        %3630 = vmatprep.mubr.f32.mxu0 0.0
        %v3631 = vand.u32 %v3337, 4294901760
        %v3632 = vsub.f32 %v3337, %v3631
        %v3633 = vand.u32 %v3632, 4294901760
        %3634 = vmatmul.mubr.f32.gmra.mxu0 %v3633
        %v3635 = vpop.f32.mrf.mxu0
        %v3636 = vadd.f32 %v3562, %v3635
        %v3637 = vpop.f32.mrf.mxu0
        %3638 = vdwg.mxu0
        %3639 = vmatprep.subr.mxu0 0.0
        %3640 = vmatpush1.msra.mxu0 0.0
        %3641 = vmatprep.subr.mxu0 0.0
        %3642 = vmatpush1.msra.mxu0 0.0
        %3643 = vmatprep.subr.mxu0 0.0
        %3644 = vmatpush1.msra.mxu0 0.0
        %3645 = vmatprep.subr.mxu0 0.0
        %3646 = vmatpush1.msra.mxu0 0.0
        %3647 = vmatprep.subr.mxu0 0.0
        %3648 = vmatpush1.msra.mxu0 0.0
        %3649 = vmatprep.subr.mxu0 0.0
        %3650 = vmatpush1.msra.mxu0 0.0
        %3651 = vmatprep.subr.mxu0 0.0
        %3652 = vmatpush1.msra.mxu0 0.0
        %3653 = vmatprep.subr.mxu0 0.0
        %3654 = vmatpush1.msra.mxu0 0.0
        %3655 = vmatprep.subr.mxu0 0.0
        %3656 = vmatpush1.msra.mxu0 0.0
        %3657 = vmatprep.subr.mxu0 0.0
        %3658 = vmatpush1.msra.mxu0 0.0
        %3659 = vmatprep.subr.mxu0 0.0
        %3660 = vmatpush1.msra.mxu0 0.0
        %3661 = vmatprep.subr.mxu0 0.0
        %3662 = vmatpush1.msra.mxu0 0.0
        %3663 = vmatprep.subr.mxu0 0.0
        %3664 = vmatpush1.msra.mxu0 0.0
        %3665 = vmatprep.subr.mxu0 0.0
        %3666 = vmatpush1.msra.mxu0 0.0
        %3667 = vmatprep.subr.mxu0 0.0
        %3668 = vmatpush1.msra.mxu0 0.0
        %3669 = vmatprep.subr.mxu0 0.0
        %v3670 = vand.u32 %v171, 4294901760
        %v3671 = vsub.f32 %v171, %v3670
        %v3672 = vand.u32 %v3671, 4294901760
        %3673 = vmatpush1.msra.mxu0 %v3672
        %3674 = vmatprep.subr.mxu0 0.0
        %3675 = vmatpush2.msra.mxu0 0.0
        %3676 = vmatprep.subr.mxu0 0.0
        %3677 = vmatpush2.msra.mxu0 0.0
        %3678 = vmatprep.subr.mxu0 0.0
        %3679 = vmatpush2.msra.mxu0 0.0
        %3680 = vmatprep.subr.mxu0 0.0
        %3681 = vmatpush2.msra.mxu0 0.0
        %3682 = vmatprep.subr.mxu0 0.0
        %3683 = vmatpush2.msra.mxu0 0.0
        %3684 = vmatprep.subr.mxu0 0.0
        %3685 = vmatpush2.msra.mxu0 0.0
        %3686 = vmatprep.subr.mxu0 0.0
        %3687 = vmatpush2.msra.mxu0 0.0
        %3688 = vmatprep.subr.mxu0 0.0
        %3689 = vmatpush2.msra.mxu0 0.0
        %3690 = vmatprep.subr.mxu0 0.0
        %3691 = vmatpush2.msra.mxu0 0.0
        %3692 = vmatprep.subr.mxu0 0.0
        %3693 = vmatpush2.msra.mxu0 0.0
        %3694 = vmatprep.subr.mxu0 0.0
        %3695 = vmatpush2.msra.mxu0 0.0
        %3696 = vmatprep.subr.mxu0 0.0
        %3697 = vmatpush2.msra.mxu0 0.0
        %3698 = vmatprep.subr.mxu0 0.0
        %3699 = vmatpush2.msra.mxu0 0.0
        %3700 = vmatprep.subr.mxu0 0.0
        %3701 = vmatpush2.msra.mxu0 0.0
        %3702 = vmatprep.subr.mxu0 0.0
        %3703 = vmatpush2.msra.mxu0 0.0
        %3704 = vmatprep.subr.mxu0 0.0
        %3705 = vmatpush2.msra.mxu0 0.0
        %3706 = vmatprep.mubr.f32.mxu0 0.0
        %v3707 = vand.u32 %v3337, 4294901760
        %3708 = vmatmul.mubr.f32.gmra.mxu0 %v3707
        %v3709 = vpop.f32.mrf.mxu0
        %v3710 = vadd.f32 %v3636, %v3709
        %v3711 = vpop.f32.mrf.mxu0
        %3712 = vdwg.mxu0
        %3713 = vmatprep.subr.mxu0 0.0
        %3714 = vmatpush1.msra.mxu0 0.0
        %3715 = vmatprep.subr.mxu0 0.0
        %3716 = vmatpush1.msra.mxu0 0.0
        %3717 = vmatprep.subr.mxu0 0.0
        %3718 = vmatpush1.msra.mxu0 0.0
        %3719 = vmatprep.subr.mxu0 0.0
        %3720 = vmatpush1.msra.mxu0 0.0
        %3721 = vmatprep.subr.mxu0 0.0
        %3722 = vmatpush1.msra.mxu0 0.0
        %3723 = vmatprep.subr.mxu0 0.0
        %3724 = vmatpush1.msra.mxu0 0.0
        %3725 = vmatprep.subr.mxu0 0.0
        %3726 = vmatpush1.msra.mxu0 0.0
        %3727 = vmatprep.subr.mxu0 0.0
        %3728 = vmatpush1.msra.mxu0 0.0
        %3729 = vmatprep.subr.mxu0 0.0
        %3730 = vmatpush1.msra.mxu0 0.0
        %3731 = vmatprep.subr.mxu0 0.0
        %3732 = vmatpush1.msra.mxu0 0.0
        %3733 = vmatprep.subr.mxu0 0.0
        %3734 = vmatpush1.msra.mxu0 0.0
        %3735 = vmatprep.subr.mxu0 0.0
        %3736 = vmatpush1.msra.mxu0 0.0
        %3737 = vmatprep.subr.mxu0 0.0
        %3738 = vmatpush1.msra.mxu0 0.0
        %3739 = vmatprep.subr.mxu0 0.0
        %3740 = vmatpush1.msra.mxu0 0.0
        %3741 = vmatprep.subr.mxu0 0.0
        %3742 = vmatpush1.msra.mxu0 0.0
        %3743 = vmatprep.subr.mxu0 0.0
        %v3744 = vand.u32 %v171, 4294901760
        %3745 = vmatpush1.msra.mxu0 %v3744
        %3746 = vmatprep.subr.mxu0 0.0
        %3747 = vmatpush2.msra.mxu0 0.0
        %3748 = vmatprep.subr.mxu0 0.0
        %3749 = vmatpush2.msra.mxu0 0.0
        %3750 = vmatprep.subr.mxu0 0.0
        %3751 = vmatpush2.msra.mxu0 0.0
        %3752 = vmatprep.subr.mxu0 0.0
        %3753 = vmatpush2.msra.mxu0 0.0
        %3754 = vmatprep.subr.mxu0 0.0
        %3755 = vmatpush2.msra.mxu0 0.0
        %3756 = vmatprep.subr.mxu0 0.0
        %3757 = vmatpush2.msra.mxu0 0.0
        %3758 = vmatprep.subr.mxu0 0.0
        %3759 = vmatpush2.msra.mxu0 0.0
        %3760 = vmatprep.subr.mxu0 0.0
        %3761 = vmatpush2.msra.mxu0 0.0
        %3762 = vmatprep.subr.mxu0 0.0
        %3763 = vmatpush2.msra.mxu0 0.0
        %3764 = vmatprep.subr.mxu0 0.0
        %3765 = vmatpush2.msra.mxu0 0.0
        %3766 = vmatprep.subr.mxu0 0.0
        %3767 = vmatpush2.msra.mxu0 0.0
        %3768 = vmatprep.subr.mxu0 0.0
        %3769 = vmatpush2.msra.mxu0 0.0
        %3770 = vmatprep.subr.mxu0 0.0
        %3771 = vmatpush2.msra.mxu0 0.0
        %3772 = vmatprep.subr.mxu0 0.0
        %3773 = vmatpush2.msra.mxu0 0.0
        %3774 = vmatprep.subr.mxu0 0.0
        %3775 = vmatpush2.msra.mxu0 0.0
        %3776 = vmatprep.subr.mxu0 0.0
        %3777 = vmatpush2.msra.mxu0 0.0
        %3778 = vmatprep.mubr.f32.mxu0 0.0
        %v3779 = vand.u32 %v3337, 4294901760
        %3780 = vmatmul.mubr.f32.gmra.mxu0 %v3779
        %v3781 = vpop.f32.mrf.mxu0
        %v3782 = vadd.f32 %v3710, %v3781
        %v3783 = vpop.f32.mrf.mxu0
        %3784 = vdwg.mxu0
        %v3785 = vadd.f32 %v3333, %v3782
        %3786 = vst.msk [vmem:[%s151 + $0x8] sm:$0xff] %vm1978, %v3785
        %s3787 = sand.u32 %s68, 1
        %s3788 = scalar_lea.sflag [#allocation4], %s3787
        %s3789 = sand.u32 %s68, 1
        %s3790 = smul.addr %s3789, 16
        %s3791 = scalar_lea.vmem [#allocation5], %s3790
        // Predicated region
        $region29: #{tpu_custom_call.1} parent=23 // pred_check
          %p3792 = pneg %p78
        $region30: #{tpu_custom_call.1} parent=23 // pred_check_branch
          %3794 = sbr.rel (%p3792) target = $region32
        $region31: #{tpu_custom_call.1} parent=23 // pred_region
          %s3796 = ssub.s32 256, 256
          %3797 = vsyncadd %s3788, %s3796
          %s3798 = smul.addr %s23, 2
          %s3799 = smul.addr %s22, 8
          %s3800 = sadd.s32 %s3798, %s3799
          %s3801 = smul.addr %s3800, 128
          %s3802 = scalar_lea.hbm %s1, %s3801
          %s3803 = sshll.u32 %s3791, 4
          %s3804 = int_to_ptr.vmem [resolvable:$true] %s3803
          %3809 = dma.vmem_to_hbm [thread:$0]  %s3804, 256, %s3802, %s3788, 128, 128, 8
        $region32: #{tpu_custom_call.1} parent=23 // pred_fallthru
          _
      $region24: #{tpu_custom_call.1} parent=5 // pred_fallthru
        _
      %p3810 = scmp.le.s32.totalorder 2, %s13
      // Predicated region
      $region33: #{tpu_custom_call.1} parent=5 // pred_check
        %p3811 = pneg %p3810
      $region34: #{tpu_custom_call.1} parent=5 // pred_check_branch
        %3813 = sbr.rel (%p3811) target = $region36
      $region35: #{tpu_custom_call.1} parent=5 // pred_region
        %s3814 = ssub.s32 %s13, 2
        // Predicated region
        $region37: #{tpu_custom_call.1} parent=35 // pred_check
          %p3815 = pneg %p84
        $region38: #{tpu_custom_call.1} parent=35 // pred_check_branch
          %3817 = sbr.rel (%p3815) target = $region40
        $region39: #{tpu_custom_call.1} parent=35 // pred_region
          %s3818 = sand.u32 %s69, 1
          %s3819 = scalar_lea.sflag [#allocation4], %s3818
          %s3820 = sand.u32 %s69, 1
          %s3821 = smul.addr %s3820, 16
          %s3822 = scalar_lea.vmem [#allocation5], %s3821
          %3823 = dma.done %s3819, 256
        $region40: #{tpu_custom_call.1} parent=35 // pred_fallthru
          _
      $region36: #{tpu_custom_call.1} parent=5 // pred_fallthru
        _
    $region6: #{tpu_custom_call.1} parent=1 // loop_footer
      %s17 = sadd.s32 1, %s13
    $region7: #{tpu_custom_call.1} parent=1 // loop_footer_branch
      %12 = sbr.rel target = $region3
    $region8: #{tpu_custom_call.1} parent=1 // loop_exit
      _
    %3824 = vsyncpa [#allocation3], 1
    %s3825 = scalar_lea.sflag [#allocation3], 1
    %3826 = vsyncpa %s3825, 1
    %3827 = vsyncpa [#allocation4], 1
    %s3828 = scalar_lea.sflag [#allocation4], 1
    %3829 = vsyncpa %s3828, 1

</llo_original>
